<compile_context>
chip_gen: v6e
topology: v6e:2x2x1
jax: 0.10.0
libtpu: 0.0.40
codegen_flags: <defaults>
</compile_context>

<pallas_src>
import numpy as np
import jax
import jax.numpy as jnp
from jax.experimental import pallas as pl
from jax.experimental.pallas import tpu as pltpu

EPS = 1e-5  # nn.InstanceNorm2d default eps


# ------------------------------- fused kernel ------------------------------- #

def _make_fused_kernel(H, W, Cin, Cout, batch_norm):
    PW = W + 2                  # padded row width
    S = H * PW                  # stride-1 "slab" width (lanes)
    P = (H + 3) * PW            # padded-flat width: 1 top / 2 bottom pad rows, 1 col each side
    INT = PW + 1                # lane offset of the slab inside a padded buffer
    TAIL = P - INT - S          # trailing padding-frame lanes
    inv_n = 1.0 / float(H * W)

    def kernel(x_ref, w1_ref, b1_ref, wa_ref, ba_ref, wb_ref, bb_ref,
               w1x1_ref, b1x1_ref, w3_ref, b3_ref, alpha_ref,
               mrow_ref, selskip_ref, seldown_ref,
               down_ref, skip_ref,
               out_pad, t1_pad, skip_pad):
        mrow = mrow_ref[...]                       # (1, S): 1 on real cols, 0 on wrap cols

        def conv3x3(src_ref, w_ref, b_ref):
            # 9-tap accumulation over shifted VMEM views; one small MXU matmul per tap.
            acc = jnp.dot(w_ref[0], src_ref[:, pl.ds(0, S)],
                          preferred_element_type=jnp.float32)
            for t in range(1, 9):
                kh, kw = divmod(t, 3)
                acc = acc + jnp.dot(w_ref[t], src_ref[:, pl.ds(kh * PW + kw, S)],
                                    preferred_element_type=jnp.float32)
            return acc + b_ref[...]                # (Cout, S) f32

        def inorm(y):
            # masked two-pass InstanceNorm over the H*W valid columns.
            mean = jnp.sum(y * mrow, axis=1, keepdims=True) * inv_n
            yc = y - mean
            var = jnp.sum(yc * yc * mrow, axis=1, keepdims=True) * inv_n
            return yc * jax.lax.rsqrt(var + EPS)

        def prelu(y, a):
            return jnp.where(y > 0, y, a * y)

        def store_padded(dst_ref, yq):
            # refresh only the zero padding frame, then drop the masked slab at
            # its interior offset (the 2 wrap cols per row land on padding slots).
            dst_ref[:, pl.ds(0, INT)] = jnp.zeros((Cout, INT), dst_ref.dtype)
            dst_ref[:, pl.ds(INT + S, TAIL)] = jnp.zeros((Cout, TAIL), dst_ref.dtype)
            dst_ref[:, pl.ds(INT, S)] = yq

        # ---- conv_1 -> (InstanceNorm) -> PReLU --------------------------------
        y = conv3x3(x_ref, w1_ref, b1_ref)
        if batch_norm:
            y = inorm(y)
        y = prelu(y, alpha_ref[0])
        store_padded(out_pad, (y * mrow).astype(out_pad.dtype))

        # ---- ResidualBlock conv_block: first 3x3 -> IN -> PReLU ---------------
        y = conv3x3(out_pad, wa_ref, ba_ref)
        y = prelu(inorm(y), alpha_ref[1])
        store_padded(t1_pad, (y * mrow).astype(t1_pad.dtype))

        # ---- second 3x3 -> IN -> PReLU, fused with conv_1x1(out) + add --------
        y = conv3x3(t1_pad, wb_ref, bb_ref)
        t2 = prelu(inorm(y), alpha_ref[2])
        out_slab = out_pad[:, pl.ds(INT, S)]                       # quantized `out`
        res = jnp.dot(w1x1_ref[...], out_slab,
                      preferred_element_type=jnp.float32) + b1x1_ref[...]
        skip_q = ((res + t2) * mrow).astype(skip_pad.dtype)
        store_padded(skip_pad, skip_q)
        # lane-dense NCHW skip output: one-hot selection matmul drops the wrap cols.
        skip_ref[...] = jnp.dot(skip_q, selskip_ref[...],
                                preferred_element_type=jnp.float32)

        # ---- conv_3 (stride 2) ------------------------------------------------
        y3 = conv3x3(skip_pad, w3_ref, b3_ref)
        # stride-2 row/col subsampling as a one-hot selection matmul (MXU),
        # emitting only the compact (Cout, Ho*Wo) block.
        down_ref[...] = jnp.dot(y3, seldown_ref[...],
                                preferred_element_type=jnp.float32)

    return kernel


# ---------------------------- layout constants ------------------------------ #

def _layout_constants(H, W):
    PW = W + 2
    S = H * PW
    Ho, Wo = (H - 1) // 2 + 1, (W - 1) // 2 + 1
    valid = (np.arange(S) % PW) < W
    mrow = valid.astype(np.float32).reshape(1, S)
    sel_skip = np.zeros((S, H * W), np.float32)
    sel_down = np.zeros((S, Ho * Wo), np.float32)
    for r in range(H):
        for c in range(W):
            sel_skip[r * PW + c, r * W + c] = 1.0
    for i in range(Ho):
        for j in range(Wo):
            sel_down[(2 * i) * PW + (2 * j), i * Wo + j] = 1.0
    return mrow, sel_skip, sel_down, Ho, Wo


# ------------------------------ forward pass --------------------------------- #

def conv_down_block(x_nchw, params, batch_norm=True, compute_dtype=jnp.bfloat16):
    """Returns (out, skip_out) in NCHW, matching the PyTorch module."""
    B, Cin, H, W = x_nchw.shape
    PW = W + 2
    S = H * PW
    P = (H + 3) * PW

    w1, b1 = params["conv1"]
    wa, ba = params["res_a"]
    wb, bb = params["res_b"]
    w1x1, b1x1 = params["res_1x1"]
    w3, b3 = params["conv3"]
    Cout = w1.shape[0]

    mrow_np, sel_skip_np, sel_down_np, Ho, Wo = _layout_constants(H, W)

    # padded-flat NCHW input: channels on sublanes, padded spatial on lanes.
    xpad = jnp.pad(x_nchw.astype(jnp.float32),
                   ((0, 0), (0, 0), (1, 2), (1, 1))
                   ).reshape(B, Cin, P).astype(compute_dtype)

    def tap_w(w):   # (O, I, 3, 3) -> (9, O, I): tap-major, no lane slicing in-kernel
        return jnp.transpose(w, (2, 3, 0, 1)).reshape(
            9, w.shape[0], w.shape[1]).astype(compute_dtype)

    def col_b(b):
        return b.reshape(-1, 1).astype(jnp.float32)

    alphas = jnp.stack([params["alpha_main"].reshape(()),
                        params["alpha_res1"].reshape(()),
                        params["alpha_res2"].reshape(())]).astype(jnp.float32)

    mrow = jnp.asarray(mrow_np)
    sel_skip = jnp.asarray(sel_skip_np).astype(compute_dtype)  # exact one-hot pick of bf16 skip
    sel_down = jnp.asarray(sel_down_np)                        # f32: picks the f32 conv_3 slab

    kernel = _make_fused_kernel(H, W, Cin, Cout, batch_norm)
    wmap3 = lambda i: (0, 0, 0)
    wmap2 = lambda i: (0, 0)

    down_flat, skip_flat = pl.pallas_call(
        kernel,
        out_shape=(jax.ShapeDtypeStruct((B, Cout, Ho * Wo), jnp.float32),
                   jax.ShapeDtypeStruct((B, Cout, H * W), jnp.float32)),
        grid=(B,),
        in_specs=[
            pl.BlockSpec((None, Cin, P), lambda i: (i, 0, 0)),        # x (padded-flat)
            pl.BlockSpec((9, Cout, Cin), wmap3),                      # conv_1 weights
            pl.BlockSpec((Cout, 1), wmap2),                           # conv_1 bias
            pl.BlockSpec((9, Cout, Cout), wmap3),                     # res conv_a weights
            pl.BlockSpec((Cout, 1), wmap2),
            pl.BlockSpec((9, Cout, Cout), wmap3),                     # res conv_b weights
            pl.BlockSpec((Cout, 1), wmap2),
            pl.BlockSpec((Cout, Cout), wmap2),                        # res 1x1 weights
            pl.BlockSpec((Cout, 1), wmap2),
            pl.BlockSpec((9, Cout, Cout), wmap3),                     # conv_3 weights
            pl.BlockSpec((Cout, 1), wmap2),
            pl.BlockSpec(memory_space=pltpu.MemorySpace.SMEM),        # PReLU alphas (3,)
            pl.BlockSpec((1, S), wmap2),                              # valid-column mask
            pl.BlockSpec((S, H * W), wmap2),                          # skip one-hot selection
            pl.BlockSpec((S, Ho * Wo), wmap2),                        # stride-2 one-hot selection
        ],
        out_specs=(pl.BlockSpec((None, Cout, Ho * Wo), lambda i: (i, 0, 0)),
                   pl.BlockSpec((None, Cout, H * W), lambda i: (i, 0, 0))),
        scratch_shapes=[pltpu.VMEM((Cout, P), compute_dtype),   # out_pad
                        pltpu.VMEM((Cout, P), compute_dtype),   # t1_pad
                        pltpu.VMEM((Cout, P), compute_dtype)],  # skip_pad
        compiler_params=pltpu.CompilerParams(dimension_semantics=("parallel",)),
    )(xpad,
      tap_w(w1), col_b(b1),
      tap_w(wa), col_b(ba),
      tap_w(wb), col_b(bb),
      w1x1.astype(compute_dtype), col_b(b1x1),
      tap_w(w3), col_b(b3),
      alphas, mrow, sel_skip, sel_down)

    down = down_flat.reshape(B, Cout, Ho, Wo)
    skip = skip_flat.reshape(B, Cout, H, W)
    return down, skip


# ------------------------------ parameters ----------------------------------- #

def init_params(key, in_chans, out_chans):
    """Deterministic init matching the PyTorch module's parameter shapes."""
    def conv_init(k, cin, cout, ks):
        bound = 1.0 / np.sqrt(cin * ks * ks)
        kw_, kb_ = jax.random.split(k)
        w = jax.random.uniform(kw_, (cout, cin, ks, ks), jnp.float32, -bound, bound)
        b = jax.random.uniform(kb_, (cout,), jnp.float32, -bound, bound)
        return w, b

    keys = jax.random.split(key, 5)
    p = {}
    p["conv1"] = conv_init(keys[0], in_chans, out_chans, 3)
    p["res_a"] = conv_init(keys[1], out_chans, out_chans, 3)
    p["res_b"] = conv_init(keys[2], out_chans, out_chans, 3)
    w1, b1 = conv_init(keys[3], out_chans, out_chans, 1)
    p["res_1x1"] = (w1.reshape(out_chans, out_chans), b1)
    p["conv3"] = conv_init(keys[4], out_chans, out_chans, 3)
    # nn.PReLU() default: single shared weight, init 0.25
    p["alpha_main"] = jnp.full((1, 1), 0.25, jnp.float32)
    p["alpha_res1"] = jnp.full((1, 1), 0.25, jnp.float32)
    p["alpha_res2"] = jnp.full((1, 1), 0.25, jnp.float32)
    return p


# --------------------------- pure-JAX reference ------------------------------ #

def ref_forward(x_nchw, params, batch_norm=True, compute_dtype=jnp.float32):
    """Reference mirroring the kernel numerics (compute_dtype operands, f32 accum)."""
    cd = compute_dtype
    f32 = jnp.float32

    def conv(x, w, b, stride):
        y = jax.lax.conv_general_dilated(
            x.astype(cd), w.astype(cd), (stride, stride), ((1, 1), (1, 1)),
            dimension_numbers=("NCHW", "OIHW", "NCHW"),
            preferred_element_type=f32)
        return y + b.reshape(1, -1, 1, 1)

    def inorm(x):
        mean = x.mean(axis=(2, 3), keepdims=True)
        var = ((x - mean) ** 2).mean(axis=(2, 3), keepdims=True)
        return (x - mean) * jax.lax.rsqrt(var + EPS)

    def prelu(x, a):
        return jnp.where(x > 0, x, a * x)

    def q(x):  # model inter-layer activations being stored in compute_dtype
        return x.astype(cd).astype(f32)

    x = x_nchw.astype(f32)
    y = conv(x, *params["conv1"], 1)
    out = q(prelu(inorm(y) if batch_norm else y, params["alpha_main"][0, 0]))
    t = q(prelu(inorm(conv(out, *params["res_a"], 1)), params["alpha_res1"][0, 0]))
    t2 = prelu(inorm(conv(t, *params["res_b"], 1)), params["alpha_res2"][0, 0])
    w1, b1 = params["res_1x1"]
    res = jnp.einsum("oc,bchw->bohw", w1.astype(cd), out.astype(cd),
                     preferred_element_type=f32) + b1.reshape(1, -1, 1, 1)
    skip = q(res + t2)
    down = conv(skip, *params["conv3"], 2)
    return down, skip


# ---------------------------------- main ------------------------------------ #

if __name__ == "__main__":
    key = jax.random.PRNGKey(0)
    kx, kp = jax.random.split(key)
    B, Cin, Cout, H, W = 2, 4, 8, 16, 16

    x = jax.random.normal(kx, (B, Cin, H, W), jnp.float32)
    params = init_params(kp, Cin, Cout)

    fwd = jax.jit(lambda xx, pp: conv_down_block(xx, pp, batch_norm=True,
                                                 compute_dtype=jnp.bfloat16))
    down, skip = fwd(x, params)
    down = jax.block_until_ready(down)
    skip = jax.block_until_ready(skip)

    assert down.shape == (B, Cout, H // 2, W // 2), down.shape
    assert skip.shape == (B, Cout, H, W), skip.shape

    # Compare against a reference with matching bf16-operand / f32-accumulate numerics.
    ref_down, ref_skip = ref_forward(x, params, batch_norm=True,
                                     compute_dtype=jnp.bfloat16)
    np.testing.assert_allclose(np.asarray(down), np.asarray(ref_down),
                               rtol=1e-2, atol=1e-2)
    np.testing.assert_allclose(np.asarray(skip), np.asarray(ref_skip),
                               rtol=1e-2, atol=1e-2)

    print("KERNEL_OK")
</pallas_src>

<mosaic_0001>
module attributes {stable_mosaic.version = 11 : i64} {
  func.func @kernel(%arg0: i32, %arg1: memref<1x4x342xbf16, #tpu.memory_space<vmem>>, %arg2: memref<9x8x4xbf16, #tpu.memory_space<vmem>>, %arg3: memref<8x1xf32, #tpu.memory_space<vmem>>, %arg4: memref<9x8x8xbf16, #tpu.memory_space<vmem>>, %arg5: memref<8x1xf32, #tpu.memory_space<vmem>>, %arg6: memref<9x8x8xbf16, #tpu.memory_space<vmem>>, %arg7: memref<8x1xf32, #tpu.memory_space<vmem>>, %arg8: memref<8x8xbf16, #tpu.memory_space<vmem>>, %arg9: memref<8x1xf32, #tpu.memory_space<vmem>>, %arg10: memref<9x8x8xbf16, #tpu.memory_space<vmem>>, %arg11: memref<8x1xf32, #tpu.memory_space<vmem>>, %arg12: memref<3xf32, #tpu.memory_space<smem>>, %arg13: memref<1x288xf32, #tpu.memory_space<vmem>>, %arg14: memref<288x256xbf16, #tpu.memory_space<vmem>>, %arg15: memref<288x64xf32, #tpu.memory_space<vmem>>, %arg16: memref<1x8x64xf32, #tpu.memory_space<vmem>>, %arg17: memref<1x8x256xf32, #tpu.memory_space<vmem>>, %arg18: memref<8x342xbf16, #tpu.memory_space<vmem>>, %arg19: memref<8x342xbf16, #tpu.memory_space<vmem>>, %arg20: memref<8x342xbf16, #tpu.memory_space<vmem>>) attributes {dimension_semantics = [#tpu.dimension_semantics<parallel>], iteration_bounds = array<i64: 2>, scalar_prefetch = 0 : i64, scratch_operands = 3 : i64, tpu.core_type = #tpu.core_type<tc>, window_params = [{transform_indices = @transform_0, window_bounds = array<i64: 1, 4, 342>}, {pipeline_mode = #tpu.pipeline_mode<synchronous>, transform_indices = @transform_1, window_bounds = array<i64: 9, 8, 4>}, {pipeline_mode = #tpu.pipeline_mode<synchronous>, transform_indices = @transform_2, window_bounds = array<i64: 8, 1>}, {pipeline_mode = #tpu.pipeline_mode<synchronous>, transform_indices = @transform_3, window_bounds = array<i64: 9, 8, 8>}, {pipeline_mode = #tpu.pipeline_mode<synchronous>, transform_indices = @transform_4, window_bounds = array<i64: 8, 1>}, {pipeline_mode = #tpu.pipeline_mode<synchronous>, transform_indices = @transform_5, window_bounds = array<i64: 9, 8, 8>}, {pipeline_mode = #tpu.pipeline_mode<synchronous>, transform_indices = @transform_6, window_bounds = array<i64: 8, 1>}, {pipeline_mode = #tpu.pipeline_mode<synchronous>, transform_indices = @transform_7, window_bounds = array<i64: 8, 8>}, {pipeline_mode = #tpu.pipeline_mode<synchronous>, transform_indices = @transform_8, window_bounds = array<i64: 8, 1>}, {pipeline_mode = #tpu.pipeline_mode<synchronous>, transform_indices = @transform_9, window_bounds = array<i64: 9, 8, 8>}, {pipeline_mode = #tpu.pipeline_mode<synchronous>, transform_indices = @transform_10, window_bounds = array<i64: 8, 1>}, {transform_indices = @transform_11, window_bounds = array<i64: 3>}, {pipeline_mode = #tpu.pipeline_mode<synchronous>, transform_indices = @transform_12, window_bounds = array<i64: 1, 288>}, {pipeline_mode = #tpu.pipeline_mode<synchronous>, transform_indices = @transform_13, window_bounds = array<i64: 288, 256>}, {pipeline_mode = #tpu.pipeline_mode<synchronous>, transform_indices = @transform_14, window_bounds = array<i64: 288, 64>}, {transform_indices = @transform_15, window_bounds = array<i64: 1, 8, 64>}, {transform_indices = @transform_16, window_bounds = array<i64: 1, 8, 256>}]} {
    %c0 = arith.constant 0 : index
    %c0_0 = arith.constant 0 : index
    %0 = vector.load %arg13[%c0, %c0_0] : memref<1x288xf32, #tpu.memory_space<vmem>>, vector<1x288xf32>
    %c0_1 = arith.constant 0 : index
    %c0_2 = arith.constant 0 : index
    %c0_3 = arith.constant 0 : index
    %1 = vector.load %arg2[%c0_1, %c0_2, %c0_3] : memref<9x8x4xbf16, #tpu.memory_space<vmem>>, vector<1x8x4xbf16>
    %2 = vector.shape_cast %1 : vector<1x8x4xbf16> to vector<8x4xbf16>
    %c0_4 = arith.constant 0 : index
    %c0_5 = arith.constant 0 : index
    %c0_6 = arith.constant 0 : index
    %3 = vector.load %arg1[%c0_4, %c0_5, %c0_6] : memref<1x4x342xbf16, #tpu.memory_space<vmem>>, vector<1x4x288xbf16>
    %4 = vector.shape_cast %3 : vector<1x4x288xbf16> to vector<4x288xbf16>
    %cst = arith.constant dense<0.000000e+00> : vector<8x288xf32>
    %5 = tpu.matmul %2, %4, %cst {dimension_numbers = #tpu.dot_dimension_numbers<[1], [0], [0], [1], [0, 0, 1, 1], [], []>} : vector<8x4xbf16>, vector<4x288xbf16>, vector<8x288xf32> -> vector<8x288xf32>
    %c1 = arith.constant 1 : index
    %c0_7 = arith.constant 0 : index
    %c0_8 = arith.constant 0 : index
    %6 = vector.load %arg2[%c1, %c0_7, %c0_8] : memref<9x8x4xbf16, #tpu.memory_space<vmem>>, vector<1x8x4xbf16>
    %7 = vector.shape_cast %6 : vector<1x8x4xbf16> to vector<8x4xbf16>
    %c0_9 = arith.constant 0 : index
    %c0_10 = arith.constant 0 : index
    %c1_11 = arith.constant 1 : index
    %8 = vector.load %arg1[%c0_9, %c0_10, %c1_11] : memref<1x4x342xbf16, #tpu.memory_space<vmem>>, vector<1x4x288xbf16>
    %9 = vector.shape_cast %8 : vector<1x4x288xbf16> to vector<4x288xbf16>
    %cst_12 = arith.constant dense<0.000000e+00> : vector<8x288xf32>
    %10 = tpu.matmul %7, %9, %cst_12 {dimension_numbers = #tpu.dot_dimension_numbers<[1], [0], [0], [1], [0, 0, 1, 1], [], []>} : vector<8x4xbf16>, vector<4x288xbf16>, vector<8x288xf32> -> vector<8x288xf32>
    %11 = arith.addf %5, %10 : vector<8x288xf32>
    %c2 = arith.constant 2 : index
    %c0_13 = arith.constant 0 : index
    %c0_14 = arith.constant 0 : index
    %12 = vector.load %arg2[%c2, %c0_13, %c0_14] : memref<9x8x4xbf16, #tpu.memory_space<vmem>>, vector<1x8x4xbf16>
    %13 = vector.shape_cast %12 : vector<1x8x4xbf16> to vector<8x4xbf16>
    %c0_15 = arith.constant 0 : index
    %c0_16 = arith.constant 0 : index
    %c2_17 = arith.constant 2 : index
    %14 = vector.load %arg1[%c0_15, %c0_16, %c2_17] : memref<1x4x342xbf16, #tpu.memory_space<vmem>>, vector<1x4x288xbf16>
    %15 = vector.shape_cast %14 : vector<1x4x288xbf16> to vector<4x288xbf16>
    %cst_18 = arith.constant dense<0.000000e+00> : vector<8x288xf32>
    %16 = tpu.matmul %13, %15, %cst_18 {dimension_numbers = #tpu.dot_dimension_numbers<[1], [0], [0], [1], [0, 0, 1, 1], [], []>} : vector<8x4xbf16>, vector<4x288xbf16>, vector<8x288xf32> -> vector<8x288xf32>
    %17 = arith.addf %11, %16 : vector<8x288xf32>
    %c3 = arith.constant 3 : index
    %c0_19 = arith.constant 0 : index
    %c0_20 = arith.constant 0 : index
    %18 = vector.load %arg2[%c3, %c0_19, %c0_20] : memref<9x8x4xbf16, #tpu.memory_space<vmem>>, vector<1x8x4xbf16>
    %19 = vector.shape_cast %18 : vector<1x8x4xbf16> to vector<8x4xbf16>
    %c0_21 = arith.constant 0 : index
    %c0_22 = arith.constant 0 : index
    %c18 = arith.constant 18 : index
    %20 = vector.load %arg1[%c0_21, %c0_22, %c18] : memref<1x4x342xbf16, #tpu.memory_space<vmem>>, vector<1x4x288xbf16>
    %21 = vector.shape_cast %20 : vector<1x4x288xbf16> to vector<4x288xbf16>
    %cst_23 = arith.constant dense<0.000000e+00> : vector<8x288xf32>
    %22 = tpu.matmul %19, %21, %cst_23 {dimension_numbers = #tpu.dot_dimension_numbers<[1], [0], [0], [1], [0, 0, 1, 1], [], []>} : vector<8x4xbf16>, vector<4x288xbf16>, vector<8x288xf32> -> vector<8x288xf32>
    %23 = arith.addf %17, %22 : vector<8x288xf32>
    %c4 = arith.constant 4 : index
    %c0_24 = arith.constant 0 : index
    %c0_25 = arith.constant 0 : index
    %24 = vector.load %arg2[%c4, %c0_24, %c0_25] : memref<9x8x4xbf16, #tpu.memory_space<vmem>>, vector<1x8x4xbf16>
    %25 = vector.shape_cast %24 : vector<1x8x4xbf16> to vector<8x4xbf16>
    %c0_26 = arith.constant 0 : index
    %c0_27 = arith.constant 0 : index
    %c19 = arith.constant 19 : index
    %26 = vector.load %arg1[%c0_26, %c0_27, %c19] : memref<1x4x342xbf16, #tpu.memory_space<vmem>>, vector<1x4x288xbf16>
    %27 = vector.shape_cast %26 : vector<1x4x288xbf16> to vector<4x288xbf16>
    %cst_28 = arith.constant dense<0.000000e+00> : vector<8x288xf32>
    %28 = tpu.matmul %25, %27, %cst_28 {dimension_numbers = #tpu.dot_dimension_numbers<[1], [0], [0], [1], [0, 0, 1, 1], [], []>} : vector<8x4xbf16>, vector<4x288xbf16>, vector<8x288xf32> -> vector<8x288xf32>
    %29 = arith.addf %23, %28 : vector<8x288xf32>
    %c5 = arith.constant 5 : index
    %c0_29 = arith.constant 0 : index
    %c0_30 = arith.constant 0 : index
    %30 = vector.load %arg2[%c5, %c0_29, %c0_30] : memref<9x8x4xbf16, #tpu.memory_space<vmem>>, vector<1x8x4xbf16>
    %31 = vector.shape_cast %30 : vector<1x8x4xbf16> to vector<8x4xbf16>
    %c0_31 = arith.constant 0 : index
    %c0_32 = arith.constant 0 : index
    %c20 = arith.constant 20 : index
    %32 = vector.load %arg1[%c0_31, %c0_32, %c20] : memref<1x4x342xbf16, #tpu.memory_space<vmem>>, vector<1x4x288xbf16>
    %33 = vector.shape_cast %32 : vector<1x4x288xbf16> to vector<4x288xbf16>
    %cst_33 = arith.constant dense<0.000000e+00> : vector<8x288xf32>
    %34 = tpu.matmul %31, %33, %cst_33 {dimension_numbers = #tpu.dot_dimension_numbers<[1], [0], [0], [1], [0, 0, 1, 1], [], []>} : vector<8x4xbf16>, vector<4x288xbf16>, vector<8x288xf32> -> vector<8x288xf32>
    %35 = arith.addf %29, %34 : vector<8x288xf32>
    %c6 = arith.constant 6 : index
    %c0_34 = arith.constant 0 : index
    %c0_35 = arith.constant 0 : index
    %36 = vector.load %arg2[%c6, %c0_34, %c0_35] : memref<9x8x4xbf16, #tpu.memory_space<vmem>>, vector<1x8x4xbf16>
    %37 = vector.shape_cast %36 : vector<1x8x4xbf16> to vector<8x4xbf16>
    %c0_36 = arith.constant 0 : index
    %c0_37 = arith.constant 0 : index
    %c36 = arith.constant 36 : index
    %38 = vector.load %arg1[%c0_36, %c0_37, %c36] : memref<1x4x342xbf16, #tpu.memory_space<vmem>>, vector<1x4x288xbf16>
    %39 = vector.shape_cast %38 : vector<1x4x288xbf16> to vector<4x288xbf16>
    %cst_38 = arith.constant dense<0.000000e+00> : vector<8x288xf32>
    %40 = tpu.matmul %37, %39, %cst_38 {dimension_numbers = #tpu.dot_dimension_numbers<[1], [0], [0], [1], [0, 0, 1, 1], [], []>} : vector<8x4xbf16>, vector<4x288xbf16>, vector<8x288xf32> -> vector<8x288xf32>
    %41 = arith.addf %35, %40 : vector<8x288xf32>
    %c7 = arith.constant 7 : index
    %c0_39 = arith.constant 0 : index
    %c0_40 = arith.constant 0 : index
    %42 = vector.load %arg2[%c7, %c0_39, %c0_40] : memref<9x8x4xbf16, #tpu.memory_space<vmem>>, vector<1x8x4xbf16>
    %43 = vector.shape_cast %42 : vector<1x8x4xbf16> to vector<8x4xbf16>
    %c0_41 = arith.constant 0 : index
    %c0_42 = arith.constant 0 : index
    %c37 = arith.constant 37 : index
    %44 = vector.load %arg1[%c0_41, %c0_42, %c37] : memref<1x4x342xbf16, #tpu.memory_space<vmem>>, vector<1x4x288xbf16>
    %45 = vector.shape_cast %44 : vector<1x4x288xbf16> to vector<4x288xbf16>
    %cst_43 = arith.constant dense<0.000000e+00> : vector<8x288xf32>
    %46 = tpu.matmul %43, %45, %cst_43 {dimension_numbers = #tpu.dot_dimension_numbers<[1], [0], [0], [1], [0, 0, 1, 1], [], []>} : vector<8x4xbf16>, vector<4x288xbf16>, vector<8x288xf32> -> vector<8x288xf32>
    %47 = arith.addf %41, %46 : vector<8x288xf32>
    %c8 = arith.constant 8 : index
    %c0_44 = arith.constant 0 : index
    %c0_45 = arith.constant 0 : index
    %48 = vector.load %arg2[%c8, %c0_44, %c0_45] : memref<9x8x4xbf16, #tpu.memory_space<vmem>>, vector<1x8x4xbf16>
    %49 = vector.shape_cast %48 : vector<1x8x4xbf16> to vector<8x4xbf16>
    %c0_46 = arith.constant 0 : index
    %c0_47 = arith.constant 0 : index
    %c38 = arith.constant 38 : index
    %50 = vector.load %arg1[%c0_46, %c0_47, %c38] : memref<1x4x342xbf16, #tpu.memory_space<vmem>>, vector<1x4x288xbf16>
    %51 = vector.shape_cast %50 : vector<1x4x288xbf16> to vector<4x288xbf16>
    %cst_48 = arith.constant dense<0.000000e+00> : vector<8x288xf32>
    %52 = tpu.matmul %49, %51, %cst_48 {dimension_numbers = #tpu.dot_dimension_numbers<[1], [0], [0], [1], [0, 0, 1, 1], [], []>} : vector<8x4xbf16>, vector<4x288xbf16>, vector<8x288xf32> -> vector<8x288xf32>
    %53 = arith.addf %47, %52 : vector<8x288xf32>
    %c0_49 = arith.constant 0 : index
    %c0_50 = arith.constant 0 : index
    %54 = vector.load %arg3[%c0_49, %c0_50] : memref<8x1xf32, #tpu.memory_space<vmem>>, vector<8x1xf32>
    %55 = vector.broadcast %54 : vector<8x1xf32> to vector<8x288xf32>
    %56 = arith.addf %53, %55 : vector<8x288xf32>
    %57 = vector.broadcast %0 : vector<1x288xf32> to vector<8x288xf32>
    %58 = arith.mulf %56, %57 : vector<8x288xf32>
    %cst_51 = arith.constant dense<0.000000e+00> : vector<8xf32>
    %59 = vector.multi_reduction <add>, %58, %cst_51 [1] : vector<8x288xf32> to vector<8xf32>
    %60 = vector.shape_cast %59 : vector<8xf32> to vector<8x1xf32>
    %cst_52 = arith.constant 3.906250e-03 : f32
    %61 = vector.broadcast %cst_52 : f32 to vector<8x1xf32>
    %62 = arith.mulf %60, %61 : vector<8x1xf32>
    %63 = vector.broadcast %62 : vector<8x1xf32> to vector<8x288xf32>
    %64 = arith.subf %56, %63 : vector<8x288xf32>
    %65 = arith.mulf %64, %64 : vector<8x288xf32>
    %66 = vector.broadcast %0 : vector<1x288xf32> to vector<8x288xf32>
    %67 = arith.mulf %65, %66 : vector<8x288xf32>
    %cst_53 = arith.constant dense<0.000000e+00> : vector<8xf32>
    %68 = vector.multi_reduction <add>, %67, %cst_53 [1] : vector<8x288xf32> to vector<8xf32>
    %69 = vector.shape_cast %68 : vector<8xf32> to vector<8x1xf32>
    %cst_54 = arith.constant 3.906250e-03 : f32
    %70 = vector.broadcast %cst_54 : f32 to vector<8x1xf32>
    %71 = arith.mulf %69, %70 : vector<8x1xf32>
    %cst_55 = arith.constant 9.99999974E-6 : f32
    %72 = vector.broadcast %cst_55 : f32 to vector<8x1xf32>
    %73 = arith.addf %71, %72 : vector<8x1xf32>
    %74 = math.rsqrt %73 : vector<8x1xf32>
    %75 = vector.broadcast %74 : vector<8x1xf32> to vector<8x288xf32>
    %76 = arith.mulf %64, %75 : vector<8x288xf32>
    %c0_56 = arith.constant 0 : index
    %77 = memref.load %arg12[%c0_56] : memref<3xf32, #tpu.memory_space<smem>>
    %cst_57 = arith.constant 0.000000e+00 : f32
    %78 = vector.broadcast %cst_57 : f32 to vector<8x288xf32>
    %79 = arith.cmpf ogt, %76, %78 : vector<8x288xf32>
    %80 = vector.broadcast %77 : f32 to vector<8x288xf32>
    %81 = arith.mulf %80, %76 : vector<8x288xf32>
    %82 = arith.select %79, %76, %81 : vector<8x288xi1>, vector<8x288xf32>
    %83 = vector.broadcast %0 : vector<1x288xf32> to vector<8x288xf32>
    %84 = arith.mulf %82, %83 : vector<8x288xf32>
    %85 = arith.truncf %84 : vector<8x288xf32> to vector<8x288xbf16>
    %cst_58 = arith.constant 0.000000e+00 : bf16
    %86 = vector.broadcast %cst_58 : bf16 to vector<8x19xbf16>
    %c0_59 = arith.constant 0 : index
    %c0_60 = arith.constant 0 : index
    %87 = vector.load %arg18[%c0_59, %c0_60] : memref<8x342xbf16, #tpu.memory_space<vmem>>, vector<8x19xbf16>
    tpu.vector_store %arg18[%c0_59, %c0_60], %86 {strides = array<i32>} : memref<8x342xbf16, #tpu.memory_space<vmem>>, vector<8x19xbf16>,
    %cst_61 = arith.constant 0.000000e+00 : bf16
    %88 = vector.broadcast %cst_61 : bf16 to vector<8x35xbf16>
    %c0_62 = arith.constant 0 : index
    %c307 = arith.constant 307 : index
    %89 = vector.load %arg18[%c0_62, %c307] : memref<8x342xbf16, #tpu.memory_space<vmem>>, vector<8x35xbf16>
    tpu.vector_store %arg18[%c0_62, %c307], %88 {strides = array<i32>} : memref<8x342xbf16, #tpu.memory_space<vmem>>, vector<8x35xbf16>,
    %c0_63 = arith.constant 0 : index
    %c19_64 = arith.constant 19 : index
    %90 = vector.load %arg18[%c0_63, %c19_64] : memref<8x342xbf16, #tpu.memory_space<vmem>>, vector<8x288xbf16>
    tpu.vector_store %arg18[%c0_63, %c19_64], %85 {strides = array<i32>} : memref<8x342xbf16, #tpu.memory_space<vmem>>, vector<8x288xbf16>,
    %c0_65 = arith.constant 0 : index
    %c0_66 = arith.constant 0 : index
    %c0_67 = arith.constant 0 : index
    %91 = vector.load %arg4[%c0_65, %c0_66, %c0_67] : memref<9x8x8xbf16, #tpu.memory_space<vmem>>, vector<1x8x8xbf16>
    %92 = vector.shape_cast %91 : vector<1x8x8xbf16> to vector<8x8xbf16>
    %c0_68 = arith.constant 0 : index
    %c0_69 = arith.constant 0 : index
    %93 = vector.load %arg18[%c0_68, %c0_69] : memref<8x342xbf16, #tpu.memory_space<vmem>>, vector<8x288xbf16>
    %cst_70 = arith.constant dense<0.000000e+00> : vector<8x288xf32>
    %94 = tpu.matmul %92, %93, %cst_70 {dimension_numbers = #tpu.dot_dimension_numbers<[1], [0], [0], [1], [0, 0, 1, 1], [], []>} : vector<8x8xbf16>, vector<8x288xbf16>, vector<8x288xf32> -> vector<8x288xf32>
    %c1_71 = arith.constant 1 : index
    %c0_72 = arith.constant 0 : index
    %c0_73 = arith.constant 0 : index
    %95 = vector.load %arg4[%c1_71, %c0_72, %c0_73] : memref<9x8x8xbf16, #tpu.memory_space<vmem>>, vector<1x8x8xbf16>
    %96 = vector.shape_cast %95 : vector<1x8x8xbf16> to vector<8x8xbf16>
    %c0_74 = arith.constant 0 : index
    %c1_75 = arith.constant 1 : index
    %97 = vector.load %arg18[%c0_74, %c1_75] : memref<8x342xbf16, #tpu.memory_space<vmem>>, vector<8x288xbf16>
    %cst_76 = arith.constant dense<0.000000e+00> : vector<8x288xf32>
    %98 = tpu.matmul %96, %97, %cst_76 {dimension_numbers = #tpu.dot_dimension_numbers<[1], [0], [0], [1], [0, 0, 1, 1], [], []>} : vector<8x8xbf16>, vector<8x288xbf16>, vector<8x288xf32> -> vector<8x288xf32>
    %99 = arith.addf %94, %98 : vector<8x288xf32>
    %c2_77 = arith.constant 2 : index
    %c0_78 = arith.constant 0 : index
    %c0_79 = arith.constant 0 : index
    %100 = vector.load %arg4[%c2_77, %c0_78, %c0_79] : memref<9x8x8xbf16, #tpu.memory_space<vmem>>, vector<1x8x8xbf16>
    %101 = vector.shape_cast %100 : vector<1x8x8xbf16> to vector<8x8xbf16>
    %c0_80 = arith.constant 0 : index
    %c2_81 = arith.constant 2 : index
    %102 = vector.load %arg18[%c0_80, %c2_81] : memref<8x342xbf16, #tpu.memory_space<vmem>>, vector<8x288xbf16>
    %cst_82 = arith.constant dense<0.000000e+00> : vector<8x288xf32>
    %103 = tpu.matmul %101, %102, %cst_82 {dimension_numbers = #tpu.dot_dimension_numbers<[1], [0], [0], [1], [0, 0, 1, 1], [], []>} : vector<8x8xbf16>, vector<8x288xbf16>, vector<8x288xf32> -> vector<8x288xf32>
    %104 = arith.addf %99, %103 : vector<8x288xf32>
    %c3_83 = arith.constant 3 : index
    %c0_84 = arith.constant 0 : index
    %c0_85 = arith.constant 0 : index
    %105 = vector.load %arg4[%c3_83, %c0_84, %c0_85] : memref<9x8x8xbf16, #tpu.memory_space<vmem>>, vector<1x8x8xbf16>
    %106 = vector.shape_cast %105 : vector<1x8x8xbf16> to vector<8x8xbf16>
    %c0_86 = arith.constant 0 : index
    %c18_87 = arith.constant 18 : index
    %107 = vector.load %arg18[%c0_86, %c18_87] : memref<8x342xbf16, #tpu.memory_space<vmem>>, vector<8x288xbf16>
    %cst_88 = arith.constant dense<0.000000e+00> : vector<8x288xf32>
    %108 = tpu.matmul %106, %107, %cst_88 {dimension_numbers = #tpu.dot_dimension_numbers<[1], [0], [0], [1], [0, 0, 1, 1], [], []>} : vector<8x8xbf16>, vector<8x288xbf16>, vector<8x288xf32> -> vector<8x288xf32>
    %109 = arith.addf %104, %108 : vector<8x288xf32>
    %c4_89 = arith.constant 4 : index
    %c0_90 = arith.constant 0 : index
    %c0_91 = arith.constant 0 : index
    %110 = vector.load %arg4[%c4_89, %c0_90, %c0_91] : memref<9x8x8xbf16, #tpu.memory_space<vmem>>, vector<1x8x8xbf16>
    %111 = vector.shape_cast %110 : vector<1x8x8xbf16> to vector<8x8xbf16>
    %c0_92 = arith.constant 0 : index
    %c19_93 = arith.constant 19 : index
    %112 = vector.load %arg18[%c0_92, %c19_93] : memref<8x342xbf16, #tpu.memory_space<vmem>>, vector<8x288xbf16>
    %cst_94 = arith.constant dense<0.000000e+00> : vector<8x288xf32>
    %113 = tpu.matmul %111, %112, %cst_94 {dimension_numbers = #tpu.dot_dimension_numbers<[1], [0], [0], [1], [0, 0, 1, 1], [], []>} : vector<8x8xbf16>, vector<8x288xbf16>, vector<8x288xf32> -> vector<8x288xf32>
    %114 = arith.addf %109, %113 : vector<8x288xf32>
    %c5_95 = arith.constant 5 : index
    %c0_96 = arith.constant 0 : index
    %c0_97 = arith.constant 0 : index
    %115 = vector.load %arg4[%c5_95, %c0_96, %c0_97] : memref<9x8x8xbf16, #tpu.memory_space<vmem>>, vector<1x8x8xbf16>
    %116 = vector.shape_cast %115 : vector<1x8x8xbf16> to vector<8x8xbf16>
    %c0_98 = arith.constant 0 : index
    %c20_99 = arith.constant 20 : index
    %117 = vector.load %arg18[%c0_98, %c20_99] : memref<8x342xbf16, #tpu.memory_space<vmem>>, vector<8x288xbf16>
    %cst_100 = arith.constant dense<0.000000e+00> : vector<8x288xf32>
    %118 = tpu.matmul %116, %117, %cst_100 {dimension_numbers = #tpu.dot_dimension_numbers<[1], [0], [0], [1], [0, 0, 1, 1], [], []>} : vector<8x8xbf16>, vector<8x288xbf16>, vector<8x288xf32> -> vector<8x288xf32>
    %119 = arith.addf %114, %118 : vector<8x288xf32>
    %c6_101 = arith.constant 6 : index
    %c0_102 = arith.constant 0 : index
    %c0_103 = arith.constant 0 : index
    %120 = vector.load %arg4[%c6_101, %c0_102, %c0_103] : memref<9x8x8xbf16, #tpu.memory_space<vmem>>, vector<1x8x8xbf16>
    %121 = vector.shape_cast %120 : vector<1x8x8xbf16> to vector<8x8xbf16>
    %c0_104 = arith.constant 0 : index
    %c36_105 = arith.constant 36 : index
    %122 = vector.load %arg18[%c0_104, %c36_105] : memref<8x342xbf16, #tpu.memory_space<vmem>>, vector<8x288xbf16>
    %cst_106 = arith.constant dense<0.000000e+00> : vector<8x288xf32>
    %123 = tpu.matmul %121, %122, %cst_106 {dimension_numbers = #tpu.dot_dimension_numbers<[1], [0], [0], [1], [0, 0, 1, 1], [], []>} : vector<8x8xbf16>, vector<8x288xbf16>, vector<8x288xf32> -> vector<8x288xf32>
    %124 = arith.addf %119, %123 : vector<8x288xf32>
    %c7_107 = arith.constant 7 : index
    %c0_108 = arith.constant 0 : index
    %c0_109 = arith.constant 0 : index
    %125 = vector.load %arg4[%c7_107, %c0_108, %c0_109] : memref<9x8x8xbf16, #tpu.memory_space<vmem>>, vector<1x8x8xbf16>
    %126 = vector.shape_cast %125 : vector<1x8x8xbf16> to vector<8x8xbf16>
    %c0_110 = arith.constant 0 : index
    %c37_111 = arith.constant 37 : index
    %127 = vector.load %arg18[%c0_110, %c37_111] : memref<8x342xbf16, #tpu.memory_space<vmem>>, vector<8x288xbf16>
    %cst_112 = arith.constant dense<0.000000e+00> : vector<8x288xf32>
    %128 = tpu.matmul %126, %127, %cst_112 {dimension_numbers = #tpu.dot_dimension_numbers<[1], [0], [0], [1], [0, 0, 1, 1], [], []>} : vector<8x8xbf16>, vector<8x288xbf16>, vector<8x288xf32> -> vector<8x288xf32>
    %129 = arith.addf %124, %128 : vector<8x288xf32>
    %c8_113 = arith.constant 8 : index
    %c0_114 = arith.constant 0 : index
    %c0_115 = arith.constant 0 : index
    %130 = vector.load %arg4[%c8_113, %c0_114, %c0_115] : memref<9x8x8xbf16, #tpu.memory_space<vmem>>, vector<1x8x8xbf16>
    %131 = vector.shape_cast %130 : vector<1x8x8xbf16> to vector<8x8xbf16>
    %c0_116 = arith.constant 0 : index
    %c38_117 = arith.constant 38 : index
    %132 = vector.load %arg18[%c0_116, %c38_117] : memref<8x342xbf16, #tpu.memory_space<vmem>>, vector<8x288xbf16>
    %cst_118 = arith.constant dense<0.000000e+00> : vector<8x288xf32>
    %133 = tpu.matmul %131, %132, %cst_118 {dimension_numbers = #tpu.dot_dimension_numbers<[1], [0], [0], [1], [0, 0, 1, 1], [], []>} : vector<8x8xbf16>, vector<8x288xbf16>, vector<8x288xf32> -> vector<8x288xf32>
    %134 = arith.addf %129, %133 : vector<8x288xf32>
    %c0_119 = arith.constant 0 : index
    %c0_120 = arith.constant 0 : index
    %135 = vector.load %arg5[%c0_119, %c0_120] : memref<8x1xf32, #tpu.memory_space<vmem>>, vector<8x1xf32>
    %136 = vector.broadcast %135 : vector<8x1xf32> to vector<8x288xf32>
    %137 = arith.addf %134, %136 : vector<8x288xf32>
    %138 = vector.broadcast %0 : vector<1x288xf32> to vector<8x288xf32>
    %139 = arith.mulf %137, %138 : vector<8x288xf32>
    %cst_121 = arith.constant dense<0.000000e+00> : vector<8xf32>
    %140 = vector.multi_reduction <add>, %139, %cst_121 [1] : vector<8x288xf32> to vector<8xf32>
    %141 = vector.shape_cast %140 : vector<8xf32> to vector<8x1xf32>
    %cst_122 = arith.constant 3.906250e-03 : f32
    %142 = vector.broadcast %cst_122 : f32 to vector<8x1xf32>
    %143 = arith.mulf %141, %142 : vector<8x1xf32>
    %144 = vector.broadcast %143 : vector<8x1xf32> to vector<8x288xf32>
    %145 = arith.subf %137, %144 : vector<8x288xf32>
    %146 = arith.mulf %145, %145 : vector<8x288xf32>
    %147 = vector.broadcast %0 : vector<1x288xf32> to vector<8x288xf32>
    %148 = arith.mulf %146, %147 : vector<8x288xf32>
    %cst_123 = arith.constant dense<0.000000e+00> : vector<8xf32>
    %149 = vector.multi_reduction <add>, %148, %cst_123 [1] : vector<8x288xf32> to vector<8xf32>
    %150 = vector.shape_cast %149 : vector<8xf32> to vector<8x1xf32>
    %cst_124 = arith.constant 3.906250e-03 : f32
    %151 = vector.broadcast %cst_124 : f32 to vector<8x1xf32>
    %152 = arith.mulf %150, %151 : vector<8x1xf32>
    %cst_125 = arith.constant 9.99999974E-6 : f32
    %153 = vector.broadcast %cst_125 : f32 to vector<8x1xf32>
    %154 = arith.addf %152, %153 : vector<8x1xf32>
    %155 = math.rsqrt %154 : vector<8x1xf32>
    %156 = vector.broadcast %155 : vector<8x1xf32> to vector<8x288xf32>
    %157 = arith.mulf %145, %156 : vector<8x288xf32>
    %c1_126 = arith.constant 1 : index
    %158 = memref.load %arg12[%c1_126] : memref<3xf32, #tpu.memory_space<smem>>
    %cst_127 = arith.constant 0.000000e+00 : f32
    %159 = vector.broadcast %cst_127 : f32 to vector<8x288xf32>
    %160 = arith.cmpf ogt, %157, %159 : vector<8x288xf32>
    %161 = vector.broadcast %158 : f32 to vector<8x288xf32>
    %162 = arith.mulf %161, %157 : vector<8x288xf32>
    %163 = arith.select %160, %157, %162 : vector<8x288xi1>, vector<8x288xf32>
    %164 = vector.broadcast %0 : vector<1x288xf32> to vector<8x288xf32>
    %165 = arith.mulf %163, %164 : vector<8x288xf32>
    %166 = arith.truncf %165 : vector<8x288xf32> to vector<8x288xbf16>
    %cst_128 = arith.constant 0.000000e+00 : bf16
    %167 = vector.broadcast %cst_128 : bf16 to vector<8x19xbf16>
    %c0_129 = arith.constant 0 : index
    %c0_130 = arith.constant 0 : index
    %168 = vector.load %arg19[%c0_129, %c0_130] : memref<8x342xbf16, #tpu.memory_space<vmem>>, vector<8x19xbf16>
    tpu.vector_store %arg19[%c0_129, %c0_130], %167 {strides = array<i32>} : memref<8x342xbf16, #tpu.memory_space<vmem>>, vector<8x19xbf16>,
    %cst_131 = arith.constant 0.000000e+00 : bf16
    %169 = vector.broadcast %cst_131 : bf16 to vector<8x35xbf16>
    %c0_132 = arith.constant 0 : index
    %c307_133 = arith.constant 307 : index
    %170 = vector.load %arg19[%c0_132, %c307_133] : memref<8x342xbf16, #tpu.memory_space<vmem>>, vector<8x35xbf16>
    tpu.vector_store %arg19[%c0_132, %c307_133], %169 {strides = array<i32>} : memref<8x342xbf16, #tpu.memory_space<vmem>>, vector<8x35xbf16>,
    %c0_134 = arith.constant 0 : index
    %c19_135 = arith.constant 19 : index
    %171 = vector.load %arg19[%c0_134, %c19_135] : memref<8x342xbf16, #tpu.memory_space<vmem>>, vector<8x288xbf16>
    tpu.vector_store %arg19[%c0_134, %c19_135], %166 {strides = array<i32>} : memref<8x342xbf16, #tpu.memory_space<vmem>>, vector<8x288xbf16>,
    %c0_136 = arith.constant 0 : index
    %c0_137 = arith.constant 0 : index
    %c0_138 = arith.constant 0 : index
    %172 = vector.load %arg6[%c0_136, %c0_137, %c0_138] : memref<9x8x8xbf16, #tpu.memory_space<vmem>>, vector<1x8x8xbf16>
    %173 = vector.shape_cast %172 : vector<1x8x8xbf16> to vector<8x8xbf16>
    %c0_139 = arith.constant 0 : index
    %c0_140 = arith.constant 0 : index
    %174 = vector.load %arg19[%c0_139, %c0_140] : memref<8x342xbf16, #tpu.memory_space<vmem>>, vector<8x288xbf16>
    %cst_141 = arith.constant dense<0.000000e+00> : vector<8x288xf32>
    %175 = tpu.matmul %173, %174, %cst_141 {dimension_numbers = #tpu.dot_dimension_numbers<[1], [0], [0], [1], [0, 0, 1, 1], [], []>} : vector<8x8xbf16>, vector<8x288xbf16>, vector<8x288xf32> -> vector<8x288xf32>
    %c1_142 = arith.constant 1 : index
    %c0_143 = arith.constant 0 : index
    %c0_144 = arith.constant 0 : index
    %176 = vector.load %arg6[%c1_142, %c0_143, %c0_144] : memref<9x8x8xbf16, #tpu.memory_space<vmem>>, vector<1x8x8xbf16>
    %177 = vector.shape_cast %176 : vector<1x8x8xbf16> to vector<8x8xbf16>
    %c0_145 = arith.constant 0 : index
    %c1_146 = arith.constant 1 : index
    %178 = vector.load %arg19[%c0_145, %c1_146] : memref<8x342xbf16, #tpu.memory_space<vmem>>, vector<8x288xbf16>
    %cst_147 = arith.constant dense<0.000000e+00> : vector<8x288xf32>
    %179 = tpu.matmul %177, %178, %cst_147 {dimension_numbers = #tpu.dot_dimension_numbers<[1], [0], [0], [1], [0, 0, 1, 1], [], []>} : vector<8x8xbf16>, vector<8x288xbf16>, vector<8x288xf32> -> vector<8x288xf32>
    %180 = arith.addf %175, %179 : vector<8x288xf32>
    %c2_148 = arith.constant 2 : index
    %c0_149 = arith.constant 0 : index
    %c0_150 = arith.constant 0 : index
    %181 = vector.load %arg6[%c2_148, %c0_149, %c0_150] : memref<9x8x8xbf16, #tpu.memory_space<vmem>>, vector<1x8x8xbf16>
    %182 = vector.shape_cast %181 : vector<1x8x8xbf16> to vector<8x8xbf16>
    %c0_151 = arith.constant 0 : index
    %c2_152 = arith.constant 2 : index
    %183 = vector.load %arg19[%c0_151, %c2_152] : memref<8x342xbf16, #tpu.memory_space<vmem>>, vector<8x288xbf16>
    %cst_153 = arith.constant dense<0.000000e+00> : vector<8x288xf32>
    %184 = tpu.matmul %182, %183, %cst_153 {dimension_numbers = #tpu.dot_dimension_numbers<[1], [0], [0], [1], [0, 0, 1, 1], [], []>} : vector<8x8xbf16>, vector<8x288xbf16>, vector<8x288xf32> -> vector<8x288xf32>
    %185 = arith.addf %180, %184 : vector<8x288xf32>
    %c3_154 = arith.constant 3 : index
    %c0_155 = arith.constant 0 : index
    %c0_156 = arith.constant 0 : index
    %186 = vector.load %arg6[%c3_154, %c0_155, %c0_156] : memref<9x8x8xbf16, #tpu.memory_space<vmem>>, vector<1x8x8xbf16>
    %187 = vector.shape_cast %186 : vector<1x8x8xbf16> to vector<8x8xbf16>
    %c0_157 = arith.constant 0 : index
    %c18_158 = arith.constant 18 : index
    %188 = vector.load %arg19[%c0_157, %c18_158] : memref<8x342xbf16, #tpu.memory_space<vmem>>, vector<8x288xbf16>
    %cst_159 = arith.constant dense<0.000000e+00> : vector<8x288xf32>
    %189 = tpu.matmul %187, %188, %cst_159 {dimension_numbers = #tpu.dot_dimension_numbers<[1], [0], [0], [1], [0, 0, 1, 1], [], []>} : vector<8x8xbf16>, vector<8x288xbf16>, vector<8x288xf32> -> vector<8x288xf32>
    %190 = arith.addf %185, %189 : vector<8x288xf32>
    %c4_160 = arith.constant 4 : index
    %c0_161 = arith.constant 0 : index
    %c0_162 = arith.constant 0 : index
    %191 = vector.load %arg6[%c4_160, %c0_161, %c0_162] : memref<9x8x8xbf16, #tpu.memory_space<vmem>>, vector<1x8x8xbf16>
    %192 = vector.shape_cast %191 : vector<1x8x8xbf16> to vector<8x8xbf16>
    %c0_163 = arith.constant 0 : index
    %c19_164 = arith.constant 19 : index
    %193 = vector.load %arg19[%c0_163, %c19_164] : memref<8x342xbf16, #tpu.memory_space<vmem>>, vector<8x288xbf16>
    %cst_165 = arith.constant dense<0.000000e+00> : vector<8x288xf32>
    %194 = tpu.matmul %192, %193, %cst_165 {dimension_numbers = #tpu.dot_dimension_numbers<[1], [0], [0], [1], [0, 0, 1, 1], [], []>} : vector<8x8xbf16>, vector<8x288xbf16>, vector<8x288xf32> -> vector<8x288xf32>
    %195 = arith.addf %190, %194 : vector<8x288xf32>
    %c5_166 = arith.constant 5 : index
    %c0_167 = arith.constant 0 : index
    %c0_168 = arith.constant 0 : index
    %196 = vector.load %arg6[%c5_166, %c0_167, %c0_168] : memref<9x8x8xbf16, #tpu.memory_space<vmem>>, vector<1x8x8xbf16>
    %197 = vector.shape_cast %196 : vector<1x8x8xbf16> to vector<8x8xbf16>
    %c0_169 = arith.constant 0 : index
    %c20_170 = arith.constant 20 : index
    %198 = vector.load %arg19[%c0_169, %c20_170] : memref<8x342xbf16, #tpu.memory_space<vmem>>, vector<8x288xbf16>
    %cst_171 = arith.constant dense<0.000000e+00> : vector<8x288xf32>
    %199 = tpu.matmul %197, %198, %cst_171 {dimension_numbers = #tpu.dot_dimension_numbers<[1], [0], [0], [1], [0, 0, 1, 1], [], []>} : vector<8x8xbf16>, vector<8x288xbf16>, vector<8x288xf32> -> vector<8x288xf32>
    %200 = arith.addf %195, %199 : vector<8x288xf32>
    %c6_172 = arith.constant 6 : index
    %c0_173 = arith.constant 0 : index
    %c0_174 = arith.constant 0 : index
    %201 = vector.load %arg6[%c6_172, %c0_173, %c0_174] : memref<9x8x8xbf16, #tpu.memory_space<vmem>>, vector<1x8x8xbf16>
    %202 = vector.shape_cast %201 : vector<1x8x8xbf16> to vector<8x8xbf16>
    %c0_175 = arith.constant 0 : index
    %c36_176 = arith.constant 36 : index
    %203 = vector.load %arg19[%c0_175, %c36_176] : memref<8x342xbf16, #tpu.memory_space<vmem>>, vector<8x288xbf16>
    %cst_177 = arith.constant dense<0.000000e+00> : vector<8x288xf32>
    %204 = tpu.matmul %202, %203, %cst_177 {dimension_numbers = #tpu.dot_dimension_numbers<[1], [0], [0], [1], [0, 0, 1, 1], [], []>} : vector<8x8xbf16>, vector<8x288xbf16>, vector<8x288xf32> -> vector<8x288xf32>
    %205 = arith.addf %200, %204 : vector<8x288xf32>
    %c7_178 = arith.constant 7 : index
    %c0_179 = arith.constant 0 : index
    %c0_180 = arith.constant 0 : index
    %206 = vector.load %arg6[%c7_178, %c0_179, %c0_180] : memref<9x8x8xbf16, #tpu.memory_space<vmem>>, vector<1x8x8xbf16>
    %207 = vector.shape_cast %206 : vector<1x8x8xbf16> to vector<8x8xbf16>
    %c0_181 = arith.constant 0 : index
    %c37_182 = arith.constant 37 : index
    %208 = vector.load %arg19[%c0_181, %c37_182] : memref<8x342xbf16, #tpu.memory_space<vmem>>, vector<8x288xbf16>
    %cst_183 = arith.constant dense<0.000000e+00> : vector<8x288xf32>
    %209 = tpu.matmul %207, %208, %cst_183 {dimension_numbers = #tpu.dot_dimension_numbers<[1], [0], [0], [1], [0, 0, 1, 1], [], []>} : vector<8x8xbf16>, vector<8x288xbf16>, vector<8x288xf32> -> vector<8x288xf32>
    %210 = arith.addf %205, %209 : vector<8x288xf32>
    %c8_184 = arith.constant 8 : index
    %c0_185 = arith.constant 0 : index
    %c0_186 = arith.constant 0 : index
    %211 = vector.load %arg6[%c8_184, %c0_185, %c0_186] : memref<9x8x8xbf16, #tpu.memory_space<vmem>>, vector<1x8x8xbf16>
    %212 = vector.shape_cast %211 : vector<1x8x8xbf16> to vector<8x8xbf16>
    %c0_187 = arith.constant 0 : index
    %c38_188 = arith.constant 38 : index
    %213 = vector.load %arg19[%c0_187, %c38_188] : memref<8x342xbf16, #tpu.memory_space<vmem>>, vector<8x288xbf16>
    %cst_189 = arith.constant dense<0.000000e+00> : vector<8x288xf32>
    %214 = tpu.matmul %212, %213, %cst_189 {dimension_numbers = #tpu.dot_dimension_numbers<[1], [0], [0], [1], [0, 0, 1, 1], [], []>} : vector<8x8xbf16>, vector<8x288xbf16>, vector<8x288xf32> -> vector<8x288xf32>
    %215 = arith.addf %210, %214 : vector<8x288xf32>
    %c0_190 = arith.constant 0 : index
    %c0_191 = arith.constant 0 : index
    %216 = vector.load %arg7[%c0_190, %c0_191] : memref<8x1xf32, #tpu.memory_space<vmem>>, vector<8x1xf32>
    %217 = vector.broadcast %216 : vector<8x1xf32> to vector<8x288xf32>
    %218 = arith.addf %215, %217 : vector<8x288xf32>
    %219 = vector.broadcast %0 : vector<1x288xf32> to vector<8x288xf32>
    %220 = arith.mulf %218, %219 : vector<8x288xf32>
    %cst_192 = arith.constant dense<0.000000e+00> : vector<8xf32>
    %221 = vector.multi_reduction <add>, %220, %cst_192 [1] : vector<8x288xf32> to vector<8xf32>
    %222 = vector.shape_cast %221 : vector<8xf32> to vector<8x1xf32>
    %cst_193 = arith.constant 3.906250e-03 : f32
    %223 = vector.broadcast %cst_193 : f32 to vector<8x1xf32>
    %224 = arith.mulf %222, %223 : vector<8x1xf32>
    %225 = vector.broadcast %224 : vector<8x1xf32> to vector<8x288xf32>
    %226 = arith.subf %218, %225 : vector<8x288xf32>
    %227 = arith.mulf %226, %226 : vector<8x288xf32>
    %228 = vector.broadcast %0 : vector<1x288xf32> to vector<8x288xf32>
    %229 = arith.mulf %227, %228 : vector<8x288xf32>
    %cst_194 = arith.constant dense<0.000000e+00> : vector<8xf32>
    %230 = vector.multi_reduction <add>, %229, %cst_194 [1] : vector<8x288xf32> to vector<8xf32>
    %231 = vector.shape_cast %230 : vector<8xf32> to vector<8x1xf32>
    %cst_195 = arith.constant 3.906250e-03 : f32
    %232 = vector.broadcast %cst_195 : f32 to vector<8x1xf32>
    %233 = arith.mulf %231, %232 : vector<8x1xf32>
    %cst_196 = arith.constant 9.99999974E-6 : f32
    %234 = vector.broadcast %cst_196 : f32 to vector<8x1xf32>
    %235 = arith.addf %233, %234 : vector<8x1xf32>
    %236 = math.rsqrt %235 : vector<8x1xf32>
    %237 = vector.broadcast %236 : vector<8x1xf32> to vector<8x288xf32>
    %238 = arith.mulf %226, %237 : vector<8x288xf32>
    %c2_197 = arith.constant 2 : index
    %239 = memref.load %arg12[%c2_197] : memref<3xf32, #tpu.memory_space<smem>>
    %cst_198 = arith.constant 0.000000e+00 : f32
    %240 = vector.broadcast %cst_198 : f32 to vector<8x288xf32>
    %241 = arith.cmpf ogt, %238, %240 : vector<8x288xf32>
    %242 = vector.broadcast %239 : f32 to vector<8x288xf32>
    %243 = arith.mulf %242, %238 : vector<8x288xf32>
    %244 = arith.select %241, %238, %243 : vector<8x288xi1>, vector<8x288xf32>
    %c0_199 = arith.constant 0 : index
    %c19_200 = arith.constant 19 : index
    %245 = vector.load %arg18[%c0_199, %c19_200] : memref<8x342xbf16, #tpu.memory_space<vmem>>, vector<8x288xbf16>
    %c0_201 = arith.constant 0 : index
    %c0_202 = arith.constant 0 : index
    %246 = vector.load %arg8[%c0_201, %c0_202] : memref<8x8xbf16, #tpu.memory_space<vmem>>, vector<8x8xbf16>
    %cst_203 = arith.constant dense<0.000000e+00> : vector<8x288xf32>
    %247 = tpu.matmul %246, %245, %cst_203 {dimension_numbers = #tpu.dot_dimension_numbers<[1], [0], [0], [1], [0, 0, 1, 1], [], []>} : vector<8x8xbf16>, vector<8x288xbf16>, vector<8x288xf32> -> vector<8x288xf32>
    %c0_204 = arith.constant 0 : index
    %c0_205 = arith.constant 0 : index
    %248 = vector.load %arg9[%c0_204, %c0_205] : memref<8x1xf32, #tpu.memory_space<vmem>>, vector<8x1xf32>
    %249 = vector.broadcast %248 : vector<8x1xf32> to vector<8x288xf32>
    %250 = arith.addf %247, %249 : vector<8x288xf32>
    %251 = arith.addf %250, %244 : vector<8x288xf32>
    %252 = vector.broadcast %0 : vector<1x288xf32> to vector<8x288xf32>
    %253 = arith.mulf %251, %252 : vector<8x288xf32>
    %254 = arith.truncf %253 : vector<8x288xf32> to vector<8x288xbf16>
    %cst_206 = arith.constant 0.000000e+00 : bf16
    %255 = vector.broadcast %cst_206 : bf16 to vector<8x19xbf16>
    %c0_207 = arith.constant 0 : index
    %c0_208 = arith.constant 0 : index
    %256 = vector.load %arg20[%c0_207, %c0_208] : memref<8x342xbf16, #tpu.memory_space<vmem>>, vector<8x19xbf16>
    tpu.vector_store %arg20[%c0_207, %c0_208], %255 {strides = array<i32>} : memref<8x342xbf16, #tpu.memory_space<vmem>>, vector<8x19xbf16>,
    %cst_209 = arith.constant 0.000000e+00 : bf16
    %257 = vector.broadcast %cst_209 : bf16 to vector<8x35xbf16>
    %c0_210 = arith.constant 0 : index
    %c307_211 = arith.constant 307 : index
    %258 = vector.load %arg20[%c0_210, %c307_211] : memref<8x342xbf16, #tpu.memory_space<vmem>>, vector<8x35xbf16>
    tpu.vector_store %arg20[%c0_210, %c307_211], %257 {strides = array<i32>} : memref<8x342xbf16, #tpu.memory_space<vmem>>, vector<8x35xbf16>,
    %c0_212 = arith.constant 0 : index
    %c19_213 = arith.constant 19 : index
    %259 = vector.load %arg20[%c0_212, %c19_213] : memref<8x342xbf16, #tpu.memory_space<vmem>>, vector<8x288xbf16>
    tpu.vector_store %arg20[%c0_212, %c19_213], %254 {strides = array<i32>} : memref<8x342xbf16, #tpu.memory_space<vmem>>, vector<8x288xbf16>,
    %c0_214 = arith.constant 0 : index
    %c0_215 = arith.constant 0 : index
    %260 = vector.load %arg14[%c0_214, %c0_215] : memref<288x256xbf16, #tpu.memory_space<vmem>>, vector<288x256xbf16>
    %cst_216 = arith.constant dense<0.000000e+00> : vector<8x256xf32>
    %261 = tpu.matmul %254, %260, %cst_216 {dimension_numbers = #tpu.dot_dimension_numbers<[1], [0], [0], [1], [0, 0, 1, 1], [], []>} : vector<8x288xbf16>, vector<288x256xbf16>, vector<8x256xf32> -> vector<8x256xf32>
    %c0_217 = arith.constant 0 : index
    %c0_218 = arith.constant 0 : index
    %c0_219 = arith.constant 0 : index
    %262 = vector.load %arg17[%c0_217, %c0_218, %c0_219] : memref<1x8x256xf32, #tpu.memory_space<vmem>>, vector<1x8x256xf32>
    %263 = vector.shape_cast %262 : vector<1x8x256xf32> to vector<8x256xf32>
    %264 = vector.shape_cast %261 : vector<8x256xf32> to vector<1x8x256xf32>
    tpu.vector_store %arg17[%c0_217, %c0_218, %c0_219], %264 {strides = array<i32>} : memref<1x8x256xf32, #tpu.memory_space<vmem>>, vector<1x8x256xf32>,
    %c0_220 = arith.constant 0 : index
    %c0_221 = arith.constant 0 : index
    %c0_222 = arith.constant 0 : index
    %265 = vector.load %arg10[%c0_220, %c0_221, %c0_222] : memref<9x8x8xbf16, #tpu.memory_space<vmem>>, vector<1x8x8xbf16>
    %266 = vector.shape_cast %265 : vector<1x8x8xbf16> to vector<8x8xbf16>
    %c0_223 = arith.constant 0 : index
    %c0_224 = arith.constant 0 : index
    %267 = vector.load %arg20[%c0_223, %c0_224] : memref<8x342xbf16, #tpu.memory_space<vmem>>, vector<8x288xbf16>
    %cst_225 = arith.constant dense<0.000000e+00> : vector<8x288xf32>
    %268 = tpu.matmul %266, %267, %cst_225 {dimension_numbers = #tpu.dot_dimension_numbers<[1], [0], [0], [1], [0, 0, 1, 1], [], []>} : vector<8x8xbf16>, vector<8x288xbf16>, vector<8x288xf32> -> vector<8x288xf32>
    %c1_226 = arith.constant 1 : index
    %c0_227 = arith.constant 0 : index
    %c0_228 = arith.constant 0 : index
    %269 = vector.load %arg10[%c1_226, %c0_227, %c0_228] : memref<9x8x8xbf16, #tpu.memory_space<vmem>>, vector<1x8x8xbf16>
    %270 = vector.shape_cast %269 : vector<1x8x8xbf16> to vector<8x8xbf16>
    %c0_229 = arith.constant 0 : index
    %c1_230 = arith.constant 1 : index
    %271 = vector.load %arg20[%c0_229, %c1_230] : memref<8x342xbf16, #tpu.memory_space<vmem>>, vector<8x288xbf16>
    %cst_231 = arith.constant dense<0.000000e+00> : vector<8x288xf32>
    %272 = tpu.matmul %270, %271, %cst_231 {dimension_numbers = #tpu.dot_dimension_numbers<[1], [0], [0], [1], [0, 0, 1, 1], [], []>} : vector<8x8xbf16>, vector<8x288xbf16>, vector<8x288xf32> -> vector<8x288xf32>
    %273 = arith.addf %268, %272 : vector<8x288xf32>
    %c2_232 = arith.constant 2 : index
    %c0_233 = arith.constant 0 : index
    %c0_234 = arith.constant 0 : index
    %274 = vector.load %arg10[%c2_232, %c0_233, %c0_234] : memref<9x8x8xbf16, #tpu.memory_space<vmem>>, vector<1x8x8xbf16>
    %275 = vector.shape_cast %274 : vector<1x8x8xbf16> to vector<8x8xbf16>
    %c0_235 = arith.constant 0 : index
    %c2_236 = arith.constant 2 : index
    %276 = vector.load %arg20[%c0_235, %c2_236] : memref<8x342xbf16, #tpu.memory_space<vmem>>, vector<8x288xbf16>
    %cst_237 = arith.constant dense<0.000000e+00> : vector<8x288xf32>
    %277 = tpu.matmul %275, %276, %cst_237 {dimension_numbers = #tpu.dot_dimension_numbers<[1], [0], [0], [1], [0, 0, 1, 1], [], []>} : vector<8x8xbf16>, vector<8x288xbf16>, vector<8x288xf32> -> vector<8x288xf32>
    %278 = arith.addf %273, %277 : vector<8x288xf32>
    %c3_238 = arith.constant 3 : index
    %c0_239 = arith.constant 0 : index
    %c0_240 = arith.constant 0 : index
    %279 = vector.load %arg10[%c3_238, %c0_239, %c0_240] : memref<9x8x8xbf16, #tpu.memory_space<vmem>>, vector<1x8x8xbf16>
    %280 = vector.shape_cast %279 : vector<1x8x8xbf16> to vector<8x8xbf16>
    %c0_241 = arith.constant 0 : index
    %c18_242 = arith.constant 18 : index
    %281 = vector.load %arg20[%c0_241, %c18_242] : memref<8x342xbf16, #tpu.memory_space<vmem>>, vector<8x288xbf16>
    %cst_243 = arith.constant dense<0.000000e+00> : vector<8x288xf32>
    %282 = tpu.matmul %280, %281, %cst_243 {dimension_numbers = #tpu.dot_dimension_numbers<[1], [0], [0], [1], [0, 0, 1, 1], [], []>} : vector<8x8xbf16>, vector<8x288xbf16>, vector<8x288xf32> -> vector<8x288xf32>
    %283 = arith.addf %278, %282 : vector<8x288xf32>
    %c4_244 = arith.constant 4 : index
    %c0_245 = arith.constant 0 : index
    %c0_246 = arith.constant 0 : index
    %284 = vector.load %arg10[%c4_244, %c0_245, %c0_246] : memref<9x8x8xbf16, #tpu.memory_space<vmem>>, vector<1x8x8xbf16>
    %285 = vector.shape_cast %284 : vector<1x8x8xbf16> to vector<8x8xbf16>
    %c0_247 = arith.constant 0 : index
    %c19_248 = arith.constant 19 : index
    %286 = vector.load %arg20[%c0_247, %c19_248] : memref<8x342xbf16, #tpu.memory_space<vmem>>, vector<8x288xbf16>
    %cst_249 = arith.constant dense<0.000000e+00> : vector<8x288xf32>
    %287 = tpu.matmul %285, %286, %cst_249 {dimension_numbers = #tpu.dot_dimension_numbers<[1], [0], [0], [1], [0, 0, 1, 1], [], []>} : vector<8x8xbf16>, vector<8x288xbf16>, vector<8x288xf32> -> vector<8x288xf32>
    %288 = arith.addf %283, %287 : vector<8x288xf32>
    %c5_250 = arith.constant 5 : index
    %c0_251 = arith.constant 0 : index
    %c0_252 = arith.constant 0 : index
    %289 = vector.load %arg10[%c5_250, %c0_251, %c0_252] : memref<9x8x8xbf16, #tpu.memory_space<vmem>>, vector<1x8x8xbf16>
    %290 = vector.shape_cast %289 : vector<1x8x8xbf16> to vector<8x8xbf16>
    %c0_253 = arith.constant 0 : index
    %c20_254 = arith.constant 20 : index
    %291 = vector.load %arg20[%c0_253, %c20_254] : memref<8x342xbf16, #tpu.memory_space<vmem>>, vector<8x288xbf16>
    %cst_255 = arith.constant dense<0.000000e+00> : vector<8x288xf32>
    %292 = tpu.matmul %290, %291, %cst_255 {dimension_numbers = #tpu.dot_dimension_numbers<[1], [0], [0], [1], [0, 0, 1, 1], [], []>} : vector<8x8xbf16>, vector<8x288xbf16>, vector<8x288xf32> -> vector<8x288xf32>
    %293 = arith.addf %288, %292 : vector<8x288xf32>
    %c6_256 = arith.constant 6 : index
    %c0_257 = arith.constant 0 : index
    %c0_258 = arith.constant 0 : index
    %294 = vector.load %arg10[%c6_256, %c0_257, %c0_258] : memref<9x8x8xbf16, #tpu.memory_space<vmem>>, vector<1x8x8xbf16>
    %295 = vector.shape_cast %294 : vector<1x8x8xbf16> to vector<8x8xbf16>
    %c0_259 = arith.constant 0 : index
    %c36_260 = arith.constant 36 : index
    %296 = vector.load %arg20[%c0_259, %c36_260] : memref<8x342xbf16, #tpu.memory_space<vmem>>, vector<8x288xbf16>
    %cst_261 = arith.constant dense<0.000000e+00> : vector<8x288xf32>
    %297 = tpu.matmul %295, %296, %cst_261 {dimension_numbers = #tpu.dot_dimension_numbers<[1], [0], [0], [1], [0, 0, 1, 1], [], []>} : vector<8x8xbf16>, vector<8x288xbf16>, vector<8x288xf32> -> vector<8x288xf32>
    %298 = arith.addf %293, %297 : vector<8x288xf32>
    %c7_262 = arith.constant 7 : index
    %c0_263 = arith.constant 0 : index
    %c0_264 = arith.constant 0 : index
    %299 = vector.load %arg10[%c7_262, %c0_263, %c0_264] : memref<9x8x8xbf16, #tpu.memory_space<vmem>>, vector<1x8x8xbf16>
    %300 = vector.shape_cast %299 : vector<1x8x8xbf16> to vector<8x8xbf16>
    %c0_265 = arith.constant 0 : index
    %c37_266 = arith.constant 37 : index
    %301 = vector.load %arg20[%c0_265, %c37_266] : memref<8x342xbf16, #tpu.memory_space<vmem>>, vector<8x288xbf16>
    %cst_267 = arith.constant dense<0.000000e+00> : vector<8x288xf32>
    %302 = tpu.matmul %300, %301, %cst_267 {dimension_numbers = #tpu.dot_dimension_numbers<[1], [0], [0], [1], [0, 0, 1, 1], [], []>} : vector<8x8xbf16>, vector<8x288xbf16>, vector<8x288xf32> -> vector<8x288xf32>
    %303 = arith.addf %298, %302 : vector<8x288xf32>
    %c8_268 = arith.constant 8 : index
    %c0_269 = arith.constant 0 : index
    %c0_270 = arith.constant 0 : index
    %304 = vector.load %arg10[%c8_268, %c0_269, %c0_270] : memref<9x8x8xbf16, #tpu.memory_space<vmem>>, vector<1x8x8xbf16>
    %305 = vector.shape_cast %304 : vector<1x8x8xbf16> to vector<8x8xbf16>
    %c0_271 = arith.constant 0 : index
    %c38_272 = arith.constant 38 : index
    %306 = vector.load %arg20[%c0_271, %c38_272] : memref<8x342xbf16, #tpu.memory_space<vmem>>, vector<8x288xbf16>
    %cst_273 = arith.constant dense<0.000000e+00> : vector<8x288xf32>
    %307 = tpu.matmul %305, %306, %cst_273 {dimension_numbers = #tpu.dot_dimension_numbers<[1], [0], [0], [1], [0, 0, 1, 1], [], []>} : vector<8x8xbf16>, vector<8x288xbf16>, vector<8x288xf32> -> vector<8x288xf32>
    %308 = arith.addf %303, %307 : vector<8x288xf32>
    %c0_274 = arith.constant 0 : index
    %c0_275 = arith.constant 0 : index
    %309 = vector.load %arg11[%c0_274, %c0_275] : memref<8x1xf32, #tpu.memory_space<vmem>>, vector<8x1xf32>
    %310 = vector.broadcast %309 : vector<8x1xf32> to vector<8x288xf32>
    %311 = arith.addf %308, %310 : vector<8x288xf32>
    %c0_276 = arith.constant 0 : index
    %c0_277 = arith.constant 0 : index
    %312 = vector.load %arg15[%c0_276, %c0_277] : memref<288x64xf32, #tpu.memory_space<vmem>>, vector<288x64xf32>
    %cst_278 = arith.constant dense<0.000000e+00> : vector<8x64xf32>
    %313 = tpu.matmul %311, %312, %cst_278 {dimension_numbers = #tpu.dot_dimension_numbers<[1], [0], [0], [1], [0, 0, 1, 1], [], []>} : vector<8x288xf32>, vector<288x64xf32>, vector<8x64xf32> -> vector<8x64xf32>
    %c0_279 = arith.constant 0 : index
    %c0_280 = arith.constant 0 : index
    %c0_281 = arith.constant 0 : index
    %314 = vector.load %arg16[%c0_279, %c0_280, %c0_281] : memref<1x8x64xf32, #tpu.memory_space<vmem>>, vector<1x8x64xf32>
    %315 = vector.shape_cast %314 : vector<1x8x64xf32> to vector<8x64xf32>
    %316 = vector.shape_cast %313 : vector<8x64xf32> to vector<1x8x64xf32>
    tpu.vector_store %arg16[%c0_279, %c0_280, %c0_281], %316 {strides = array<i32>} : memref<1x8x64xf32, #tpu.memory_space<vmem>>, vector<1x8x64xf32>,
    return
  }
  func.func @transform_0(%arg0: i32) -> (i32, i32, i32) {
    %c0_i32 = arith.constant 0 : i32
    %c0_i32_0 = arith.constant 0 : i32
    %c0_i32_1 = arith.constant 0 : i32
    return %arg0, %c0_i32, %c0_i32_0 : i32, i32, i32
  }
  func.func @transform_1(%arg0: i32) -> (i32, i32, i32) {
    %c0_i32 = arith.constant 0 : i32
    %c0_i32_0 = arith.constant 0 : i32
    %c0_i32_1 = arith.constant 0 : i32
    %c0_i32_2 = arith.constant 0 : i32
    return %c0_i32, %c0_i32_0, %c0_i32_1 : i32, i32, i32
  }
  func.func @transform_2(%arg0: i32) -> (i32, i32) {
    %c0_i32 = arith.constant 0 : i32
    %c0_i32_0 = arith.constant 0 : i32
    %c0_i32_1 = arith.constant 0 : i32
    return %c0_i32, %c0_i32_0 : i32, i32
  }
  func.func @transform_3(%arg0: i32) -> (i32, i32, i32) {
    %c0_i32 = arith.constant 0 : i32
    %c0_i32_0 = arith.constant 0 : i32
    %c0_i32_1 = arith.constant 0 : i32
    %c0_i32_2 = arith.constant 0 : i32
    return %c0_i32, %c0_i32_0, %c0_i32_1 : i32, i32, i32
  }
  func.func @transform_4(%arg0: i32) -> (i32, i32) {
    %c0_i32 = arith.constant 0 : i32
    %c0_i32_0 = arith.constant 0 : i32
    %c0_i32_1 = arith.constant 0 : i32
    return %c0_i32, %c0_i32_0 : i32, i32
  }
  func.func @transform_5(%arg0: i32) -> (i32, i32, i32) {
    %c0_i32 = arith.constant 0 : i32
    %c0_i32_0 = arith.constant 0 : i32
    %c0_i32_1 = arith.constant 0 : i32
    %c0_i32_2 = arith.constant 0 : i32
    return %c0_i32, %c0_i32_0, %c0_i32_1 : i32, i32, i32
  }
  func.func @transform_6(%arg0: i32) -> (i32, i32) {
    %c0_i32 = arith.constant 0 : i32
    %c0_i32_0 = arith.constant 0 : i32
    %c0_i32_1 = arith.constant 0 : i32
    return %c0_i32, %c0_i32_0 : i32, i32
  }
  func.func @transform_7(%arg0: i32) -> (i32, i32) {
    %c0_i32 = arith.constant 0 : i32
    %c0_i32_0 = arith.constant 0 : i32
    %c0_i32_1 = arith.constant 0 : i32
    return %c0_i32, %c0_i32_0 : i32, i32
  }
  func.func @transform_8(%arg0: i32) -> (i32, i32) {
    %c0_i32 = arith.constant 0 : i32
    %c0_i32_0 = arith.constant 0 : i32
    %c0_i32_1 = arith.constant 0 : i32
    return %c0_i32, %c0_i32_0 : i32, i32
  }
  func.func @transform_9(%arg0: i32) -> (i32, i32, i32) {
    %c0_i32 = arith.constant 0 : i32
    %c0_i32_0 = arith.constant 0 : i32
    %c0_i32_1 = arith.constant 0 : i32
    %c0_i32_2 = arith.constant 0 : i32
    return %c0_i32, %c0_i32_0, %c0_i32_1 : i32, i32, i32
  }
  func.func @transform_10(%arg0: i32) -> (i32, i32) {
    %c0_i32 = arith.constant 0 : i32
    %c0_i32_0 = arith.constant 0 : i32
    %c0_i32_1 = arith.constant 0 : i32
    return %c0_i32, %c0_i32_0 : i32, i32
  }
  func.func @transform_11(%arg0: i32) -> i32 {
    %c0_i32 = arith.constant 0 : i32
    %c0_i32_0 = arith.constant 0 : i32
    return %c0_i32 : i32
  }
  func.func @transform_12(%arg0: i32) -> (i32, i32) {
    %c0_i32 = arith.constant 0 : i32
    %c0_i32_0 = arith.constant 0 : i32
    %c0_i32_1 = arith.constant 0 : i32
    return %c0_i32, %c0_i32_0 : i32, i32
  }
  func.func @transform_13(%arg0: i32) -> (i32, i32) {
    %c0_i32 = arith.constant 0 : i32
    %c0_i32_0 = arith.constant 0 : i32
    %c0_i32_1 = arith.constant 0 : i32
    return %c0_i32, %c0_i32_0 : i32, i32
  }
  func.func @transform_14(%arg0: i32) -> (i32, i32) {
    %c0_i32 = arith.constant 0 : i32
    %c0_i32_0 = arith.constant 0 : i32
    %c0_i32_1 = arith.constant 0 : i32
    return %c0_i32, %c0_i32_0 : i32, i32
  }
  func.func @transform_15(%arg0: i32) -> (i32, i32, i32) {
    %c0_i32 = arith.constant 0 : i32
    %c0_i32_0 = arith.constant 0 : i32
    %c0_i32_1 = arith.constant 0 : i32
    return %arg0, %c0_i32, %c0_i32_0 : i32, i32, i32
  }
  func.func @transform_16(%arg0: i32) -> (i32, i32, i32) {
    %c0_i32 = arith.constant 0 : i32
    %c0_i32_0 = arith.constant 0 : i32
    %c0_i32_1 = arith.constant 0 : i32
    return %arg0, %c0_i32, %c0_i32_0 : i32, i32, i32
  }
}

</mosaic_0001>

<llo_original>
// kernel: _lambda_.1
$region0: #{_lambda_.1}
  #allocation0 [shape = 'u32[]', space=smem, size = 0x4, offset = 0x4, fixed_abs, tag = 'smem constant byte address 0x4 - core index']
  #allocation1 [shape = 'u32[144,128]{1,0:T(1,128)}', space=vmem, size = 0x12000, scoped, tag = 'internal scratch']
  #allocation2 [shape = 'bf16[8,342]{1,0:T(8,128)(2,1)}', space=vmem, size = 0x1800, scoped, tag = 'scratch operand']
  #allocation3 [shape = 'bf16[8,342]{1,0:T(8,128)(2,1)}', space=vmem, size = 0x1800, scoped, tag = 'scratch operand']
  #allocation4 [shape = 'bf16[8,342]{1,0:T(8,128)(2,1)}', space=vmem, size = 0x1800, scoped, tag = 'scratch operand']
  %s0 = inlined_call_operand.vmem [shape: bf16[2,4,342], index: 0, kind: input, shape index: {}]
  %s1 = inlined_call_operand.vmem [shape: bf16[9,8,4], index: 1, kind: input, shape index: {}]
  %s2 = inlined_call_operand.vmem [shape: f32[8,1], index: 2, kind: input, shape index: {}]
  %s3 = inlined_call_operand.vmem [shape: bf16[9,8,8], index: 3, kind: input, shape index: {}]
  %s4 = inlined_call_operand.vmem [shape: f32[8,1], index: 4, kind: input, shape index: {}]
  %s5 = inlined_call_operand.vmem [shape: bf16[9,8,8], index: 5, kind: input, shape index: {}]
  %s6 = inlined_call_operand.vmem [shape: f32[8,1], index: 6, kind: input, shape index: {}]
  %s7 = inlined_call_operand.vmem [shape: bf16[8,8], index: 7, kind: input, shape index: {}]
  %s8 = inlined_call_operand.vmem [shape: f32[8,1], index: 8, kind: input, shape index: {}]
  %s9 = inlined_call_operand.vmem [shape: bf16[9,8,8], index: 9, kind: input, shape index: {}]
  %s10 = inlined_call_operand.vmem [shape: f32[8,1], index: 10, kind: input, shape index: {}]
  %s11 = inlined_call_operand.vmem [shape: f32[3], index: 11, kind: input, shape index: {}]
  %s12 = inlined_call_operand.vmem [shape: f32[1,288], index: 12, kind: input, shape index: {}]
  %s13 = inlined_call_operand.vmem [shape: bf16[288,256], index: 13, kind: input, shape index: {}]
  %s14 = inlined_call_operand.vmem [shape: f32[288,64], index: 14, kind: input, shape index: {}]
  %s15 = inlined_call_operand.vmem [shape: f32[2,8,64], index: 15, kind: output, shape index: {0}]
  %s16 = inlined_call_operand.vmem [shape: f32[2,8,256], index: 16, kind: output, shape index: {1}]
  %17 = xla_tuple %s15, %s16
  %s18 = sld [smem:[#allocation0]]
  $region105: #{_lambda_.1} parent=0
    _
  %s20 = ssub.s32 1, %s18
  %s21 = scalar_select 0, %s20, %s18
  $region1: #{_lambda_.1} parent=0
    #allocation5 [shape = 'u8[512]{0}', space=smem, size = 0x200, scoped, tag = 'input window, operand 11, single buffered']
    #allocation6 [shape = 's32[2]{0}', space=sflag, size = 0x8, scoped, tag = 'scoped memory for _lambda_.1']
    %22 = vsyncpa [#allocation6], 0
    loop: start=0, step=1, limit=4
    $region2: #{_lambda_.1} parent=1 // loop_pre_header
      _
    $region3: #{_lambda_.1} parent=1 // loop_header
      %s24 = sphi 0, %s28
      %p25 = scmp.ge.s32.totalorder %s24, 4
      %s34 = sphi 0, %s36
      %s37 = sphi 0, %s34
      %s38 = sphi 0, %s37
      %s54 = sphi 0, %s38
      %s58 = sphi 0, %s58
      %s60 = sphi 0, %s58
      %s61 = sphi 0, %s60
      %s75 = sphi 0, %s61
      %s79 = sphi 0, %s79
      %s81 = sphi 0, %s79
      %s82 = sphi 0, %s81
      %s96 = sphi 0, %s82
      %s100 = sphi 0, %s100
      %s102 = sphi 0, %s100
      %s103 = sphi 0, %s102
      %s117 = sphi 0, %s103
      %s121 = sphi 0, %s121
      %s123 = sphi 0, %s121
      %s124 = sphi 0, %s123
      %s138 = sphi 0, %s124
      %s142 = sphi 0, %s142
      %s144 = sphi 0, %s142
      %s145 = sphi 0, %s144
      %s159 = sphi 0, %s145
      %s163 = sphi 0, %s163
      %s165 = sphi 0, %s163
      %s166 = sphi 0, %s165
      %s180 = sphi 0, %s166
      %s184 = sphi 0, %s184
      %s186 = sphi 0, %s184
      %s187 = sphi 0, %s186
      %s201 = sphi 0, %s187
      %s205 = sphi 0, %s205
      %s207 = sphi 0, %s205
      %s208 = sphi 0, %s207
      %s222 = sphi 0, %s208
      %s226 = sphi 0, %s226
      %s228 = sphi 0, %s226
      %s229 = sphi 0, %s228
      %s243 = sphi 0, %s229
      %s247 = sphi 0, %s247
      %s249 = sphi 0, %s247
      %s250 = sphi 0, %s249
      %s264 = sphi 0, %s250
      %s268 = sphi 0, %s268
      %s270 = sphi 0, %s268
      %s271 = sphi 0, %s270
      %s285 = sphi 0, %s271
      %s289 = sphi 0, %s289
      %s291 = sphi 0, %s289
      %s292 = sphi 0, %s291
      %s306 = sphi 0, %s292
      %s310 = sphi 0, %s310
      %s312 = sphi 0, %s310
      %s313 = sphi 0, %s312
      %s327 = sphi 0, %s313
      %s331 = sphi 0, %s331
      %s333 = sphi 0, %s331
      %s334 = sphi 0, %s333
      %s348 = sphi 0, %s334
      %s354 = sphi 0, %s356
      %s357 = sphi 0, %s354
      %s358 = sphi 0, %s357
      %s374 = sphi 0, %s358
      %s380 = sphi 0, %s382
      %s383 = sphi 0, %s380
      %s384 = sphi 0, %s383
      %s400 = sphi 0, %s384
    $region4: #{_lambda_.1} parent=1 // loop_header_branch
      %27 = sbr.rel (%p25) target = $region8
    $region5: #{_lambda_.1} parent=1 // loop_body
      %s29 = ssub.s32 %s24, 1
      %s30 = ssub.s32 %s24, 2
      %s31 = sadd.s32 %s24, 1
      %s32 = ssub.s32 %s24, %s31
      %p33 = scmp.eq.s32.totalorder %s32, 0
      %s35 = sadd.s32 %s34, 1
      %s36 = scalar_select %p33, %s34, %s35
      %p39 = pneg %p33
      %p40 = scmp.eq.s32.totalorder %s24, 1
      %p41 = por %p39, %p40
      %p42 = scmp.ne.s32.totalorder %s34, %s37
      %p43 = scmp.eq.s32.totalorder %s24, 0
      %p44 = por %p42, %p43
      %p45 = scmp.ne.s32.totalorder %s34, %s37
      %p46 = scmp.eq.s32.totalorder %s29, 1
      %p47 = por %p45, %p46
      %p48 = scmp.ne.s32.totalorder %s37, %s38
      %p49 = scmp.eq.s32.totalorder %s29, 0
      %p50 = por %p48, %p49
      %p51 = scmp.ne.s32.totalorder %s37, %s38
      %p52 = scmp.eq.s32.totalorder %s30, 1
      %p53 = por %p51, %p52
      %p55 = scmp.ne.s32.totalorder %s38, %s54
      %p56 = scmp.eq.s32.totalorder %s30, 0
      %p57 = por %p55, %p56
      %s59 = sadd.s32 %s58, 1
      %p62 = scmp.eq.s32.totalorder %s24, 1
      %p63 = scmp.ne.s32.totalorder %s58, %s60
      %p64 = scmp.eq.s32.totalorder %s24, 0
      %p65 = por %p63, %p64
      %p66 = scmp.ne.s32.totalorder %s58, %s60
      %p67 = scmp.eq.s32.totalorder %s29, 1
      %p68 = por %p66, %p67
      %p69 = scmp.ne.s32.totalorder %s60, %s61
      %p70 = scmp.eq.s32.totalorder %s29, 0
      %p71 = por %p69, %p70
      %p72 = scmp.ne.s32.totalorder %s60, %s61
      %p73 = scmp.eq.s32.totalorder %s30, 1
      %p74 = por %p72, %p73
      %p76 = scmp.ne.s32.totalorder %s61, %s75
      %p77 = scmp.eq.s32.totalorder %s30, 0
      %p78 = por %p76, %p77
      %s80 = sadd.s32 %s79, 1
      %p83 = scmp.eq.s32.totalorder %s24, 1
      %p84 = scmp.ne.s32.totalorder %s79, %s81
      %p85 = scmp.eq.s32.totalorder %s24, 0
      %p86 = por %p84, %p85
      %p87 = scmp.ne.s32.totalorder %s79, %s81
      %p88 = scmp.eq.s32.totalorder %s29, 1
      %p89 = por %p87, %p88
      %p90 = scmp.ne.s32.totalorder %s81, %s82
      %p91 = scmp.eq.s32.totalorder %s29, 0
      %p92 = por %p90, %p91
      %p93 = scmp.ne.s32.totalorder %s81, %s82
      %p94 = scmp.eq.s32.totalorder %s30, 1
      %p95 = por %p93, %p94
      %p97 = scmp.ne.s32.totalorder %s82, %s96
      %p98 = scmp.eq.s32.totalorder %s30, 0
      %p99 = por %p97, %p98
      %s101 = sadd.s32 %s100, 1
      %p104 = scmp.eq.s32.totalorder %s24, 1
      %p105 = scmp.ne.s32.totalorder %s100, %s102
      %p106 = scmp.eq.s32.totalorder %s24, 0
      %p107 = por %p105, %p106
      %p108 = scmp.ne.s32.totalorder %s100, %s102
      %p109 = scmp.eq.s32.totalorder %s29, 1
      %p110 = por %p108, %p109
      %p111 = scmp.ne.s32.totalorder %s102, %s103
      %p112 = scmp.eq.s32.totalorder %s29, 0
      %p113 = por %p111, %p112
      %p114 = scmp.ne.s32.totalorder %s102, %s103
      %p115 = scmp.eq.s32.totalorder %s30, 1
      %p116 = por %p114, %p115
      %p118 = scmp.ne.s32.totalorder %s103, %s117
      %p119 = scmp.eq.s32.totalorder %s30, 0
      %p120 = por %p118, %p119
      %s122 = sadd.s32 %s121, 1
      %p125 = scmp.eq.s32.totalorder %s24, 1
      %p126 = scmp.ne.s32.totalorder %s121, %s123
      %p127 = scmp.eq.s32.totalorder %s24, 0
      %p128 = por %p126, %p127
      %p129 = scmp.ne.s32.totalorder %s121, %s123
      %p130 = scmp.eq.s32.totalorder %s29, 1
      %p131 = por %p129, %p130
      %p132 = scmp.ne.s32.totalorder %s123, %s124
      %p133 = scmp.eq.s32.totalorder %s29, 0
      %p134 = por %p132, %p133
      %p135 = scmp.ne.s32.totalorder %s123, %s124
      %p136 = scmp.eq.s32.totalorder %s30, 1
      %p137 = por %p135, %p136
      %p139 = scmp.ne.s32.totalorder %s124, %s138
      %p140 = scmp.eq.s32.totalorder %s30, 0
      %p141 = por %p139, %p140
      %s143 = sadd.s32 %s142, 1
      %p146 = scmp.eq.s32.totalorder %s24, 1
      %p147 = scmp.ne.s32.totalorder %s142, %s144
      %p148 = scmp.eq.s32.totalorder %s24, 0
      %p149 = por %p147, %p148
      %p150 = scmp.ne.s32.totalorder %s142, %s144
      %p151 = scmp.eq.s32.totalorder %s29, 1
      %p152 = por %p150, %p151
      %p153 = scmp.ne.s32.totalorder %s144, %s145
      %p154 = scmp.eq.s32.totalorder %s29, 0
      %p155 = por %p153, %p154
      %p156 = scmp.ne.s32.totalorder %s144, %s145
      %p157 = scmp.eq.s32.totalorder %s30, 1
      %p158 = por %p156, %p157
      %p160 = scmp.ne.s32.totalorder %s145, %s159
      %p161 = scmp.eq.s32.totalorder %s30, 0
      %p162 = por %p160, %p161
      %s164 = sadd.s32 %s163, 1
      %p167 = scmp.eq.s32.totalorder %s24, 1
      %p168 = scmp.ne.s32.totalorder %s163, %s165
      %p169 = scmp.eq.s32.totalorder %s24, 0
      %p170 = por %p168, %p169
      %p171 = scmp.ne.s32.totalorder %s163, %s165
      %p172 = scmp.eq.s32.totalorder %s29, 1
      %p173 = por %p171, %p172
      %p174 = scmp.ne.s32.totalorder %s165, %s166
      %p175 = scmp.eq.s32.totalorder %s29, 0
      %p176 = por %p174, %p175
      %p177 = scmp.ne.s32.totalorder %s165, %s166
      %p178 = scmp.eq.s32.totalorder %s30, 1
      %p179 = por %p177, %p178
      %p181 = scmp.ne.s32.totalorder %s166, %s180
      %p182 = scmp.eq.s32.totalorder %s30, 0
      %p183 = por %p181, %p182
      %s185 = sadd.s32 %s184, 1
      %p188 = scmp.eq.s32.totalorder %s24, 1
      %p189 = scmp.ne.s32.totalorder %s184, %s186
      %p190 = scmp.eq.s32.totalorder %s24, 0
      %p191 = por %p189, %p190
      %p192 = scmp.ne.s32.totalorder %s184, %s186
      %p193 = scmp.eq.s32.totalorder %s29, 1
      %p194 = por %p192, %p193
      %p195 = scmp.ne.s32.totalorder %s186, %s187
      %p196 = scmp.eq.s32.totalorder %s29, 0
      %p197 = por %p195, %p196
      %p198 = scmp.ne.s32.totalorder %s186, %s187
      %p199 = scmp.eq.s32.totalorder %s30, 1
      %p200 = por %p198, %p199
      %p202 = scmp.ne.s32.totalorder %s187, %s201
      %p203 = scmp.eq.s32.totalorder %s30, 0
      %p204 = por %p202, %p203
      %s206 = sadd.s32 %s205, 1
      %p209 = scmp.eq.s32.totalorder %s24, 1
      %p210 = scmp.ne.s32.totalorder %s205, %s207
      %p211 = scmp.eq.s32.totalorder %s24, 0
      %p212 = por %p210, %p211
      %p213 = scmp.ne.s32.totalorder %s205, %s207
      %p214 = scmp.eq.s32.totalorder %s29, 1
      %p215 = por %p213, %p214
      %p216 = scmp.ne.s32.totalorder %s207, %s208
      %p217 = scmp.eq.s32.totalorder %s29, 0
      %p218 = por %p216, %p217
      %p219 = scmp.ne.s32.totalorder %s207, %s208
      %p220 = scmp.eq.s32.totalorder %s30, 1
      %p221 = por %p219, %p220
      %p223 = scmp.ne.s32.totalorder %s208, %s222
      %p224 = scmp.eq.s32.totalorder %s30, 0
      %p225 = por %p223, %p224
      %s227 = sadd.s32 %s226, 1
      %p230 = scmp.eq.s32.totalorder %s24, 1
      %p231 = scmp.ne.s32.totalorder %s226, %s228
      %p232 = scmp.eq.s32.totalorder %s24, 0
      %p233 = por %p231, %p232
      %p234 = scmp.ne.s32.totalorder %s226, %s228
      %p235 = scmp.eq.s32.totalorder %s29, 1
      %p236 = por %p234, %p235
      %p237 = scmp.ne.s32.totalorder %s228, %s229
      %p238 = scmp.eq.s32.totalorder %s29, 0
      %p239 = por %p237, %p238
      %p240 = scmp.ne.s32.totalorder %s228, %s229
      %p241 = scmp.eq.s32.totalorder %s30, 1
      %p242 = por %p240, %p241
      %p244 = scmp.ne.s32.totalorder %s229, %s243
      %p245 = scmp.eq.s32.totalorder %s30, 0
      %p246 = por %p244, %p245
      %s248 = sadd.s32 %s247, 1
      %p251 = scmp.eq.s32.totalorder %s24, 1
      %p252 = scmp.ne.s32.totalorder %s247, %s249
      %p253 = scmp.eq.s32.totalorder %s24, 0
      %p254 = por %p252, %p253
      %p255 = scmp.ne.s32.totalorder %s247, %s249
      %p256 = scmp.eq.s32.totalorder %s29, 1
      %p257 = por %p255, %p256
      %p258 = scmp.ne.s32.totalorder %s249, %s250
      %p259 = scmp.eq.s32.totalorder %s29, 0
      %p260 = por %p258, %p259
      %p261 = scmp.ne.s32.totalorder %s249, %s250
      %p262 = scmp.eq.s32.totalorder %s30, 1
      %p263 = por %p261, %p262
      %p265 = scmp.ne.s32.totalorder %s250, %s264
      %p266 = scmp.eq.s32.totalorder %s30, 0
      %p267 = por %p265, %p266
      %s269 = sadd.s32 %s268, 1
      %p272 = scmp.eq.s32.totalorder %s24, 1
      %p273 = scmp.ne.s32.totalorder %s268, %s270
      %p274 = scmp.eq.s32.totalorder %s24, 0
      %p275 = por %p273, %p274
      %p276 = scmp.ne.s32.totalorder %s268, %s270
      %p277 = scmp.eq.s32.totalorder %s29, 1
      %p278 = por %p276, %p277
      %p279 = scmp.ne.s32.totalorder %s270, %s271
      %p280 = scmp.eq.s32.totalorder %s29, 0
      %p281 = por %p279, %p280
      %p282 = scmp.ne.s32.totalorder %s270, %s271
      %p283 = scmp.eq.s32.totalorder %s30, 1
      %p284 = por %p282, %p283
      %p286 = scmp.ne.s32.totalorder %s271, %s285
      %p287 = scmp.eq.s32.totalorder %s30, 0
      %p288 = por %p286, %p287
      %s290 = sadd.s32 %s289, 1
      %p293 = scmp.eq.s32.totalorder %s24, 1
      %p294 = scmp.ne.s32.totalorder %s289, %s291
      %p295 = scmp.eq.s32.totalorder %s24, 0
      %p296 = por %p294, %p295
      %p297 = scmp.ne.s32.totalorder %s289, %s291
      %p298 = scmp.eq.s32.totalorder %s29, 1
      %p299 = por %p297, %p298
      %p300 = scmp.ne.s32.totalorder %s291, %s292
      %p301 = scmp.eq.s32.totalorder %s29, 0
      %p302 = por %p300, %p301
      %p303 = scmp.ne.s32.totalorder %s291, %s292
      %p304 = scmp.eq.s32.totalorder %s30, 1
      %p305 = por %p303, %p304
      %p307 = scmp.ne.s32.totalorder %s292, %s306
      %p308 = scmp.eq.s32.totalorder %s30, 0
      %p309 = por %p307, %p308
      %s311 = sadd.s32 %s310, 1
      %p314 = scmp.eq.s32.totalorder %s24, 1
      %p315 = scmp.ne.s32.totalorder %s310, %s312
      %p316 = scmp.eq.s32.totalorder %s24, 0
      %p317 = por %p315, %p316
      %p318 = scmp.ne.s32.totalorder %s310, %s312
      %p319 = scmp.eq.s32.totalorder %s29, 1
      %p320 = por %p318, %p319
      %p321 = scmp.ne.s32.totalorder %s312, %s313
      %p322 = scmp.eq.s32.totalorder %s29, 0
      %p323 = por %p321, %p322
      %p324 = scmp.ne.s32.totalorder %s312, %s313
      %p325 = scmp.eq.s32.totalorder %s30, 1
      %p326 = por %p324, %p325
      %p328 = scmp.ne.s32.totalorder %s313, %s327
      %p329 = scmp.eq.s32.totalorder %s30, 0
      %p330 = por %p328, %p329
      %s332 = sadd.s32 %s331, 1
      %p335 = scmp.eq.s32.totalorder %s24, 1
      %p336 = scmp.ne.s32.totalorder %s331, %s333
      %p337 = scmp.eq.s32.totalorder %s24, 0
      %p338 = por %p336, %p337
      %p339 = scmp.ne.s32.totalorder %s331, %s333
      %p340 = scmp.eq.s32.totalorder %s29, 1
      %p341 = por %p339, %p340
      %p342 = scmp.ne.s32.totalorder %s333, %s334
      %p343 = scmp.eq.s32.totalorder %s29, 0
      %p344 = por %p342, %p343
      %p345 = scmp.ne.s32.totalorder %s333, %s334
      %p346 = scmp.eq.s32.totalorder %s30, 1
      %p347 = por %p345, %p346
      %p349 = scmp.ne.s32.totalorder %s334, %s348
      %p350 = scmp.eq.s32.totalorder %s30, 0
      %p351 = por %p349, %p350
      %s352 = ssub.s32 %s24, %s31
      %p353 = scmp.eq.s32.totalorder %s352, 0
      %s355 = sadd.s32 %s354, 1
      %s356 = scalar_select %p353, %s354, %s355
      %p359 = pneg %p353
      %p360 = scmp.eq.s32.totalorder %s24, 1
      %p361 = por %p359, %p360
      %p362 = scmp.ne.s32.totalorder %s354, %s357
      %p363 = scmp.eq.s32.totalorder %s24, 0
      %p364 = por %p362, %p363
      %p365 = scmp.ne.s32.totalorder %s354, %s357
      %p366 = scmp.eq.s32.totalorder %s29, 1
      %p367 = por %p365, %p366
      %p368 = scmp.ne.s32.totalorder %s357, %s358
      %p369 = scmp.eq.s32.totalorder %s29, 0
      %p370 = por %p368, %p369
      %p371 = scmp.ne.s32.totalorder %s357, %s358
      %p372 = scmp.eq.s32.totalorder %s30, 1
      %p373 = por %p371, %p372
      %p375 = scmp.ne.s32.totalorder %s358, %s374
      %p376 = scmp.eq.s32.totalorder %s30, 0
      %p377 = por %p375, %p376
      %s378 = ssub.s32 %s24, %s31
      %p379 = scmp.eq.s32.totalorder %s378, 0
      %s381 = sadd.s32 %s380, 1
      %s382 = scalar_select %p379, %s380, %s381
      %p385 = pneg %p379
      %p386 = scmp.eq.s32.totalorder %s24, 1
      %p387 = por %p385, %p386
      %p388 = scmp.ne.s32.totalorder %s380, %s383
      %p389 = scmp.eq.s32.totalorder %s24, 0
      %p390 = por %p388, %p389
      %p391 = scmp.ne.s32.totalorder %s380, %s383
      %p392 = scmp.eq.s32.totalorder %s29, 1
      %p393 = por %p391, %p392
      %p394 = scmp.ne.s32.totalorder %s383, %s384
      %p395 = scmp.eq.s32.totalorder %s29, 0
      %p396 = por %p394, %p395
      %p397 = scmp.ne.s32.totalorder %s383, %s384
      %p398 = scmp.eq.s32.totalorder %s30, 1
      %p399 = por %p397, %p398
      %p401 = scmp.ne.s32.totalorder %s384, %s400
      %p402 = scmp.eq.s32.totalorder %s30, 0
      %p403 = por %p401, %p402
      %p404 = scmp.le.s32.totalorder 1, %s24
      %p405 = scmp.lt.s32.totalorder %s24, 3
      %p406 = pnand %p404, %p405
      %p407 = pneg %p406
      // Predicated region
      $region9: #{_lambda_.1} parent=5 // pred_check
        _
      $region10: #{_lambda_.1} parent=5 // pred_check_branch
        %409 = sbr.rel (%p406) target = $region12
      $region11: #{_lambda_.1} parent=5 // pred_region
        %s410 = ssub.s32 %s24, 1
        // Predicated region
        $region13: #{_lambda_.1} parent=11 // pred_check
          %p411 = pneg %p71
        $region14: #{_lambda_.1} parent=11 // pred_check_branch
          %413 = sbr.rel (%p411) target = $region16
        $region15: #{_lambda_.1} parent=11 // pred_region
          _
        $region16: #{_lambda_.1} parent=11 // pred_fallthru
          _
        // Predicated region
        $region17: #{_lambda_.1} parent=11 // pred_check
          %p414 = pneg %p92
        $region18: #{_lambda_.1} parent=11 // pred_check_branch
          %416 = sbr.rel (%p414) target = $region20
        $region19: #{_lambda_.1} parent=11 // pred_region
          _
        $region20: #{_lambda_.1} parent=11 // pred_fallthru
          _
        // Predicated region
        $region21: #{_lambda_.1} parent=11 // pred_check
          %p417 = pneg %p113
        $region22: #{_lambda_.1} parent=11 // pred_check_branch
          %419 = sbr.rel (%p417) target = $region24
        $region23: #{_lambda_.1} parent=11 // pred_region
          _
        $region24: #{_lambda_.1} parent=11 // pred_fallthru
          _
        // Predicated region
        $region25: #{_lambda_.1} parent=11 // pred_check
          %p420 = pneg %p134
        $region26: #{_lambda_.1} parent=11 // pred_check_branch
          %422 = sbr.rel (%p420) target = $region28
        $region27: #{_lambda_.1} parent=11 // pred_region
          _
        $region28: #{_lambda_.1} parent=11 // pred_fallthru
          _
        // Predicated region
        $region29: #{_lambda_.1} parent=11 // pred_check
          %p423 = pneg %p155
        $region30: #{_lambda_.1} parent=11 // pred_check_branch
          %425 = sbr.rel (%p423) target = $region32
        $region31: #{_lambda_.1} parent=11 // pred_region
          _
        $region32: #{_lambda_.1} parent=11 // pred_fallthru
          _
        // Predicated region
        $region33: #{_lambda_.1} parent=11 // pred_check
          %p426 = pneg %p176
        $region34: #{_lambda_.1} parent=11 // pred_check_branch
          %428 = sbr.rel (%p426) target = $region36
        $region35: #{_lambda_.1} parent=11 // pred_region
          _
        $region36: #{_lambda_.1} parent=11 // pred_fallthru
          _
        // Predicated region
        $region37: #{_lambda_.1} parent=11 // pred_check
          %p429 = pneg %p197
        $region38: #{_lambda_.1} parent=11 // pred_check_branch
          %431 = sbr.rel (%p429) target = $region40
        $region39: #{_lambda_.1} parent=11 // pred_region
          _
        $region40: #{_lambda_.1} parent=11 // pred_fallthru
          _
        // Predicated region
        $region41: #{_lambda_.1} parent=11 // pred_check
          %p432 = pneg %p218
        $region42: #{_lambda_.1} parent=11 // pred_check_branch
          %434 = sbr.rel (%p432) target = $region44
        $region43: #{_lambda_.1} parent=11 // pred_region
          _
        $region44: #{_lambda_.1} parent=11 // pred_fallthru
          _
        // Predicated region
        $region45: #{_lambda_.1} parent=11 // pred_check
          %p435 = pneg %p239
        $region46: #{_lambda_.1} parent=11 // pred_check_branch
          %437 = sbr.rel (%p435) target = $region48
        $region47: #{_lambda_.1} parent=11 // pred_region
          _
        $region48: #{_lambda_.1} parent=11 // pred_fallthru
          _
        // Predicated region
        $region49: #{_lambda_.1} parent=11 // pred_check
          %p438 = pneg %p260
        $region50: #{_lambda_.1} parent=11 // pred_check_branch
          %440 = sbr.rel (%p438) target = $region52
        $region51: #{_lambda_.1} parent=11 // pred_region
          _
        $region52: #{_lambda_.1} parent=11 // pred_fallthru
          _
        // Predicated region
        $region53: #{_lambda_.1} parent=11 // pred_check
          %p441 = pneg %p281
        $region54: #{_lambda_.1} parent=11 // pred_check_branch
          %443 = sbr.rel (%p441) target = $region56
        $region55: #{_lambda_.1} parent=11 // pred_region
          %s445 = ssub.s32 16, 16
          %446 = vsyncadd [#allocation6], %s445
          %s448 = sshll.u32 %s11, 4
          %s449 = int_to_ptr.vmem [resolvable:$true] %s448
          %451 = dma.vmem_to_smem %s449, 16, [#allocation5], [#allocation6]
        $region56: #{_lambda_.1} parent=11 // pred_fallthru
          _
        // Predicated region
        $region57: #{_lambda_.1} parent=11 // pred_check
          %p452 = pneg %p302
        $region58: #{_lambda_.1} parent=11 // pred_check_branch
          %454 = sbr.rel (%p452) target = $region60
        $region59: #{_lambda_.1} parent=11 // pred_region
          _
        $region60: #{_lambda_.1} parent=11 // pred_fallthru
          _
        // Predicated region
        $region61: #{_lambda_.1} parent=11 // pred_check
          %p455 = pneg %p323
        $region62: #{_lambda_.1} parent=11 // pred_check_branch
          %457 = sbr.rel (%p455) target = $region64
        $region63: #{_lambda_.1} parent=11 // pred_region
          _
        $region64: #{_lambda_.1} parent=11 // pred_fallthru
          _
        // Predicated region
        $region65: #{_lambda_.1} parent=11 // pred_check
          %p458 = pneg %p344
        $region66: #{_lambda_.1} parent=11 // pred_check_branch
          %460 = sbr.rel (%p458) target = $region68
        $region67: #{_lambda_.1} parent=11 // pred_region
          _
        $region68: #{_lambda_.1} parent=11 // pred_fallthru
          _
      $region12: #{_lambda_.1} parent=5 // pred_fallthru
        _
      %p461 = scmp.lt.s32.totalorder %s24, 2
      // Predicated region
      $region69: #{_lambda_.1} parent=5 // pred_check
        %p462 = pneg %p461
      $region70: #{_lambda_.1} parent=5 // pred_check_branch
        %464 = sbr.rel (%p462) target = $region72
      $region71: #{_lambda_.1} parent=5 // pred_region
        // Predicated region
        $region73: #{_lambda_.1} parent=71 // pred_check
          %p465 = pneg %p44
        $region74: #{_lambda_.1} parent=71 // pred_check_branch
          %467 = sbr.rel (%p465) target = $region76
        $region75: #{_lambda_.1} parent=71 // pred_region
          %p468 = scmp.lt.s32.totalorder %s24, 1
          %s469 = scalar_select %p468, %s24, 1
          %s470 = smul.addr %s469, 3
          %s471 = smul.addr %s470, 2
          %s472 = scalar_lea.vmem %s0, %s471
        $region76: #{_lambda_.1} parent=71 // pred_fallthru
          _
      $region72: #{_lambda_.1} parent=5 // pred_fallthru
        _
      %p473 = scmp.le.s32.totalorder 1, %s24
      %p474 = scmp.lt.s32.totalorder %s24, 3
      %p475 = pnand %p473, %p474
      %p476 = pneg %p475
      // Predicated region
      $region77: #{_lambda_.1} parent=5 // pred_check
        _
      $region78: #{_lambda_.1} parent=5 // pred_check_branch
        %478 = sbr.rel (%p475) target = $region80
      $region79: #{_lambda_.1} parent=5 // pred_region
        %s479 = ssub.s32 %s24, 1
        // Predicated region
        $region81: #{_lambda_.1} parent=79 // pred_check
          %p480 = pneg %p281
        $region82: #{_lambda_.1} parent=79 // pred_check_branch
          %482 = sbr.rel (%p480) target = $region84
        $region83: #{_lambda_.1} parent=79 // pred_region
          %483 = dma.done [#allocation6], 16
        $region84: #{_lambda_.1} parent=79 // pred_fallthru
          _
        %484 = sfence
        %p485 = scmp.lt.s32.totalorder %s29, 1
        %s486 = scalar_select %p485, %s29, 1
        %s487 = smul.addr %s486, 3
        %s488 = smul.addr %s487, 2
        %s489 = scalar_lea.vmem %s0, %s488
        %p490 = pneg %p50
        %p491 = pneg %p47
        %p492 = pneg %p71
        %p493 = pneg %p68
        %p494 = pneg %p92
        %p495 = pneg %p89
        %p496 = pneg %p113
        %p497 = pneg %p110
        %p498 = pneg %p134
        %p499 = pneg %p131
        %p500 = pneg %p155
        %p501 = pneg %p152
        %p502 = pneg %p176
        %p503 = pneg %p173
        %p504 = pneg %p197
        %p505 = pneg %p194
        %p506 = pneg %p218
        %p507 = pneg %p215
        %p508 = pneg %p239
        %p509 = pneg %p236
        %p510 = pneg %p260
        %p511 = pneg %p257
        %p512 = pneg %p281
        %p513 = pneg %p278
        %p514 = pneg %p302
        %p515 = pneg %p299
        %p516 = pneg %p323
        %p517 = pneg %p320
        %p518 = pneg %p344
        %p519 = pneg %p341
        %p520 = pneg %p370
        %p521 = pneg %p367
        %p522 = scmp.lt.s32.totalorder %s29, 1
        %s523 = scalar_select %p522, %s29, 1
        %s524 = smul.addr %s523, 8
        %s525 = scalar_lea.vmem %s15, %s524
        %p526 = pneg %p396
        %p527 = pneg %p393
        %p528 = scmp.lt.s32.totalorder %s29, 1
        %s529 = scalar_select %p528, %s29, 1
        %s530 = smul.addr %s529, 2
        %s531 = smul.addr %s530, 8
        %s532 = scalar_lea.vmem %s16, %s531
        %p533 = scmp.lt.s32.totalorder %s29, 1
        %s534 = scalar_select %p533, %s29, 1
        %s535 = smul.addr %s534, 3
        %s536 = smul.addr %s535, 2
        %s537 = scalar_lea.vmem %s0, %s536
        %p538 = scmp.lt.s32.totalorder %s29, 1
        %s539 = scalar_select %p538, %s29, 1
        %s540 = smul.addr %s539, 8
        %s541 = scalar_lea.vmem %s15, %s540
        %p542 = scmp.lt.s32.totalorder %s29, 1
        %s543 = scalar_select %p542, %s29, 1
        %s544 = smul.addr %s543, 2
        %s545 = smul.addr %s544, 8
        %s546 = scalar_lea.vmem %s16, %s545
        %v548 = vld [vmem:[%s12] sm:$0x7]
        %v549 = vld [vmem:[%s1] sm:$0xf]
        %v550 = vld [vmem:[%s537] sm:$0x3f]
        %s551 = scalar_lea.vmem %s1, 4
        %v552 = vld [vmem:[%s551] sm:$0xf]
        %v554 = vcombine.high %v550, %v550
        %v556 = vunpack.c.l.s4 1983009808
        %v557 = vunpack.c.0.s8 %v556
        %v558 = vlaneseq
        %v559 = vshrl.u32 %v558, 7
        %v560 = vsub.s32 %v557, %v559
        %v561 = vrot.slane %v550, %v560
        %v563 = vunpack.c.l.s4 1983009808
        %v564 = vunpack.c.0.s8 %v563
        %v565 = vlaneseq
        %v566 = vshrl.u32 %v565, 7
        %v567 = vsub.s32 %v564, %v566
        %v568 = vrot.slane %v554, %v567
        %v569 = vcombine.high %v561, %v561
        %570 = vrot.lane.b32.xlu0 %v561, 127
        %v571 = vpop.permute.xlu0 %570
        %572 = vrot.lane.b32.xlu0 %v569, 127
        %v573 = vpop.permute.xlu0 %572
        %574 = vrot.lane.b32.xlu0 %v568, 127
        %v575 = vpop.permute.xlu0 %574
        %vm576 = vcmask 1039360
        %v577 = vsel %vm576, %v571, %v573
        %v578 = vsel %vm576, %v573, %v575
        %vm579 = vcmask 31744
        %v581 = vsel %vm579, %v552, 0
        %vm583 = vcmask 1041408
        %v585 = vsel %vm583, %v577, 0
        %v588 = vsel %vm583, %v578, 0
        %v591 = vsel %vm583, %v575, 0
        %593 = vmatprep.subr.bf16.mxu0 0
        %594 = vmatpush1.bf16.msra.mxu0 0
        %595 = vmatprep.subr.bf16.mxu0 0
        %596 = vmatpush1.bf16.msra.mxu0 0
        %597 = vmatprep.subr.bf16.mxu0 0
        %598 = vmatpush1.bf16.msra.mxu0 0
        %599 = vmatprep.subr.bf16.mxu0 0
        %600 = vmatpush1.bf16.msra.mxu0 0
        %601 = vmatprep.subr.bf16.mxu0 0
        %602 = vmatpush1.bf16.msra.mxu0 0
        %603 = vmatprep.subr.bf16.mxu0 0
        %604 = vmatpush1.bf16.msra.mxu0 0
        %605 = vmatprep.subr.bf16.mxu0 0
        %606 = vmatpush1.bf16.msra.mxu0 0
        %607 = vmatprep.subr.bf16.mxu0 %v588
        %608 = vmatpush1.bf16.msra.mxu0 %v585
        %609 = vmatprep.subr.bf16.mxu0 0
        %610 = vmatpush2.bf16.msra.mxu0 0
        %611 = vmatprep.subr.bf16.mxu0 0
        %612 = vmatpush2.bf16.msra.mxu0 0
        %613 = vmatprep.subr.bf16.mxu0 0
        %614 = vmatpush2.bf16.msra.mxu0 0
        %615 = vmatprep.subr.bf16.mxu0 0
        %616 = vmatpush2.bf16.msra.mxu0 0
        %617 = vmatprep.subr.bf16.mxu0 0
        %618 = vmatpush2.bf16.msra.mxu0 0
        %619 = vmatprep.subr.bf16.mxu0 0
        %620 = vmatpush2.bf16.msra.mxu0 0
        %621 = vmatprep.subr.bf16.mxu0 0
        %622 = vmatpush2.bf16.msra.mxu0 0
        %623 = vmatprep.subr.bf16.mxu0 0
        %624 = vmatpush2.bf16.msra.mxu0 0
        %625 = vmatprep.mubr.bf16.mxu0 0
        %626 = vmatmul.mubr.bf16.gmra.mxu0 %v581
        %v627 = vpop.f32.mrf.mxu0
        %v628 = vadd.f32 0.0, %v627
        %v629 = vpop.f32.mrf.mxu0
        %v630 = vadd.f32 0.0, %v629
        %v631 = vpop.f32.mrf.mxu0
        %v632 = vpop.f32.mrf.mxu0
        %633 = vdwg.mxu0
        %634 = vmatprep.subr.bf16.mxu0 0
        %635 = vmatpush1.bf16.msra.mxu0 0
        %636 = vmatprep.subr.bf16.mxu0 0
        %637 = vmatpush1.bf16.msra.mxu0 0
        %638 = vmatprep.subr.bf16.mxu0 0
        %639 = vmatpush1.bf16.msra.mxu0 0
        %640 = vmatprep.subr.bf16.mxu0 0
        %641 = vmatpush1.bf16.msra.mxu0 0
        %642 = vmatprep.subr.bf16.mxu0 0
        %643 = vmatpush1.bf16.msra.mxu0 0
        %644 = vmatprep.subr.bf16.mxu0 0
        %645 = vmatpush1.bf16.msra.mxu0 0
        %646 = vmatprep.subr.bf16.mxu0 0
        %647 = vmatpush1.bf16.msra.mxu0 0
        %648 = vmatprep.subr.bf16.mxu0 0
        %649 = vmatpush1.bf16.msra.mxu0 %v591
        %650 = vmatprep.subr.bf16.mxu0 0
        %651 = vmatpush2.bf16.msra.mxu0 0
        %652 = vmatprep.subr.bf16.mxu0 0
        %653 = vmatpush2.bf16.msra.mxu0 0
        %654 = vmatprep.subr.bf16.mxu0 0
        %655 = vmatpush2.bf16.msra.mxu0 0
        %656 = vmatprep.subr.bf16.mxu0 0
        %657 = vmatpush2.bf16.msra.mxu0 0
        %658 = vmatprep.subr.bf16.mxu0 0
        %659 = vmatpush2.bf16.msra.mxu0 0
        %660 = vmatprep.subr.bf16.mxu0 0
        %661 = vmatpush2.bf16.msra.mxu0 0
        %662 = vmatprep.subr.bf16.mxu0 0
        %663 = vmatpush2.bf16.msra.mxu0 0
        %664 = vmatprep.subr.bf16.mxu0 0
        %665 = vmatpush2.bf16.msra.mxu0 0
        %666 = vmatprep.mubr.bf16.mxu0 0
        %667 = vmatmul.mubr.bf16.gmra.mxu0 %v581
        %v668 = vpop.f32.mrf.mxu0
        %v669 = vadd.f32 0.0, %v668
        %v670 = vpop.f32.mrf.mxu0
        %v671 = vpop.f32.mrf.mxu0
        %v672 = vpop.f32.mrf.mxu0
        %673 = vdwg.mxu0
        %v675 = vsel %vm579, %v549, 0
        %v678 = vsel %vm583, %v561, 0
        %v681 = vsel %vm583, %v569, 0
        %v684 = vsel %vm583, %v568, 0
        %686 = vmatprep.subr.bf16.mxu0 0
        %687 = vmatpush1.bf16.msra.mxu0 0
        %688 = vmatprep.subr.bf16.mxu0 0
        %689 = vmatpush1.bf16.msra.mxu0 0
        %690 = vmatprep.subr.bf16.mxu0 0
        %691 = vmatpush1.bf16.msra.mxu0 0
        %692 = vmatprep.subr.bf16.mxu0 0
        %693 = vmatpush1.bf16.msra.mxu0 0
        %694 = vmatprep.subr.bf16.mxu0 0
        %695 = vmatpush1.bf16.msra.mxu0 0
        %696 = vmatprep.subr.bf16.mxu0 0
        %697 = vmatpush1.bf16.msra.mxu0 0
        %698 = vmatprep.subr.bf16.mxu0 0
        %699 = vmatpush1.bf16.msra.mxu0 0
        %700 = vmatprep.subr.bf16.mxu0 %v681
        %701 = vmatpush1.bf16.msra.mxu0 %v678
        %702 = vmatprep.subr.bf16.mxu0 0
        %703 = vmatpush2.bf16.msra.mxu0 0
        %704 = vmatprep.subr.bf16.mxu0 0
        %705 = vmatpush2.bf16.msra.mxu0 0
        %706 = vmatprep.subr.bf16.mxu0 0
        %707 = vmatpush2.bf16.msra.mxu0 0
        %708 = vmatprep.subr.bf16.mxu0 0
        %709 = vmatpush2.bf16.msra.mxu0 0
        %710 = vmatprep.subr.bf16.mxu0 0
        %711 = vmatpush2.bf16.msra.mxu0 0
        %712 = vmatprep.subr.bf16.mxu0 0
        %713 = vmatpush2.bf16.msra.mxu0 0
        %714 = vmatprep.subr.bf16.mxu0 0
        %715 = vmatpush2.bf16.msra.mxu0 0
        %716 = vmatprep.subr.bf16.mxu0 0
        %717 = vmatpush2.bf16.msra.mxu0 0
        %718 = vmatprep.mubr.bf16.mxu0 0
        %719 = vmatmul.mubr.bf16.gmra.mxu0 %v675
        %v720 = vpop.f32.mrf.mxu0
        %v721 = vadd.f32 %v628, %v720
        %v722 = vpop.f32.mrf.mxu0
        %v723 = vadd.f32 %v630, %v722
        %v724 = vpop.f32.mrf.mxu0
        %v725 = vpop.f32.mrf.mxu0
        %726 = vdwg.mxu0
        %727 = vmatprep.subr.bf16.mxu0 0
        %728 = vmatpush1.bf16.msra.mxu0 0
        %729 = vmatprep.subr.bf16.mxu0 0
        %730 = vmatpush1.bf16.msra.mxu0 0
        %731 = vmatprep.subr.bf16.mxu0 0
        %732 = vmatpush1.bf16.msra.mxu0 0
        %733 = vmatprep.subr.bf16.mxu0 0
        %734 = vmatpush1.bf16.msra.mxu0 0
        %735 = vmatprep.subr.bf16.mxu0 0
        %736 = vmatpush1.bf16.msra.mxu0 0
        %737 = vmatprep.subr.bf16.mxu0 0
        %738 = vmatpush1.bf16.msra.mxu0 0
        %739 = vmatprep.subr.bf16.mxu0 0
        %740 = vmatpush1.bf16.msra.mxu0 0
        %741 = vmatprep.subr.bf16.mxu0 0
        %742 = vmatpush1.bf16.msra.mxu0 %v684
        %743 = vmatprep.subr.bf16.mxu0 0
        %744 = vmatpush2.bf16.msra.mxu0 0
        %745 = vmatprep.subr.bf16.mxu0 0
        %746 = vmatpush2.bf16.msra.mxu0 0
        %747 = vmatprep.subr.bf16.mxu0 0
        %748 = vmatpush2.bf16.msra.mxu0 0
        %749 = vmatprep.subr.bf16.mxu0 0
        %750 = vmatpush2.bf16.msra.mxu0 0
        %751 = vmatprep.subr.bf16.mxu0 0
        %752 = vmatpush2.bf16.msra.mxu0 0
        %753 = vmatprep.subr.bf16.mxu0 0
        %754 = vmatpush2.bf16.msra.mxu0 0
        %755 = vmatprep.subr.bf16.mxu0 0
        %756 = vmatpush2.bf16.msra.mxu0 0
        %757 = vmatprep.subr.bf16.mxu0 0
        %758 = vmatpush2.bf16.msra.mxu0 0
        %759 = vmatprep.mubr.bf16.mxu0 0
        %760 = vmatmul.mubr.bf16.gmra.mxu0 %v675
        %v761 = vpop.f32.mrf.mxu0
        %v762 = vadd.f32 %v669, %v761
        %v763 = vpop.f32.mrf.mxu0
        %v764 = vpop.f32.mrf.mxu0
        %v765 = vpop.f32.mrf.mxu0
        %766 = vdwg.mxu0
        %s767 = scalar_lea.vmem %s1, 8
        %v768 = vld [vmem:[%s767] sm:$0xf]
        %v769 = vld [vmem:[%s537] sm:$0x3f]
        %v771 = vcombine.high %v769, %v769
        %v773 = vunpack.c.l.s4 1983009808
        %v774 = vunpack.c.0.s8 %v773
        %v775 = vlaneseq
        %v776 = vshrl.u32 %v775, 7
        %v777 = vsub.s32 %v774, %v776
        %v778 = vrot.slane %v769, %v777
        %v780 = vunpack.c.l.s4 1983009808
        %v781 = vunpack.c.0.s8 %v780
        %v782 = vlaneseq
        %v783 = vshrl.u32 %v782, 7
        %v784 = vsub.s32 %v781, %v783
        %v785 = vrot.slane %v771, %v784
        %v786 = vcombine.high %v778, %v778
        %787 = vrot.lane.b32.xlu0 %v778, 126
        %v788 = vpop.permute.xlu0 %787
        %789 = vrot.lane.b32.xlu0 %v786, 126
        %v790 = vpop.permute.xlu0 %789
        %791 = vrot.lane.b32.xlu0 %v785, 126
        %v792 = vpop.permute.xlu0 %791
        %vm793 = vcmask 1031168
        %v794 = vsel %vm793, %v788, %v790
        %v795 = vsel %vm793, %v790, %v792
        %v797 = vsel %vm579, %v768, 0
        %v800 = vsel %vm583, %v794, 0
        %v803 = vsel %vm583, %v795, 0
        %v806 = vsel %vm583, %v792, 0
        %808 = vmatprep.subr.bf16.mxu0 0
        %809 = vmatpush1.bf16.msra.mxu0 0
        %810 = vmatprep.subr.bf16.mxu0 0
        %811 = vmatpush1.bf16.msra.mxu0 0
        %812 = vmatprep.subr.bf16.mxu0 0
        %813 = vmatpush1.bf16.msra.mxu0 0
        %814 = vmatprep.subr.bf16.mxu0 0
        %815 = vmatpush1.bf16.msra.mxu0 0
        %816 = vmatprep.subr.bf16.mxu0 0
        %817 = vmatpush1.bf16.msra.mxu0 0
        %818 = vmatprep.subr.bf16.mxu0 0
        %819 = vmatpush1.bf16.msra.mxu0 0
        %820 = vmatprep.subr.bf16.mxu0 0
        %821 = vmatpush1.bf16.msra.mxu0 0
        %822 = vmatprep.subr.bf16.mxu0 %v803
        %823 = vmatpush1.bf16.msra.mxu0 %v800
        %824 = vmatprep.subr.bf16.mxu0 0
        %825 = vmatpush2.bf16.msra.mxu0 0
        %826 = vmatprep.subr.bf16.mxu0 0
        %827 = vmatpush2.bf16.msra.mxu0 0
        %828 = vmatprep.subr.bf16.mxu0 0
        %829 = vmatpush2.bf16.msra.mxu0 0
        %830 = vmatprep.subr.bf16.mxu0 0
        %831 = vmatpush2.bf16.msra.mxu0 0
        %832 = vmatprep.subr.bf16.mxu0 0
        %833 = vmatpush2.bf16.msra.mxu0 0
        %834 = vmatprep.subr.bf16.mxu0 0
        %835 = vmatpush2.bf16.msra.mxu0 0
        %836 = vmatprep.subr.bf16.mxu0 0
        %837 = vmatpush2.bf16.msra.mxu0 0
        %838 = vmatprep.subr.bf16.mxu0 0
        %839 = vmatpush2.bf16.msra.mxu0 0
        %840 = vmatprep.mubr.bf16.mxu0 0
        %841 = vmatmul.mubr.bf16.gmra.mxu0 %v797
        %v842 = vpop.f32.mrf.mxu0
        %v843 = vadd.f32 0.0, %v842
        %v844 = vpop.f32.mrf.mxu0
        %v845 = vadd.f32 0.0, %v844
        %v846 = vpop.f32.mrf.mxu0
        %v847 = vpop.f32.mrf.mxu0
        %848 = vdwg.mxu0
        %849 = vmatprep.subr.bf16.mxu0 0
        %850 = vmatpush1.bf16.msra.mxu0 0
        %851 = vmatprep.subr.bf16.mxu0 0
        %852 = vmatpush1.bf16.msra.mxu0 0
        %853 = vmatprep.subr.bf16.mxu0 0
        %854 = vmatpush1.bf16.msra.mxu0 0
        %855 = vmatprep.subr.bf16.mxu0 0
        %856 = vmatpush1.bf16.msra.mxu0 0
        %857 = vmatprep.subr.bf16.mxu0 0
        %858 = vmatpush1.bf16.msra.mxu0 0
        %859 = vmatprep.subr.bf16.mxu0 0
        %860 = vmatpush1.bf16.msra.mxu0 0
        %861 = vmatprep.subr.bf16.mxu0 0
        %862 = vmatpush1.bf16.msra.mxu0 0
        %863 = vmatprep.subr.bf16.mxu0 0
        %864 = vmatpush1.bf16.msra.mxu0 %v806
        %865 = vmatprep.subr.bf16.mxu0 0
        %866 = vmatpush2.bf16.msra.mxu0 0
        %867 = vmatprep.subr.bf16.mxu0 0
        %868 = vmatpush2.bf16.msra.mxu0 0
        %869 = vmatprep.subr.bf16.mxu0 0
        %870 = vmatpush2.bf16.msra.mxu0 0
        %871 = vmatprep.subr.bf16.mxu0 0
        %872 = vmatpush2.bf16.msra.mxu0 0
        %873 = vmatprep.subr.bf16.mxu0 0
        %874 = vmatpush2.bf16.msra.mxu0 0
        %875 = vmatprep.subr.bf16.mxu0 0
        %876 = vmatpush2.bf16.msra.mxu0 0
        %877 = vmatprep.subr.bf16.mxu0 0
        %878 = vmatpush2.bf16.msra.mxu0 0
        %879 = vmatprep.subr.bf16.mxu0 0
        %880 = vmatpush2.bf16.msra.mxu0 0
        %881 = vmatprep.mubr.bf16.mxu0 0
        %882 = vmatmul.mubr.bf16.gmra.mxu0 %v797
        %v883 = vpop.f32.mrf.mxu0
        %v884 = vadd.f32 0.0, %v883
        %v885 = vpop.f32.mrf.mxu0
        %v886 = vpop.f32.mrf.mxu0
        %v887 = vpop.f32.mrf.mxu0
        %888 = vdwg.mxu0
        %v889 = vadd.f32 %v721, %v843
        %v890 = vadd.f32 %v723, %v845
        %v891 = vadd.f32 %v762, %v884
        %s892 = scalar_lea.vmem %s1, 12
        %v893 = vld [vmem:[%s892] sm:$0xf]
        %v894 = vld [vmem:[%s537] sm:$0x3f]
        %v896 = vcombine.high %v894, %v894
        %v898 = vunpack.c.l.s4 1983009808
        %v899 = vunpack.c.0.s8 %v898
        %v900 = vlaneseq
        %v901 = vshrl.u32 %v900, 7
        %v902 = vsub.s32 %v899, %v901
        %v903 = vrot.slane %v894, %v902
        %v905 = vunpack.c.l.s4 1983009808
        %v906 = vunpack.c.0.s8 %v905
        %v907 = vlaneseq
        %v908 = vshrl.u32 %v907, 7
        %v909 = vsub.s32 %v906, %v908
        %v910 = vrot.slane %v896, %v909
        %v911 = vcombine.high %v903, %v903
        %912 = vrot.lane.b32.xlu0 %v903, 110
        %v913 = vpop.permute.xlu0 %912
        %914 = vrot.lane.b32.xlu0 %v911, 110
        %v915 = vpop.permute.xlu0 %914
        %916 = vrot.lane.b32.xlu0 %v910, 110
        %v917 = vpop.permute.xlu0 %916
        %vm918 = vcmask 900096
        %v919 = vsel %vm918, %v913, %v915
        %v920 = vsel %vm918, %v915, %v917
        %v922 = vsel %vm579, %v893, 0
        %v925 = vsel %vm583, %v919, 0
        %v928 = vsel %vm583, %v920, 0
        %v931 = vsel %vm583, %v917, 0
        %933 = vmatprep.subr.bf16.mxu0 0
        %934 = vmatpush1.bf16.msra.mxu0 0
        %935 = vmatprep.subr.bf16.mxu0 0
        %936 = vmatpush1.bf16.msra.mxu0 0
        %937 = vmatprep.subr.bf16.mxu0 0
        %938 = vmatpush1.bf16.msra.mxu0 0
        %939 = vmatprep.subr.bf16.mxu0 0
        %940 = vmatpush1.bf16.msra.mxu0 0
        %941 = vmatprep.subr.bf16.mxu0 0
        %942 = vmatpush1.bf16.msra.mxu0 0
        %943 = vmatprep.subr.bf16.mxu0 0
        %944 = vmatpush1.bf16.msra.mxu0 0
        %945 = vmatprep.subr.bf16.mxu0 0
        %946 = vmatpush1.bf16.msra.mxu0 0
        %947 = vmatprep.subr.bf16.mxu0 %v928
        %948 = vmatpush1.bf16.msra.mxu0 %v925
        %949 = vmatprep.subr.bf16.mxu0 0
        %950 = vmatpush2.bf16.msra.mxu0 0
        %951 = vmatprep.subr.bf16.mxu0 0
        %952 = vmatpush2.bf16.msra.mxu0 0
        %953 = vmatprep.subr.bf16.mxu0 0
        %954 = vmatpush2.bf16.msra.mxu0 0
        %955 = vmatprep.subr.bf16.mxu0 0
        %956 = vmatpush2.bf16.msra.mxu0 0
        %957 = vmatprep.subr.bf16.mxu0 0
        %958 = vmatpush2.bf16.msra.mxu0 0
        %959 = vmatprep.subr.bf16.mxu0 0
        %960 = vmatpush2.bf16.msra.mxu0 0
        %961 = vmatprep.subr.bf16.mxu0 0
        %962 = vmatpush2.bf16.msra.mxu0 0
        %963 = vmatprep.subr.bf16.mxu0 0
        %964 = vmatpush2.bf16.msra.mxu0 0
        %965 = vmatprep.mubr.bf16.mxu0 0
        %966 = vmatmul.mubr.bf16.gmra.mxu0 %v922
        %v967 = vpop.f32.mrf.mxu0
        %v968 = vadd.f32 0.0, %v967
        %v969 = vpop.f32.mrf.mxu0
        %v970 = vadd.f32 0.0, %v969
        %v971 = vpop.f32.mrf.mxu0
        %v972 = vpop.f32.mrf.mxu0
        %973 = vdwg.mxu0
        %974 = vmatprep.subr.bf16.mxu0 0
        %975 = vmatpush1.bf16.msra.mxu0 0
        %976 = vmatprep.subr.bf16.mxu0 0
        %977 = vmatpush1.bf16.msra.mxu0 0
        %978 = vmatprep.subr.bf16.mxu0 0
        %979 = vmatpush1.bf16.msra.mxu0 0
        %980 = vmatprep.subr.bf16.mxu0 0
        %981 = vmatpush1.bf16.msra.mxu0 0
        %982 = vmatprep.subr.bf16.mxu0 0
        %983 = vmatpush1.bf16.msra.mxu0 0
        %984 = vmatprep.subr.bf16.mxu0 0
        %985 = vmatpush1.bf16.msra.mxu0 0
        %986 = vmatprep.subr.bf16.mxu0 0
        %987 = vmatpush1.bf16.msra.mxu0 0
        %988 = vmatprep.subr.bf16.mxu0 0
        %989 = vmatpush1.bf16.msra.mxu0 %v931
        %990 = vmatprep.subr.bf16.mxu0 0
        %991 = vmatpush2.bf16.msra.mxu0 0
        %992 = vmatprep.subr.bf16.mxu0 0
        %993 = vmatpush2.bf16.msra.mxu0 0
        %994 = vmatprep.subr.bf16.mxu0 0
        %995 = vmatpush2.bf16.msra.mxu0 0
        %996 = vmatprep.subr.bf16.mxu0 0
        %997 = vmatpush2.bf16.msra.mxu0 0
        %998 = vmatprep.subr.bf16.mxu0 0
        %999 = vmatpush2.bf16.msra.mxu0 0
        %1000 = vmatprep.subr.bf16.mxu0 0
        %1001 = vmatpush2.bf16.msra.mxu0 0
        %1002 = vmatprep.subr.bf16.mxu0 0
        %1003 = vmatpush2.bf16.msra.mxu0 0
        %1004 = vmatprep.subr.bf16.mxu0 0
        %1005 = vmatpush2.bf16.msra.mxu0 0
        %1006 = vmatprep.mubr.bf16.mxu0 0
        %1007 = vmatmul.mubr.bf16.gmra.mxu0 %v922
        %v1008 = vpop.f32.mrf.mxu0
        %v1009 = vadd.f32 0.0, %v1008
        %v1010 = vpop.f32.mrf.mxu0
        %v1011 = vpop.f32.mrf.mxu0
        %v1012 = vpop.f32.mrf.mxu0
        %1013 = vdwg.mxu0
        %v1014 = vadd.f32 %v889, %v968
        %v1015 = vadd.f32 %v890, %v970
        %v1016 = vadd.f32 %v891, %v1009
        %s1017 = scalar_lea.vmem %s1, 16
        %v1018 = vld [vmem:[%s1017] sm:$0xf]
        %v1019 = vld [vmem:[%s537] sm:$0x3f]
        %v1021 = vcombine.high %v1019, %v1019
        %v1023 = vunpack.c.l.s4 1983009808
        %v1024 = vunpack.c.0.s8 %v1023
        %v1025 = vlaneseq
        %v1026 = vshrl.u32 %v1025, 7
        %v1027 = vsub.s32 %v1024, %v1026
        %v1028 = vrot.slane %v1019, %v1027
        %v1030 = vunpack.c.l.s4 1983009808
        %v1031 = vunpack.c.0.s8 %v1030
        %v1032 = vlaneseq
        %v1033 = vshrl.u32 %v1032, 7
        %v1034 = vsub.s32 %v1031, %v1033
        %v1035 = vrot.slane %v1021, %v1034
        %v1036 = vcombine.high %v1028, %v1028
        %1037 = vrot.lane.b32.xlu0 %v1028, 109
        %v1038 = vpop.permute.xlu0 %1037
        %1039 = vrot.lane.b32.xlu0 %v1036, 109
        %v1040 = vpop.permute.xlu0 %1039
        %1041 = vrot.lane.b32.xlu0 %v1035, 109
        %v1042 = vpop.permute.xlu0 %1041
        %vm1043 = vcmask 891904
        %v1044 = vsel %vm1043, %v1038, %v1040
        %v1045 = vsel %vm1043, %v1040, %v1042
        %v1047 = vsel %vm579, %v1018, 0
        %v1050 = vsel %vm583, %v1044, 0
        %v1053 = vsel %vm583, %v1045, 0
        %v1056 = vsel %vm583, %v1042, 0
        %1058 = vmatprep.subr.bf16.mxu0 0
        %1059 = vmatpush1.bf16.msra.mxu0 0
        %1060 = vmatprep.subr.bf16.mxu0 0
        %1061 = vmatpush1.bf16.msra.mxu0 0
        %1062 = vmatprep.subr.bf16.mxu0 0
        %1063 = vmatpush1.bf16.msra.mxu0 0
        %1064 = vmatprep.subr.bf16.mxu0 0
        %1065 = vmatpush1.bf16.msra.mxu0 0
        %1066 = vmatprep.subr.bf16.mxu0 0
        %1067 = vmatpush1.bf16.msra.mxu0 0
        %1068 = vmatprep.subr.bf16.mxu0 0
        %1069 = vmatpush1.bf16.msra.mxu0 0
        %1070 = vmatprep.subr.bf16.mxu0 0
        %1071 = vmatpush1.bf16.msra.mxu0 0
        %1072 = vmatprep.subr.bf16.mxu0 %v1053
        %1073 = vmatpush1.bf16.msra.mxu0 %v1050
        %1074 = vmatprep.subr.bf16.mxu0 0
        %1075 = vmatpush2.bf16.msra.mxu0 0
        %1076 = vmatprep.subr.bf16.mxu0 0
        %1077 = vmatpush2.bf16.msra.mxu0 0
        %1078 = vmatprep.subr.bf16.mxu0 0
        %1079 = vmatpush2.bf16.msra.mxu0 0
        %1080 = vmatprep.subr.bf16.mxu0 0
        %1081 = vmatpush2.bf16.msra.mxu0 0
        %1082 = vmatprep.subr.bf16.mxu0 0
        %1083 = vmatpush2.bf16.msra.mxu0 0
        %1084 = vmatprep.subr.bf16.mxu0 0
        %1085 = vmatpush2.bf16.msra.mxu0 0
        %1086 = vmatprep.subr.bf16.mxu0 0
        %1087 = vmatpush2.bf16.msra.mxu0 0
        %1088 = vmatprep.subr.bf16.mxu0 0
        %1089 = vmatpush2.bf16.msra.mxu0 0
        %1090 = vmatprep.mubr.bf16.mxu0 0
        %1091 = vmatmul.mubr.bf16.gmra.mxu0 %v1047
        %v1092 = vpop.f32.mrf.mxu0
        %v1093 = vadd.f32 0.0, %v1092
        %v1094 = vpop.f32.mrf.mxu0
        %v1095 = vadd.f32 0.0, %v1094
        %v1096 = vpop.f32.mrf.mxu0
        %v1097 = vpop.f32.mrf.mxu0
        %1098 = vdwg.mxu0
        %1099 = vmatprep.subr.bf16.mxu0 0
        %1100 = vmatpush1.bf16.msra.mxu0 0
        %1101 = vmatprep.subr.bf16.mxu0 0
        %1102 = vmatpush1.bf16.msra.mxu0 0
        %1103 = vmatprep.subr.bf16.mxu0 0
        %1104 = vmatpush1.bf16.msra.mxu0 0
        %1105 = vmatprep.subr.bf16.mxu0 0
        %1106 = vmatpush1.bf16.msra.mxu0 0
        %1107 = vmatprep.subr.bf16.mxu0 0
        %1108 = vmatpush1.bf16.msra.mxu0 0
        %1109 = vmatprep.subr.bf16.mxu0 0
        %1110 = vmatpush1.bf16.msra.mxu0 0
        %1111 = vmatprep.subr.bf16.mxu0 0
        %1112 = vmatpush1.bf16.msra.mxu0 0
        %1113 = vmatprep.subr.bf16.mxu0 0
        %1114 = vmatpush1.bf16.msra.mxu0 %v1056
        %1115 = vmatprep.subr.bf16.mxu0 0
        %1116 = vmatpush2.bf16.msra.mxu0 0
        %1117 = vmatprep.subr.bf16.mxu0 0
        %1118 = vmatpush2.bf16.msra.mxu0 0
        %1119 = vmatprep.subr.bf16.mxu0 0
        %1120 = vmatpush2.bf16.msra.mxu0 0
        %1121 = vmatprep.subr.bf16.mxu0 0
        %1122 = vmatpush2.bf16.msra.mxu0 0
        %1123 = vmatprep.subr.bf16.mxu0 0
        %1124 = vmatpush2.bf16.msra.mxu0 0
        %1125 = vmatprep.subr.bf16.mxu0 0
        %1126 = vmatpush2.bf16.msra.mxu0 0
        %1127 = vmatprep.subr.bf16.mxu0 0
        %1128 = vmatpush2.bf16.msra.mxu0 0
        %1129 = vmatprep.subr.bf16.mxu0 0
        %1130 = vmatpush2.bf16.msra.mxu0 0
        %1131 = vmatprep.mubr.bf16.mxu0 0
        %1132 = vmatmul.mubr.bf16.gmra.mxu0 %v1047
        %v1133 = vpop.f32.mrf.mxu0
        %v1134 = vadd.f32 0.0, %v1133
        %v1135 = vpop.f32.mrf.mxu0
        %v1136 = vpop.f32.mrf.mxu0
        %v1137 = vpop.f32.mrf.mxu0
        %1138 = vdwg.mxu0
        %v1139 = vadd.f32 %v1014, %v1093
        %v1140 = vadd.f32 %v1015, %v1095
        %v1141 = vadd.f32 %v1016, %v1134
        %s1142 = scalar_lea.vmem %s1, 20
        %v1143 = vld [vmem:[%s1142] sm:$0xf]
        %v1144 = vld [vmem:[%s537] sm:$0x3f]
        %v1146 = vcombine.high %v1144, %v1144
        %v1148 = vunpack.c.l.s4 1983009808
        %v1149 = vunpack.c.0.s8 %v1148
        %v1150 = vlaneseq
        %v1151 = vshrl.u32 %v1150, 7
        %v1152 = vsub.s32 %v1149, %v1151
        %v1153 = vrot.slane %v1144, %v1152
        %v1155 = vunpack.c.l.s4 1983009808
        %v1156 = vunpack.c.0.s8 %v1155
        %v1157 = vlaneseq
        %v1158 = vshrl.u32 %v1157, 7
        %v1159 = vsub.s32 %v1156, %v1158
        %v1160 = vrot.slane %v1146, %v1159
        %v1161 = vcombine.high %v1153, %v1153
        %1162 = vrot.lane.b32.xlu0 %v1153, 108
        %v1163 = vpop.permute.xlu0 %1162
        %1164 = vrot.lane.b32.xlu0 %v1161, 108
        %v1165 = vpop.permute.xlu0 %1164
        %1166 = vrot.lane.b32.xlu0 %v1160, 108
        %v1167 = vpop.permute.xlu0 %1166
        %vm1168 = vcmask 883712
        %v1169 = vsel %vm1168, %v1163, %v1165
        %v1170 = vsel %vm1168, %v1165, %v1167
        %v1172 = vsel %vm579, %v1143, 0
        %v1175 = vsel %vm583, %v1169, 0
        %v1178 = vsel %vm583, %v1170, 0
        %v1181 = vsel %vm583, %v1167, 0
        %1183 = vmatprep.subr.bf16.mxu0 0
        %1184 = vmatpush1.bf16.msra.mxu0 0
        %1185 = vmatprep.subr.bf16.mxu0 0
        %1186 = vmatpush1.bf16.msra.mxu0 0
        %1187 = vmatprep.subr.bf16.mxu0 0
        %1188 = vmatpush1.bf16.msra.mxu0 0
        %1189 = vmatprep.subr.bf16.mxu0 0
        %1190 = vmatpush1.bf16.msra.mxu0 0
        %1191 = vmatprep.subr.bf16.mxu0 0
        %1192 = vmatpush1.bf16.msra.mxu0 0
        %1193 = vmatprep.subr.bf16.mxu0 0
        %1194 = vmatpush1.bf16.msra.mxu0 0
        %1195 = vmatprep.subr.bf16.mxu0 0
        %1196 = vmatpush1.bf16.msra.mxu0 0
        %1197 = vmatprep.subr.bf16.mxu0 %v1178
        %1198 = vmatpush1.bf16.msra.mxu0 %v1175
        %1199 = vmatprep.subr.bf16.mxu0 0
        %1200 = vmatpush2.bf16.msra.mxu0 0
        %1201 = vmatprep.subr.bf16.mxu0 0
        %1202 = vmatpush2.bf16.msra.mxu0 0
        %1203 = vmatprep.subr.bf16.mxu0 0
        %1204 = vmatpush2.bf16.msra.mxu0 0
        %1205 = vmatprep.subr.bf16.mxu0 0
        %1206 = vmatpush2.bf16.msra.mxu0 0
        %1207 = vmatprep.subr.bf16.mxu0 0
        %1208 = vmatpush2.bf16.msra.mxu0 0
        %1209 = vmatprep.subr.bf16.mxu0 0
        %1210 = vmatpush2.bf16.msra.mxu0 0
        %1211 = vmatprep.subr.bf16.mxu0 0
        %1212 = vmatpush2.bf16.msra.mxu0 0
        %1213 = vmatprep.subr.bf16.mxu0 0
        %1214 = vmatpush2.bf16.msra.mxu0 0
        %1215 = vmatprep.mubr.bf16.mxu0 0
        %1216 = vmatmul.mubr.bf16.gmra.mxu0 %v1172
        %v1217 = vpop.f32.mrf.mxu0
        %v1218 = vadd.f32 0.0, %v1217
        %v1219 = vpop.f32.mrf.mxu0
        %v1220 = vadd.f32 0.0, %v1219
        %v1221 = vpop.f32.mrf.mxu0
        %v1222 = vpop.f32.mrf.mxu0
        %1223 = vdwg.mxu0
        %1224 = vmatprep.subr.bf16.mxu0 0
        %1225 = vmatpush1.bf16.msra.mxu0 0
        %1226 = vmatprep.subr.bf16.mxu0 0
        %1227 = vmatpush1.bf16.msra.mxu0 0
        %1228 = vmatprep.subr.bf16.mxu0 0
        %1229 = vmatpush1.bf16.msra.mxu0 0
        %1230 = vmatprep.subr.bf16.mxu0 0
        %1231 = vmatpush1.bf16.msra.mxu0 0
        %1232 = vmatprep.subr.bf16.mxu0 0
        %1233 = vmatpush1.bf16.msra.mxu0 0
        %1234 = vmatprep.subr.bf16.mxu0 0
        %1235 = vmatpush1.bf16.msra.mxu0 0
        %1236 = vmatprep.subr.bf16.mxu0 0
        %1237 = vmatpush1.bf16.msra.mxu0 0
        %1238 = vmatprep.subr.bf16.mxu0 0
        %1239 = vmatpush1.bf16.msra.mxu0 %v1181
        %1240 = vmatprep.subr.bf16.mxu0 0
        %1241 = vmatpush2.bf16.msra.mxu0 0
        %1242 = vmatprep.subr.bf16.mxu0 0
        %1243 = vmatpush2.bf16.msra.mxu0 0
        %1244 = vmatprep.subr.bf16.mxu0 0
        %1245 = vmatpush2.bf16.msra.mxu0 0
        %1246 = vmatprep.subr.bf16.mxu0 0
        %1247 = vmatpush2.bf16.msra.mxu0 0
        %1248 = vmatprep.subr.bf16.mxu0 0
        %1249 = vmatpush2.bf16.msra.mxu0 0
        %1250 = vmatprep.subr.bf16.mxu0 0
        %1251 = vmatpush2.bf16.msra.mxu0 0
        %1252 = vmatprep.subr.bf16.mxu0 0
        %1253 = vmatpush2.bf16.msra.mxu0 0
        %1254 = vmatprep.subr.bf16.mxu0 0
        %1255 = vmatpush2.bf16.msra.mxu0 0
        %1256 = vmatprep.mubr.bf16.mxu0 0
        %1257 = vmatmul.mubr.bf16.gmra.mxu0 %v1172
        %v1258 = vpop.f32.mrf.mxu0
        %v1259 = vadd.f32 0.0, %v1258
        %v1260 = vpop.f32.mrf.mxu0
        %v1261 = vpop.f32.mrf.mxu0
        %v1262 = vpop.f32.mrf.mxu0
        %1263 = vdwg.mxu0
        %v1264 = vadd.f32 %v1139, %v1218
        %v1265 = vadd.f32 %v1140, %v1220
        %v1266 = vadd.f32 %v1141, %v1259
        %s1267 = scalar_lea.vmem %s1, 24
        %v1268 = vld [vmem:[%s1267] sm:$0xf]
        %v1269 = vld [vmem:[%s537] sm:$0x3f]
        %v1271 = vcombine.high %v1269, %v1269
        %v1273 = vunpack.c.l.s4 1983009808
        %v1274 = vunpack.c.0.s8 %v1273
        %v1275 = vlaneseq
        %v1276 = vshrl.u32 %v1275, 7
        %v1277 = vsub.s32 %v1274, %v1276
        %v1278 = vrot.slane %v1269, %v1277
        %v1280 = vunpack.c.l.s4 1983009808
        %v1281 = vunpack.c.0.s8 %v1280
        %v1282 = vlaneseq
        %v1283 = vshrl.u32 %v1282, 7
        %v1284 = vsub.s32 %v1281, %v1283
        %v1285 = vrot.slane %v1271, %v1284
        %v1286 = vcombine.high %v1278, %v1278
        %1287 = vrot.lane.b32.xlu0 %v1278, 92
        %v1288 = vpop.permute.xlu0 %1287
        %1289 = vrot.lane.b32.xlu0 %v1286, 92
        %v1290 = vpop.permute.xlu0 %1289
        %1291 = vrot.lane.b32.xlu0 %v1285, 92
        %v1292 = vpop.permute.xlu0 %1291
        %vm1293 = vcmask 752640
        %v1294 = vsel %vm1293, %v1288, %v1290
        %v1295 = vsel %vm1293, %v1290, %v1292
        %v1297 = vsel %vm579, %v1268, 0
        %v1300 = vsel %vm583, %v1294, 0
        %v1303 = vsel %vm583, %v1295, 0
        %v1306 = vsel %vm583, %v1292, 0
        %1308 = vmatprep.subr.bf16.mxu0 0
        %1309 = vmatpush1.bf16.msra.mxu0 0
        %1310 = vmatprep.subr.bf16.mxu0 0
        %1311 = vmatpush1.bf16.msra.mxu0 0
        %1312 = vmatprep.subr.bf16.mxu0 0
        %1313 = vmatpush1.bf16.msra.mxu0 0
        %1314 = vmatprep.subr.bf16.mxu0 0
        %1315 = vmatpush1.bf16.msra.mxu0 0
        %1316 = vmatprep.subr.bf16.mxu0 0
        %1317 = vmatpush1.bf16.msra.mxu0 0
        %1318 = vmatprep.subr.bf16.mxu0 0
        %1319 = vmatpush1.bf16.msra.mxu0 0
        %1320 = vmatprep.subr.bf16.mxu0 0
        %1321 = vmatpush1.bf16.msra.mxu0 0
        %1322 = vmatprep.subr.bf16.mxu0 %v1303
        %1323 = vmatpush1.bf16.msra.mxu0 %v1300
        %1324 = vmatprep.subr.bf16.mxu0 0
        %1325 = vmatpush2.bf16.msra.mxu0 0
        %1326 = vmatprep.subr.bf16.mxu0 0
        %1327 = vmatpush2.bf16.msra.mxu0 0
        %1328 = vmatprep.subr.bf16.mxu0 0
        %1329 = vmatpush2.bf16.msra.mxu0 0
        %1330 = vmatprep.subr.bf16.mxu0 0
        %1331 = vmatpush2.bf16.msra.mxu0 0
        %1332 = vmatprep.subr.bf16.mxu0 0
        %1333 = vmatpush2.bf16.msra.mxu0 0
        %1334 = vmatprep.subr.bf16.mxu0 0
        %1335 = vmatpush2.bf16.msra.mxu0 0
        %1336 = vmatprep.subr.bf16.mxu0 0
        %1337 = vmatpush2.bf16.msra.mxu0 0
        %1338 = vmatprep.subr.bf16.mxu0 0
        %1339 = vmatpush2.bf16.msra.mxu0 0
        %1340 = vmatprep.mubr.bf16.mxu0 0
        %1341 = vmatmul.mubr.bf16.gmra.mxu0 %v1297
        %v1342 = vpop.f32.mrf.mxu0
        %v1343 = vadd.f32 0.0, %v1342
        %v1344 = vpop.f32.mrf.mxu0
        %v1345 = vadd.f32 0.0, %v1344
        %v1346 = vpop.f32.mrf.mxu0
        %v1347 = vpop.f32.mrf.mxu0
        %1348 = vdwg.mxu0
        %1349 = vmatprep.subr.bf16.mxu0 0
        %1350 = vmatpush1.bf16.msra.mxu0 0
        %1351 = vmatprep.subr.bf16.mxu0 0
        %1352 = vmatpush1.bf16.msra.mxu0 0
        %1353 = vmatprep.subr.bf16.mxu0 0
        %1354 = vmatpush1.bf16.msra.mxu0 0
        %1355 = vmatprep.subr.bf16.mxu0 0
        %1356 = vmatpush1.bf16.msra.mxu0 0
        %1357 = vmatprep.subr.bf16.mxu0 0
        %1358 = vmatpush1.bf16.msra.mxu0 0
        %1359 = vmatprep.subr.bf16.mxu0 0
        %1360 = vmatpush1.bf16.msra.mxu0 0
        %1361 = vmatprep.subr.bf16.mxu0 0
        %1362 = vmatpush1.bf16.msra.mxu0 0
        %1363 = vmatprep.subr.bf16.mxu0 0
        %1364 = vmatpush1.bf16.msra.mxu0 %v1306
        %1365 = vmatprep.subr.bf16.mxu0 0
        %1366 = vmatpush2.bf16.msra.mxu0 0
        %1367 = vmatprep.subr.bf16.mxu0 0
        %1368 = vmatpush2.bf16.msra.mxu0 0
        %1369 = vmatprep.subr.bf16.mxu0 0
        %1370 = vmatpush2.bf16.msra.mxu0 0
        %1371 = vmatprep.subr.bf16.mxu0 0
        %1372 = vmatpush2.bf16.msra.mxu0 0
        %1373 = vmatprep.subr.bf16.mxu0 0
        %1374 = vmatpush2.bf16.msra.mxu0 0
        %1375 = vmatprep.subr.bf16.mxu0 0
        %1376 = vmatpush2.bf16.msra.mxu0 0
        %1377 = vmatprep.subr.bf16.mxu0 0
        %1378 = vmatpush2.bf16.msra.mxu0 0
        %1379 = vmatprep.subr.bf16.mxu0 0
        %1380 = vmatpush2.bf16.msra.mxu0 0
        %1381 = vmatprep.mubr.bf16.mxu0 0
        %1382 = vmatmul.mubr.bf16.gmra.mxu0 %v1297
        %v1383 = vpop.f32.mrf.mxu0
        %v1384 = vadd.f32 0.0, %v1383
        %v1385 = vpop.f32.mrf.mxu0
        %v1386 = vpop.f32.mrf.mxu0
        %v1387 = vpop.f32.mrf.mxu0
        %1388 = vdwg.mxu0
        %v1389 = vadd.f32 %v1264, %v1343
        %v1390 = vadd.f32 %v1265, %v1345
        %v1391 = vadd.f32 %v1266, %v1384
        %s1392 = scalar_lea.vmem %s1, 28
        %v1393 = vld [vmem:[%s1392] sm:$0xf]
        %v1394 = vld [vmem:[%s537] sm:$0x3f]
        %v1396 = vcombine.high %v1394, %v1394
        %v1398 = vunpack.c.l.s4 1983009808
        %v1399 = vunpack.c.0.s8 %v1398
        %v1400 = vlaneseq
        %v1401 = vshrl.u32 %v1400, 7
        %v1402 = vsub.s32 %v1399, %v1401
        %v1403 = vrot.slane %v1394, %v1402
        %v1405 = vunpack.c.l.s4 1983009808
        %v1406 = vunpack.c.0.s8 %v1405
        %v1407 = vlaneseq
        %v1408 = vshrl.u32 %v1407, 7
        %v1409 = vsub.s32 %v1406, %v1408
        %v1410 = vrot.slane %v1396, %v1409
        %v1411 = vcombine.high %v1403, %v1403
        %1412 = vrot.lane.b32.xlu0 %v1403, 91
        %v1413 = vpop.permute.xlu0 %1412
        %1414 = vrot.lane.b32.xlu0 %v1411, 91
        %v1415 = vpop.permute.xlu0 %1414
        %1416 = vrot.lane.b32.xlu0 %v1410, 91
        %v1417 = vpop.permute.xlu0 %1416
        %vm1418 = vcmask 744448
        %v1419 = vsel %vm1418, %v1413, %v1415
        %v1420 = vsel %vm1418, %v1415, %v1417
        %v1422 = vsel %vm579, %v1393, 0
        %v1425 = vsel %vm583, %v1419, 0
        %v1428 = vsel %vm583, %v1420, 0
        %v1431 = vsel %vm583, %v1417, 0
        %1433 = vmatprep.subr.bf16.mxu0 0
        %1434 = vmatpush1.bf16.msra.mxu0 0
        %1435 = vmatprep.subr.bf16.mxu0 0
        %1436 = vmatpush1.bf16.msra.mxu0 0
        %1437 = vmatprep.subr.bf16.mxu0 0
        %1438 = vmatpush1.bf16.msra.mxu0 0
        %1439 = vmatprep.subr.bf16.mxu0 0
        %1440 = vmatpush1.bf16.msra.mxu0 0
        %1441 = vmatprep.subr.bf16.mxu0 0
        %1442 = vmatpush1.bf16.msra.mxu0 0
        %1443 = vmatprep.subr.bf16.mxu0 0
        %1444 = vmatpush1.bf16.msra.mxu0 0
        %1445 = vmatprep.subr.bf16.mxu0 0
        %1446 = vmatpush1.bf16.msra.mxu0 0
        %1447 = vmatprep.subr.bf16.mxu0 %v1428
        %1448 = vmatpush1.bf16.msra.mxu0 %v1425
        %1449 = vmatprep.subr.bf16.mxu0 0
        %1450 = vmatpush2.bf16.msra.mxu0 0
        %1451 = vmatprep.subr.bf16.mxu0 0
        %1452 = vmatpush2.bf16.msra.mxu0 0
        %1453 = vmatprep.subr.bf16.mxu0 0
        %1454 = vmatpush2.bf16.msra.mxu0 0
        %1455 = vmatprep.subr.bf16.mxu0 0
        %1456 = vmatpush2.bf16.msra.mxu0 0
        %1457 = vmatprep.subr.bf16.mxu0 0
        %1458 = vmatpush2.bf16.msra.mxu0 0
        %1459 = vmatprep.subr.bf16.mxu0 0
        %1460 = vmatpush2.bf16.msra.mxu0 0
        %1461 = vmatprep.subr.bf16.mxu0 0
        %1462 = vmatpush2.bf16.msra.mxu0 0
        %1463 = vmatprep.subr.bf16.mxu0 0
        %1464 = vmatpush2.bf16.msra.mxu0 0
        %1465 = vmatprep.mubr.bf16.mxu0 0
        %1466 = vmatmul.mubr.bf16.gmra.mxu0 %v1422
        %v1467 = vpop.f32.mrf.mxu0
        %v1468 = vadd.f32 0.0, %v1467
        %v1469 = vpop.f32.mrf.mxu0
        %v1470 = vadd.f32 0.0, %v1469
        %v1471 = vpop.f32.mrf.mxu0
        %v1472 = vpop.f32.mrf.mxu0
        %1473 = vdwg.mxu0
        %1474 = vmatprep.subr.bf16.mxu0 0
        %1475 = vmatpush1.bf16.msra.mxu0 0
        %1476 = vmatprep.subr.bf16.mxu0 0
        %1477 = vmatpush1.bf16.msra.mxu0 0
        %1478 = vmatprep.subr.bf16.mxu0 0
        %1479 = vmatpush1.bf16.msra.mxu0 0
        %1480 = vmatprep.subr.bf16.mxu0 0
        %1481 = vmatpush1.bf16.msra.mxu0 0
        %1482 = vmatprep.subr.bf16.mxu0 0
        %1483 = vmatpush1.bf16.msra.mxu0 0
        %1484 = vmatprep.subr.bf16.mxu0 0
        %1485 = vmatpush1.bf16.msra.mxu0 0
        %1486 = vmatprep.subr.bf16.mxu0 0
        %1487 = vmatpush1.bf16.msra.mxu0 0
        %1488 = vmatprep.subr.bf16.mxu0 0
        %1489 = vmatpush1.bf16.msra.mxu0 %v1431
        %1490 = vmatprep.subr.bf16.mxu0 0
        %1491 = vmatpush2.bf16.msra.mxu0 0
        %1492 = vmatprep.subr.bf16.mxu0 0
        %1493 = vmatpush2.bf16.msra.mxu0 0
        %1494 = vmatprep.subr.bf16.mxu0 0
        %1495 = vmatpush2.bf16.msra.mxu0 0
        %1496 = vmatprep.subr.bf16.mxu0 0
        %1497 = vmatpush2.bf16.msra.mxu0 0
        %1498 = vmatprep.subr.bf16.mxu0 0
        %1499 = vmatpush2.bf16.msra.mxu0 0
        %1500 = vmatprep.subr.bf16.mxu0 0
        %1501 = vmatpush2.bf16.msra.mxu0 0
        %1502 = vmatprep.subr.bf16.mxu0 0
        %1503 = vmatpush2.bf16.msra.mxu0 0
        %1504 = vmatprep.subr.bf16.mxu0 0
        %1505 = vmatpush2.bf16.msra.mxu0 0
        %1506 = vmatprep.mubr.bf16.mxu0 0
        %1507 = vmatmul.mubr.bf16.gmra.mxu0 %v1422
        %v1508 = vpop.f32.mrf.mxu0
        %v1509 = vadd.f32 0.0, %v1508
        %v1510 = vpop.f32.mrf.mxu0
        %v1511 = vpop.f32.mrf.mxu0
        %v1512 = vpop.f32.mrf.mxu0
        %1513 = vdwg.mxu0
        %v1514 = vadd.f32 %v1389, %v1468
        %v1515 = vadd.f32 %v1390, %v1470
        %v1516 = vadd.f32 %v1391, %v1509
        %s1517 = scalar_lea.vmem %s1, 32
        %v1518 = vld [vmem:[%s1517] sm:$0xf]
        %v1519 = vld [vmem:[%s537] sm:$0x3f]
        %v1521 = vcombine.high %v1519, %v1519
        %v1523 = vunpack.c.l.s4 1983009808
        %v1524 = vunpack.c.0.s8 %v1523
        %v1525 = vlaneseq
        %v1526 = vshrl.u32 %v1525, 7
        %v1527 = vsub.s32 %v1524, %v1526
        %v1528 = vrot.slane %v1519, %v1527
        %v1530 = vunpack.c.l.s4 1983009808
        %v1531 = vunpack.c.0.s8 %v1530
        %v1532 = vlaneseq
        %v1533 = vshrl.u32 %v1532, 7
        %v1534 = vsub.s32 %v1531, %v1533
        %v1535 = vrot.slane %v1521, %v1534
        %v1536 = vcombine.high %v1528, %v1528
        %1537 = vrot.lane.b32.xlu0 %v1528, 90
        %v1538 = vpop.permute.xlu0 %1537
        %1539 = vrot.lane.b32.xlu0 %v1536, 90
        %v1540 = vpop.permute.xlu0 %1539
        %1541 = vrot.lane.b32.xlu0 %v1535, 90
        %v1542 = vpop.permute.xlu0 %1541
        %vm1543 = vcmask 736256
        %v1544 = vsel %vm1543, %v1538, %v1540
        %v1545 = vsel %vm1543, %v1540, %v1542
        %v1547 = vsel %vm579, %v1518, 0
        %v1550 = vsel %vm583, %v1544, 0
        %v1553 = vsel %vm583, %v1545, 0
        %v1556 = vsel %vm583, %v1542, 0
        %1558 = vmatprep.subr.bf16.mxu0 0
        %1559 = vmatpush1.bf16.msra.mxu0 0
        %1560 = vmatprep.subr.bf16.mxu0 0
        %1561 = vmatpush1.bf16.msra.mxu0 0
        %1562 = vmatprep.subr.bf16.mxu0 0
        %1563 = vmatpush1.bf16.msra.mxu0 0
        %1564 = vmatprep.subr.bf16.mxu0 0
        %1565 = vmatpush1.bf16.msra.mxu0 0
        %1566 = vmatprep.subr.bf16.mxu0 0
        %1567 = vmatpush1.bf16.msra.mxu0 0
        %1568 = vmatprep.subr.bf16.mxu0 0
        %1569 = vmatpush1.bf16.msra.mxu0 0
        %1570 = vmatprep.subr.bf16.mxu0 0
        %1571 = vmatpush1.bf16.msra.mxu0 0
        %1572 = vmatprep.subr.bf16.mxu0 %v1553
        %1573 = vmatpush1.bf16.msra.mxu0 %v1550
        %1574 = vmatprep.subr.bf16.mxu0 0
        %1575 = vmatpush2.bf16.msra.mxu0 0
        %1576 = vmatprep.subr.bf16.mxu0 0
        %1577 = vmatpush2.bf16.msra.mxu0 0
        %1578 = vmatprep.subr.bf16.mxu0 0
        %1579 = vmatpush2.bf16.msra.mxu0 0
        %1580 = vmatprep.subr.bf16.mxu0 0
        %1581 = vmatpush2.bf16.msra.mxu0 0
        %1582 = vmatprep.subr.bf16.mxu0 0
        %1583 = vmatpush2.bf16.msra.mxu0 0
        %1584 = vmatprep.subr.bf16.mxu0 0
        %1585 = vmatpush2.bf16.msra.mxu0 0
        %1586 = vmatprep.subr.bf16.mxu0 0
        %1587 = vmatpush2.bf16.msra.mxu0 0
        %1588 = vmatprep.subr.bf16.mxu0 0
        %1589 = vmatpush2.bf16.msra.mxu0 0
        %1590 = vmatprep.mubr.bf16.mxu0 0
        %1591 = vmatmul.mubr.bf16.gmra.mxu0 %v1547
        %v1592 = vpop.f32.mrf.mxu0
        %v1593 = vadd.f32 0.0, %v1592
        %v1594 = vpop.f32.mrf.mxu0
        %v1595 = vadd.f32 0.0, %v1594
        %v1596 = vpop.f32.mrf.mxu0
        %v1597 = vpop.f32.mrf.mxu0
        %1598 = vdwg.mxu0
        %1599 = vmatprep.subr.bf16.mxu0 0
        %1600 = vmatpush1.bf16.msra.mxu0 0
        %1601 = vmatprep.subr.bf16.mxu0 0
        %1602 = vmatpush1.bf16.msra.mxu0 0
        %1603 = vmatprep.subr.bf16.mxu0 0
        %1604 = vmatpush1.bf16.msra.mxu0 0
        %1605 = vmatprep.subr.bf16.mxu0 0
        %1606 = vmatpush1.bf16.msra.mxu0 0
        %1607 = vmatprep.subr.bf16.mxu0 0
        %1608 = vmatpush1.bf16.msra.mxu0 0
        %1609 = vmatprep.subr.bf16.mxu0 0
        %1610 = vmatpush1.bf16.msra.mxu0 0
        %1611 = vmatprep.subr.bf16.mxu0 0
        %1612 = vmatpush1.bf16.msra.mxu0 0
        %1613 = vmatprep.subr.bf16.mxu0 0
        %1614 = vmatpush1.bf16.msra.mxu0 %v1556
        %1615 = vmatprep.subr.bf16.mxu0 0
        %1616 = vmatpush2.bf16.msra.mxu0 0
        %1617 = vmatprep.subr.bf16.mxu0 0
        %1618 = vmatpush2.bf16.msra.mxu0 0
        %1619 = vmatprep.subr.bf16.mxu0 0
        %1620 = vmatpush2.bf16.msra.mxu0 0
        %1621 = vmatprep.subr.bf16.mxu0 0
        %1622 = vmatpush2.bf16.msra.mxu0 0
        %1623 = vmatprep.subr.bf16.mxu0 0
        %1624 = vmatpush2.bf16.msra.mxu0 0
        %1625 = vmatprep.subr.bf16.mxu0 0
        %1626 = vmatpush2.bf16.msra.mxu0 0
        %1627 = vmatprep.subr.bf16.mxu0 0
        %1628 = vmatpush2.bf16.msra.mxu0 0
        %1629 = vmatprep.subr.bf16.mxu0 0
        %1630 = vmatpush2.bf16.msra.mxu0 0
        %1631 = vmatprep.mubr.bf16.mxu0 0
        %1632 = vmatmul.mubr.bf16.gmra.mxu0 %v1547
        %v1633 = vpop.f32.mrf.mxu0
        %v1634 = vadd.f32 0.0, %v1633
        %v1635 = vpop.f32.mrf.mxu0
        %v1636 = vpop.f32.mrf.mxu0
        %v1637 = vpop.f32.mrf.mxu0
        %1638 = vdwg.mxu0
        %v1639 = vadd.f32 %v1514, %v1593
        %v1640 = vadd.f32 %v1515, %v1595
        %v1641 = vadd.f32 %v1516, %v1634
        %v1642 = vld [vmem:[%s2] sm:$0xff]
        %1644 = vset.pattern.permute.xlu0 0
        %1645 = vperm.xlu0 %1644, %v1642
        %v1646 = vpop.permute.xlu0 %1645
        %v1648 = vadd.f32 %v1639, %v1646
        %v1649 = vadd.f32 %v1640, %v1646
        %v1650 = vadd.f32 %v1641, %v1646
        %v1652 = vlaneseq
        %v1653 = vshrl.u32 %v1652, 7
        %v1654 = vsub.s32 0, %v1653
        %v1655 = vrot.slane %v548, %v1654
        %v1656 = vlaneseq
        %v1657 = vshrl.u32 %v1656, 7
        %v1658 = vsub.s32 1, %v1657
        %v1659 = vrot.slane %v548, %v1658
        %v1660 = vlaneseq
        %v1661 = vshrl.u32 %v1660, 7
        %v1662 = vsub.s32 2, %v1661
        %v1663 = vrot.slane %v548, %v1662
        %v1667 = vmul.f32 %v1648, %v1655
        %v1668 = vmul.f32 %v1649, %v1659
        %v1669 = vmul.f32 %v1650, %v1663
        %v1670 = vadd.f32 %v1667, %v1668
        %vm1671 = vcmask 261120
        %v1672 = vsel %vm1671, %v1669, 0.0
        %v1673 = vadd.f32 %v1670, %v1672
        %1674 = vadd.xlane.f32.xlu0 %v1673
        %v1675 = vpop.xlane.xlu0 %1674
        %v1676 = vmul.f32 %v1675, 0.00390625
        %v1677 = vsub.f32 %v1648, %v1676
        %v1678 = vsub.f32 %v1649, %v1676
        %v1679 = vsub.f32 %v1650, %v1676
        %v1680 = vmul.f32 %v1677, %v1677
        %v1681 = vmul.f32 %v1678, %v1678
        %v1682 = vmul.f32 %v1679, %v1679
        %v1683 = vmul.f32 %v1680, %v1655
        %v1684 = vmul.f32 %v1681, %v1659
        %v1685 = vmul.f32 %v1682, %v1663
        %v1686 = vadd.f32 %v1683, %v1684
        %v1687 = vsel %vm1671, %v1685, 0.0
        %v1688 = vadd.f32 %v1686, %v1687
        %1689 = vadd.xlane.f32.xlu0 %v1688
        %v1690 = vpop.xlane.xlu0 %1689
        %v1691 = vmul.f32 %v1690, 0.00390625
        %v1692 = vadd.f32 %v1691, 1e-05
        %v1693 = vrsqrt.pop %v1692
        %v1694 = vmul.f32 %v1677, %v1693
        %v1695 = vmul.f32 %v1678, %v1693
        %v1696 = vmul.f32 %v1679, %v1693
        %s1697 = sld [smem:[#allocation5]]
        %vm1698 = vcmp.gt.f32.partialorder %v1694, 0.0
        %vm1699 = vcmp.gt.f32.partialorder %v1695, 0.0
        %vm1700 = vcmp.gt.f32.partialorder %v1696, 0.0
        %v1701 = vstv %s1697
        %v1702 = vmul.f32 %v1701, %v1694
        %v1703 = vmul.f32 %v1701, %v1695
        %v1704 = vmul.f32 %v1701, %v1696
        %v1705 = vsel %vm1698, %v1694, %v1702
        %v1706 = vsel %vm1699, %v1695, %v1703
        %v1707 = vsel %vm1700, %v1696, %v1704
        %v1708 = vmul.f32 %v1705, %v1655
        %v1709 = vmul.f32 %v1706, %v1659
        %v1710 = vmul.f32 %v1707, %v1663
        %v1711 = vpack.c.bf16 %v1708, %v1708
        %v1712 = vpack.c.bf16 %v1709, %v1709
        %v1713 = vpack.c.bf16 %v1710, %v1710
        %vm1714 = vcmask 150528
        %1715 = vst.msk [vmem:[#allocation2] sm:$0xf] %vm1714, 0
        %vm1716 = vcmask 699800
        %1717 = vst.msk [vmem:[#allocation2 + $0x8] sm:$0xf] %vm1716, 0
        %v1721 = vunpack.c.l.b16 %v1711
        %v1722 = vunpack.c.l.b16 %v1712
        %v1723 = vunpack.c.l.b16 %v1713
        %v1724 = vpack.c.b16 %v1722, %v1721
        %v1725 = vpack.c.b16 %v1723, %v1723
        %1726 = vrot.lane.b32.xlu0 %v1724, 19
        %v1727 = vpop.permute.xlu0 %1726
        %1728 = vrot.lane.b32.xlu0 %v1725, 19
        %v1729 = vpop.permute.xlu0 %1728
        %v1730 = vrot.slane %v1727, 4
        %vm1731 = vcmask 154624
        %v1732 = vsel %vm1731, %v1730, %v1727
        %v1733 = vsel %vm1731, %v1730, %v1729
        %vm1736 = vcmask 1043608
        %vm1737 = vcmask 1047556
        %vm1738 = vmor %vm1737, %vm1736
        %1739 = vst.msk [vmem:[#allocation2] sm:$0xff] %vm1738, %v1732
        %vm1740 = vcmask 412672
        %1741 = vst.msk [vmem:[#allocation2 + $0x8] sm:$0xf] %vm1740, %v1733
        %v1742 = vld [vmem:[%s3] sm:$0xf]
        %v1743 = vld [vmem:[#allocation2] sm:$0xff]
        %v1744 = vld [vmem:[#allocation2 + $0x8] sm:$0xf]
        %s1745 = scalar_lea.vmem %s3, 4
        %v1746 = vld [vmem:[%s1745] sm:$0xf]
        %v1749 = vunpack.c.l.b16 %v1743
        %v1750 = vunpack.c.h.b16 %v1743
        %v1751 = vunpack.c.l.b16 %v1744
        %v1752 = vpack.c.b16 %v1749, %v1749
        %v1753 = vpack.c.b16 %v1750, %v1750
        %v1754 = vpack.c.b16 %v1751, %v1751
        %1755 = vrot.lane.b32.xlu0 %v1752, 127
        %v1756 = vpop.permute.xlu0 %1755
        %1757 = vrot.lane.b32.xlu0 %v1753, 127
        %v1758 = vpop.permute.xlu0 %1757
        %1759 = vrot.lane.b32.xlu0 %v1754, 127
        %v1760 = vpop.permute.xlu0 %1759
        %v1761 = vsel %vm576, %v1756, %v1758
        %v1762 = vsel %vm576, %v1758, %v1760
        %vm1763 = vcmask 64512
        %v1765 = vsel %vm1763, %v1746, 0
        %vm1767 = vcmask 1043456
        %v1769 = vsel %vm1767, %v1761, 0
        %v1772 = vsel %vm1767, %v1762, 0
        %v1775 = vsel %vm1767, %v1760, 0
        %1777 = vmatprep.subr.bf16.mxu0 0
        %1778 = vmatpush1.bf16.msra.mxu0 0
        %1779 = vmatprep.subr.bf16.mxu0 0
        %1780 = vmatpush1.bf16.msra.mxu0 0
        %1781 = vmatprep.subr.bf16.mxu0 0
        %1782 = vmatpush1.bf16.msra.mxu0 0
        %1783 = vmatprep.subr.bf16.mxu0 0
        %1784 = vmatpush1.bf16.msra.mxu0 0
        %1785 = vmatprep.subr.bf16.mxu0 0
        %1786 = vmatpush1.bf16.msra.mxu0 0
        %1787 = vmatprep.subr.bf16.mxu0 0
        %1788 = vmatpush1.bf16.msra.mxu0 0
        %1789 = vmatprep.subr.bf16.mxu0 0
        %1790 = vmatpush1.bf16.msra.mxu0 0
        %1791 = vmatprep.subr.bf16.mxu0 %v1772
        %1792 = vmatpush1.bf16.msra.mxu0 %v1769
        %1793 = vmatprep.subr.bf16.mxu0 0
        %1794 = vmatpush2.bf16.msra.mxu0 0
        %1795 = vmatprep.subr.bf16.mxu0 0
        %1796 = vmatpush2.bf16.msra.mxu0 0
        %1797 = vmatprep.subr.bf16.mxu0 0
        %1798 = vmatpush2.bf16.msra.mxu0 0
        %1799 = vmatprep.subr.bf16.mxu0 0
        %1800 = vmatpush2.bf16.msra.mxu0 0
        %1801 = vmatprep.subr.bf16.mxu0 0
        %1802 = vmatpush2.bf16.msra.mxu0 0
        %1803 = vmatprep.subr.bf16.mxu0 0
        %1804 = vmatpush2.bf16.msra.mxu0 0
        %1805 = vmatprep.subr.bf16.mxu0 0
        %1806 = vmatpush2.bf16.msra.mxu0 0
        %1807 = vmatprep.subr.bf16.mxu0 0
        %1808 = vmatpush2.bf16.msra.mxu0 0
        %1809 = vmatprep.mubr.bf16.mxu0 0
        %1810 = vmatmul.mubr.bf16.gmra.mxu0 %v1765
        %v1811 = vpop.f32.mrf.mxu0
        %v1812 = vadd.f32 0.0, %v1811
        %v1813 = vpop.f32.mrf.mxu0
        %v1814 = vadd.f32 0.0, %v1813
        %v1815 = vpop.f32.mrf.mxu0
        %v1816 = vpop.f32.mrf.mxu0
        %1817 = vdwg.mxu0
        %1818 = vmatprep.subr.bf16.mxu0 0
        %1819 = vmatpush1.bf16.msra.mxu0 0
        %1820 = vmatprep.subr.bf16.mxu0 0
        %1821 = vmatpush1.bf16.msra.mxu0 0
        %1822 = vmatprep.subr.bf16.mxu0 0
        %1823 = vmatpush1.bf16.msra.mxu0 0
        %1824 = vmatprep.subr.bf16.mxu0 0
        %1825 = vmatpush1.bf16.msra.mxu0 0
        %1826 = vmatprep.subr.bf16.mxu0 0
        %1827 = vmatpush1.bf16.msra.mxu0 0
        %1828 = vmatprep.subr.bf16.mxu0 0
        %1829 = vmatpush1.bf16.msra.mxu0 0
        %1830 = vmatprep.subr.bf16.mxu0 0
        %1831 = vmatpush1.bf16.msra.mxu0 0
        %1832 = vmatprep.subr.bf16.mxu0 0
        %1833 = vmatpush1.bf16.msra.mxu0 %v1775
        %1834 = vmatprep.subr.bf16.mxu0 0
        %1835 = vmatpush2.bf16.msra.mxu0 0
        %1836 = vmatprep.subr.bf16.mxu0 0
        %1837 = vmatpush2.bf16.msra.mxu0 0
        %1838 = vmatprep.subr.bf16.mxu0 0
        %1839 = vmatpush2.bf16.msra.mxu0 0
        %1840 = vmatprep.subr.bf16.mxu0 0
        %1841 = vmatpush2.bf16.msra.mxu0 0
        %1842 = vmatprep.subr.bf16.mxu0 0
        %1843 = vmatpush2.bf16.msra.mxu0 0
        %1844 = vmatprep.subr.bf16.mxu0 0
        %1845 = vmatpush2.bf16.msra.mxu0 0
        %1846 = vmatprep.subr.bf16.mxu0 0
        %1847 = vmatpush2.bf16.msra.mxu0 0
        %1848 = vmatprep.subr.bf16.mxu0 0
        %1849 = vmatpush2.bf16.msra.mxu0 0
        %1850 = vmatprep.mubr.bf16.mxu0 0
        %1851 = vmatmul.mubr.bf16.gmra.mxu0 %v1765
        %v1852 = vpop.f32.mrf.mxu0
        %v1853 = vadd.f32 0.0, %v1852
        %v1854 = vpop.f32.mrf.mxu0
        %v1855 = vpop.f32.mrf.mxu0
        %v1856 = vpop.f32.mrf.mxu0
        %1857 = vdwg.mxu0
        %v1859 = vsel %vm1763, %v1742, 0
        %v1862 = vsel %vm1767, %v1752, 0
        %v1865 = vsel %vm1767, %v1753, 0
        %v1868 = vsel %vm1767, %v1754, 0
        %1870 = vmatprep.subr.bf16.mxu0 0
        %1871 = vmatpush1.bf16.msra.mxu0 0
        %1872 = vmatprep.subr.bf16.mxu0 0
        %1873 = vmatpush1.bf16.msra.mxu0 0
        %1874 = vmatprep.subr.bf16.mxu0 0
        %1875 = vmatpush1.bf16.msra.mxu0 0
        %1876 = vmatprep.subr.bf16.mxu0 0
        %1877 = vmatpush1.bf16.msra.mxu0 0
        %1878 = vmatprep.subr.bf16.mxu0 0
        %1879 = vmatpush1.bf16.msra.mxu0 0
        %1880 = vmatprep.subr.bf16.mxu0 0
        %1881 = vmatpush1.bf16.msra.mxu0 0
        %1882 = vmatprep.subr.bf16.mxu0 0
        %1883 = vmatpush1.bf16.msra.mxu0 0
        %1884 = vmatprep.subr.bf16.mxu0 %v1865
        %1885 = vmatpush1.bf16.msra.mxu0 %v1862
        %1886 = vmatprep.subr.bf16.mxu0 0
        %1887 = vmatpush2.bf16.msra.mxu0 0
        %1888 = vmatprep.subr.bf16.mxu0 0
        %1889 = vmatpush2.bf16.msra.mxu0 0
        %1890 = vmatprep.subr.bf16.mxu0 0
        %1891 = vmatpush2.bf16.msra.mxu0 0
        %1892 = vmatprep.subr.bf16.mxu0 0
        %1893 = vmatpush2.bf16.msra.mxu0 0
        %1894 = vmatprep.subr.bf16.mxu0 0
        %1895 = vmatpush2.bf16.msra.mxu0 0
        %1896 = vmatprep.subr.bf16.mxu0 0
        %1897 = vmatpush2.bf16.msra.mxu0 0
        %1898 = vmatprep.subr.bf16.mxu0 0
        %1899 = vmatpush2.bf16.msra.mxu0 0
        %1900 = vmatprep.subr.bf16.mxu0 0
        %1901 = vmatpush2.bf16.msra.mxu0 0
        %1902 = vmatprep.mubr.bf16.mxu0 0
        %1903 = vmatmul.mubr.bf16.gmra.mxu0 %v1859
        %v1904 = vpop.f32.mrf.mxu0
        %v1905 = vadd.f32 %v1812, %v1904
        %v1906 = vpop.f32.mrf.mxu0
        %v1907 = vadd.f32 %v1814, %v1906
        %v1908 = vpop.f32.mrf.mxu0
        %v1909 = vpop.f32.mrf.mxu0
        %1910 = vdwg.mxu0
        %1911 = vmatprep.subr.bf16.mxu0 0
        %1912 = vmatpush1.bf16.msra.mxu0 0
        %1913 = vmatprep.subr.bf16.mxu0 0
        %1914 = vmatpush1.bf16.msra.mxu0 0
        %1915 = vmatprep.subr.bf16.mxu0 0
        %1916 = vmatpush1.bf16.msra.mxu0 0
        %1917 = vmatprep.subr.bf16.mxu0 0
        %1918 = vmatpush1.bf16.msra.mxu0 0
        %1919 = vmatprep.subr.bf16.mxu0 0
        %1920 = vmatpush1.bf16.msra.mxu0 0
        %1921 = vmatprep.subr.bf16.mxu0 0
        %1922 = vmatpush1.bf16.msra.mxu0 0
        %1923 = vmatprep.subr.bf16.mxu0 0
        %1924 = vmatpush1.bf16.msra.mxu0 0
        %1925 = vmatprep.subr.bf16.mxu0 0
        %1926 = vmatpush1.bf16.msra.mxu0 %v1868
        %1927 = vmatprep.subr.bf16.mxu0 0
        %1928 = vmatpush2.bf16.msra.mxu0 0
        %1929 = vmatprep.subr.bf16.mxu0 0
        %1930 = vmatpush2.bf16.msra.mxu0 0
        %1931 = vmatprep.subr.bf16.mxu0 0
        %1932 = vmatpush2.bf16.msra.mxu0 0
        %1933 = vmatprep.subr.bf16.mxu0 0
        %1934 = vmatpush2.bf16.msra.mxu0 0
        %1935 = vmatprep.subr.bf16.mxu0 0
        %1936 = vmatpush2.bf16.msra.mxu0 0
        %1937 = vmatprep.subr.bf16.mxu0 0
        %1938 = vmatpush2.bf16.msra.mxu0 0
        %1939 = vmatprep.subr.bf16.mxu0 0
        %1940 = vmatpush2.bf16.msra.mxu0 0
        %1941 = vmatprep.subr.bf16.mxu0 0
        %1942 = vmatpush2.bf16.msra.mxu0 0
        %1943 = vmatprep.mubr.bf16.mxu0 0
        %1944 = vmatmul.mubr.bf16.gmra.mxu0 %v1859
        %v1945 = vpop.f32.mrf.mxu0
        %v1946 = vadd.f32 %v1853, %v1945
        %v1947 = vpop.f32.mrf.mxu0
        %v1948 = vpop.f32.mrf.mxu0
        %v1949 = vpop.f32.mrf.mxu0
        %1950 = vdwg.mxu0
        %s1951 = scalar_lea.vmem %s3, 8
        %v1952 = vld [vmem:[%s1951] sm:$0xf]
        %1953 = vrot.lane.b32.xlu0 %v1752, 126
        %v1954 = vpop.permute.xlu0 %1953
        %1955 = vrot.lane.b32.xlu0 %v1753, 126
        %v1956 = vpop.permute.xlu0 %1955
        %1957 = vrot.lane.b32.xlu0 %v1754, 126
        %v1958 = vpop.permute.xlu0 %1957
        %v1959 = vsel %vm793, %v1954, %v1956
        %v1960 = vsel %vm793, %v1956, %v1958
        %v1962 = vsel %vm1763, %v1952, 0
        %v1965 = vsel %vm1767, %v1959, 0
        %v1968 = vsel %vm1767, %v1960, 0
        %v1971 = vsel %vm1767, %v1958, 0
        %1973 = vmatprep.subr.bf16.mxu0 0
        %1974 = vmatpush1.bf16.msra.mxu0 0
        %1975 = vmatprep.subr.bf16.mxu0 0
        %1976 = vmatpush1.bf16.msra.mxu0 0
        %1977 = vmatprep.subr.bf16.mxu0 0
        %1978 = vmatpush1.bf16.msra.mxu0 0
        %1979 = vmatprep.subr.bf16.mxu0 0
        %1980 = vmatpush1.bf16.msra.mxu0 0
        %1981 = vmatprep.subr.bf16.mxu0 0
        %1982 = vmatpush1.bf16.msra.mxu0 0
        %1983 = vmatprep.subr.bf16.mxu0 0
        %1984 = vmatpush1.bf16.msra.mxu0 0
        %1985 = vmatprep.subr.bf16.mxu0 0
        %1986 = vmatpush1.bf16.msra.mxu0 0
        %1987 = vmatprep.subr.bf16.mxu0 %v1968
        %1988 = vmatpush1.bf16.msra.mxu0 %v1965
        %1989 = vmatprep.subr.bf16.mxu0 0
        %1990 = vmatpush2.bf16.msra.mxu0 0
        %1991 = vmatprep.subr.bf16.mxu0 0
        %1992 = vmatpush2.bf16.msra.mxu0 0
        %1993 = vmatprep.subr.bf16.mxu0 0
        %1994 = vmatpush2.bf16.msra.mxu0 0
        %1995 = vmatprep.subr.bf16.mxu0 0
        %1996 = vmatpush2.bf16.msra.mxu0 0
        %1997 = vmatprep.subr.bf16.mxu0 0
        %1998 = vmatpush2.bf16.msra.mxu0 0
        %1999 = vmatprep.subr.bf16.mxu0 0
        %2000 = vmatpush2.bf16.msra.mxu0 0
        %2001 = vmatprep.subr.bf16.mxu0 0
        %2002 = vmatpush2.bf16.msra.mxu0 0
        %2003 = vmatprep.subr.bf16.mxu0 0
        %2004 = vmatpush2.bf16.msra.mxu0 0
        %2005 = vmatprep.mubr.bf16.mxu0 0
        %2006 = vmatmul.mubr.bf16.gmra.mxu0 %v1962
        %v2007 = vpop.f32.mrf.mxu0
        %v2008 = vadd.f32 0.0, %v2007
        %v2009 = vpop.f32.mrf.mxu0
        %v2010 = vadd.f32 0.0, %v2009
        %v2011 = vpop.f32.mrf.mxu0
        %v2012 = vpop.f32.mrf.mxu0
        %2013 = vdwg.mxu0
        %2014 = vmatprep.subr.bf16.mxu0 0
        %2015 = vmatpush1.bf16.msra.mxu0 0
        %2016 = vmatprep.subr.bf16.mxu0 0
        %2017 = vmatpush1.bf16.msra.mxu0 0
        %2018 = vmatprep.subr.bf16.mxu0 0
        %2019 = vmatpush1.bf16.msra.mxu0 0
        %2020 = vmatprep.subr.bf16.mxu0 0
        %2021 = vmatpush1.bf16.msra.mxu0 0
        %2022 = vmatprep.subr.bf16.mxu0 0
        %2023 = vmatpush1.bf16.msra.mxu0 0
        %2024 = vmatprep.subr.bf16.mxu0 0
        %2025 = vmatpush1.bf16.msra.mxu0 0
        %2026 = vmatprep.subr.bf16.mxu0 0
        %2027 = vmatpush1.bf16.msra.mxu0 0
        %2028 = vmatprep.subr.bf16.mxu0 0
        %2029 = vmatpush1.bf16.msra.mxu0 %v1971
        %2030 = vmatprep.subr.bf16.mxu0 0
        %2031 = vmatpush2.bf16.msra.mxu0 0
        %2032 = vmatprep.subr.bf16.mxu0 0
        %2033 = vmatpush2.bf16.msra.mxu0 0
        %2034 = vmatprep.subr.bf16.mxu0 0
        %2035 = vmatpush2.bf16.msra.mxu0 0
        %2036 = vmatprep.subr.bf16.mxu0 0
        %2037 = vmatpush2.bf16.msra.mxu0 0
        %2038 = vmatprep.subr.bf16.mxu0 0
        %2039 = vmatpush2.bf16.msra.mxu0 0
        %2040 = vmatprep.subr.bf16.mxu0 0
        %2041 = vmatpush2.bf16.msra.mxu0 0
        %2042 = vmatprep.subr.bf16.mxu0 0
        %2043 = vmatpush2.bf16.msra.mxu0 0
        %2044 = vmatprep.subr.bf16.mxu0 0
        %2045 = vmatpush2.bf16.msra.mxu0 0
        %2046 = vmatprep.mubr.bf16.mxu0 0
        %2047 = vmatmul.mubr.bf16.gmra.mxu0 %v1962
        %v2048 = vpop.f32.mrf.mxu0
        %v2049 = vadd.f32 0.0, %v2048
        %v2050 = vpop.f32.mrf.mxu0
        %v2051 = vpop.f32.mrf.mxu0
        %v2052 = vpop.f32.mrf.mxu0
        %2053 = vdwg.mxu0
        %v2054 = vadd.f32 %v1905, %v2008
        %v2055 = vadd.f32 %v1907, %v2010
        %v2056 = vadd.f32 %v1946, %v2049
        %s2057 = scalar_lea.vmem %s3, 12
        %v2058 = vld [vmem:[%s2057] sm:$0xf]
        %2059 = vrot.lane.b32.xlu0 %v1752, 110
        %v2060 = vpop.permute.xlu0 %2059
        %2061 = vrot.lane.b32.xlu0 %v1753, 110
        %v2062 = vpop.permute.xlu0 %2061
        %2063 = vrot.lane.b32.xlu0 %v1754, 110
        %v2064 = vpop.permute.xlu0 %2063
        %v2065 = vsel %vm918, %v2060, %v2062
        %v2066 = vsel %vm918, %v2062, %v2064
        %v2068 = vsel %vm1763, %v2058, 0
        %v2071 = vsel %vm1767, %v2065, 0
        %v2074 = vsel %vm1767, %v2066, 0
        %v2077 = vsel %vm1767, %v2064, 0
        %2079 = vmatprep.subr.bf16.mxu0 0
        %2080 = vmatpush1.bf16.msra.mxu0 0
        %2081 = vmatprep.subr.bf16.mxu0 0
        %2082 = vmatpush1.bf16.msra.mxu0 0
        %2083 = vmatprep.subr.bf16.mxu0 0
        %2084 = vmatpush1.bf16.msra.mxu0 0
        %2085 = vmatprep.subr.bf16.mxu0 0
        %2086 = vmatpush1.bf16.msra.mxu0 0
        %2087 = vmatprep.subr.bf16.mxu0 0
        %2088 = vmatpush1.bf16.msra.mxu0 0
        %2089 = vmatprep.subr.bf16.mxu0 0
        %2090 = vmatpush1.bf16.msra.mxu0 0
        %2091 = vmatprep.subr.bf16.mxu0 0
        %2092 = vmatpush1.bf16.msra.mxu0 0
        %2093 = vmatprep.subr.bf16.mxu0 %v2074
        %2094 = vmatpush1.bf16.msra.mxu0 %v2071
        %2095 = vmatprep.subr.bf16.mxu0 0
        %2096 = vmatpush2.bf16.msra.mxu0 0
        %2097 = vmatprep.subr.bf16.mxu0 0
        %2098 = vmatpush2.bf16.msra.mxu0 0
        %2099 = vmatprep.subr.bf16.mxu0 0
        %2100 = vmatpush2.bf16.msra.mxu0 0
        %2101 = vmatprep.subr.bf16.mxu0 0
        %2102 = vmatpush2.bf16.msra.mxu0 0
        %2103 = vmatprep.subr.bf16.mxu0 0
        %2104 = vmatpush2.bf16.msra.mxu0 0
        %2105 = vmatprep.subr.bf16.mxu0 0
        %2106 = vmatpush2.bf16.msra.mxu0 0
        %2107 = vmatprep.subr.bf16.mxu0 0
        %2108 = vmatpush2.bf16.msra.mxu0 0
        %2109 = vmatprep.subr.bf16.mxu0 0
        %2110 = vmatpush2.bf16.msra.mxu0 0
        %2111 = vmatprep.mubr.bf16.mxu0 0
        %2112 = vmatmul.mubr.bf16.gmra.mxu0 %v2068
        %v2113 = vpop.f32.mrf.mxu0
        %v2114 = vadd.f32 0.0, %v2113
        %v2115 = vpop.f32.mrf.mxu0
        %v2116 = vadd.f32 0.0, %v2115
        %v2117 = vpop.f32.mrf.mxu0
        %v2118 = vpop.f32.mrf.mxu0
        %2119 = vdwg.mxu0
        %2120 = vmatprep.subr.bf16.mxu0 0
        %2121 = vmatpush1.bf16.msra.mxu0 0
        %2122 = vmatprep.subr.bf16.mxu0 0
        %2123 = vmatpush1.bf16.msra.mxu0 0
        %2124 = vmatprep.subr.bf16.mxu0 0
        %2125 = vmatpush1.bf16.msra.mxu0 0
        %2126 = vmatprep.subr.bf16.mxu0 0
        %2127 = vmatpush1.bf16.msra.mxu0 0
        %2128 = vmatprep.subr.bf16.mxu0 0
        %2129 = vmatpush1.bf16.msra.mxu0 0
        %2130 = vmatprep.subr.bf16.mxu0 0
        %2131 = vmatpush1.bf16.msra.mxu0 0
        %2132 = vmatprep.subr.bf16.mxu0 0
        %2133 = vmatpush1.bf16.msra.mxu0 0
        %2134 = vmatprep.subr.bf16.mxu0 0
        %2135 = vmatpush1.bf16.msra.mxu0 %v2077
        %2136 = vmatprep.subr.bf16.mxu0 0
        %2137 = vmatpush2.bf16.msra.mxu0 0
        %2138 = vmatprep.subr.bf16.mxu0 0
        %2139 = vmatpush2.bf16.msra.mxu0 0
        %2140 = vmatprep.subr.bf16.mxu0 0
        %2141 = vmatpush2.bf16.msra.mxu0 0
        %2142 = vmatprep.subr.bf16.mxu0 0
        %2143 = vmatpush2.bf16.msra.mxu0 0
        %2144 = vmatprep.subr.bf16.mxu0 0
        %2145 = vmatpush2.bf16.msra.mxu0 0
        %2146 = vmatprep.subr.bf16.mxu0 0
        %2147 = vmatpush2.bf16.msra.mxu0 0
        %2148 = vmatprep.subr.bf16.mxu0 0
        %2149 = vmatpush2.bf16.msra.mxu0 0
        %2150 = vmatprep.subr.bf16.mxu0 0
        %2151 = vmatpush2.bf16.msra.mxu0 0
        %2152 = vmatprep.mubr.bf16.mxu0 0
        %2153 = vmatmul.mubr.bf16.gmra.mxu0 %v2068
        %v2154 = vpop.f32.mrf.mxu0
        %v2155 = vadd.f32 0.0, %v2154
        %v2156 = vpop.f32.mrf.mxu0
        %v2157 = vpop.f32.mrf.mxu0
        %v2158 = vpop.f32.mrf.mxu0
        %2159 = vdwg.mxu0
        %v2160 = vadd.f32 %v2054, %v2114
        %v2161 = vadd.f32 %v2055, %v2116
        %v2162 = vadd.f32 %v2056, %v2155
        %s2163 = scalar_lea.vmem %s3, 16
        %v2164 = vld [vmem:[%s2163] sm:$0xf]
        %2165 = vrot.lane.b32.xlu0 %v1752, 109
        %v2166 = vpop.permute.xlu0 %2165
        %2167 = vrot.lane.b32.xlu0 %v1753, 109
        %v2168 = vpop.permute.xlu0 %2167
        %2169 = vrot.lane.b32.xlu0 %v1754, 109
        %v2170 = vpop.permute.xlu0 %2169
        %v2171 = vsel %vm1043, %v2166, %v2168
        %v2172 = vsel %vm1043, %v2168, %v2170
        %v2174 = vsel %vm1763, %v2164, 0
        %v2177 = vsel %vm1767, %v2171, 0
        %v2180 = vsel %vm1767, %v2172, 0
        %v2183 = vsel %vm1767, %v2170, 0
        %2185 = vmatprep.subr.bf16.mxu0 0
        %2186 = vmatpush1.bf16.msra.mxu0 0
        %2187 = vmatprep.subr.bf16.mxu0 0
        %2188 = vmatpush1.bf16.msra.mxu0 0
        %2189 = vmatprep.subr.bf16.mxu0 0
        %2190 = vmatpush1.bf16.msra.mxu0 0
        %2191 = vmatprep.subr.bf16.mxu0 0
        %2192 = vmatpush1.bf16.msra.mxu0 0
        %2193 = vmatprep.subr.bf16.mxu0 0
        %2194 = vmatpush1.bf16.msra.mxu0 0
        %2195 = vmatprep.subr.bf16.mxu0 0
        %2196 = vmatpush1.bf16.msra.mxu0 0
        %2197 = vmatprep.subr.bf16.mxu0 0
        %2198 = vmatpush1.bf16.msra.mxu0 0
        %2199 = vmatprep.subr.bf16.mxu0 %v2180
        %2200 = vmatpush1.bf16.msra.mxu0 %v2177
        %2201 = vmatprep.subr.bf16.mxu0 0
        %2202 = vmatpush2.bf16.msra.mxu0 0
        %2203 = vmatprep.subr.bf16.mxu0 0
        %2204 = vmatpush2.bf16.msra.mxu0 0
        %2205 = vmatprep.subr.bf16.mxu0 0
        %2206 = vmatpush2.bf16.msra.mxu0 0
        %2207 = vmatprep.subr.bf16.mxu0 0
        %2208 = vmatpush2.bf16.msra.mxu0 0
        %2209 = vmatprep.subr.bf16.mxu0 0
        %2210 = vmatpush2.bf16.msra.mxu0 0
        %2211 = vmatprep.subr.bf16.mxu0 0
        %2212 = vmatpush2.bf16.msra.mxu0 0
        %2213 = vmatprep.subr.bf16.mxu0 0
        %2214 = vmatpush2.bf16.msra.mxu0 0
        %2215 = vmatprep.subr.bf16.mxu0 0
        %2216 = vmatpush2.bf16.msra.mxu0 0
        %2217 = vmatprep.mubr.bf16.mxu0 0
        %2218 = vmatmul.mubr.bf16.gmra.mxu0 %v2174
        %v2219 = vpop.f32.mrf.mxu0
        %v2220 = vadd.f32 0.0, %v2219
        %v2221 = vpop.f32.mrf.mxu0
        %v2222 = vadd.f32 0.0, %v2221
        %v2223 = vpop.f32.mrf.mxu0
        %v2224 = vpop.f32.mrf.mxu0
        %2225 = vdwg.mxu0
        %2226 = vmatprep.subr.bf16.mxu0 0
        %2227 = vmatpush1.bf16.msra.mxu0 0
        %2228 = vmatprep.subr.bf16.mxu0 0
        %2229 = vmatpush1.bf16.msra.mxu0 0
        %2230 = vmatprep.subr.bf16.mxu0 0
        %2231 = vmatpush1.bf16.msra.mxu0 0
        %2232 = vmatprep.subr.bf16.mxu0 0
        %2233 = vmatpush1.bf16.msra.mxu0 0
        %2234 = vmatprep.subr.bf16.mxu0 0
        %2235 = vmatpush1.bf16.msra.mxu0 0
        %2236 = vmatprep.subr.bf16.mxu0 0
        %2237 = vmatpush1.bf16.msra.mxu0 0
        %2238 = vmatprep.subr.bf16.mxu0 0
        %2239 = vmatpush1.bf16.msra.mxu0 0
        %2240 = vmatprep.subr.bf16.mxu0 0
        %2241 = vmatpush1.bf16.msra.mxu0 %v2183
        %2242 = vmatprep.subr.bf16.mxu0 0
        %2243 = vmatpush2.bf16.msra.mxu0 0
        %2244 = vmatprep.subr.bf16.mxu0 0
        %2245 = vmatpush2.bf16.msra.mxu0 0
        %2246 = vmatprep.subr.bf16.mxu0 0
        %2247 = vmatpush2.bf16.msra.mxu0 0
        %2248 = vmatprep.subr.bf16.mxu0 0
        %2249 = vmatpush2.bf16.msra.mxu0 0
        %2250 = vmatprep.subr.bf16.mxu0 0
        %2251 = vmatpush2.bf16.msra.mxu0 0
        %2252 = vmatprep.subr.bf16.mxu0 0
        %2253 = vmatpush2.bf16.msra.mxu0 0
        %2254 = vmatprep.subr.bf16.mxu0 0
        %2255 = vmatpush2.bf16.msra.mxu0 0
        %2256 = vmatprep.subr.bf16.mxu0 0
        %2257 = vmatpush2.bf16.msra.mxu0 0
        %2258 = vmatprep.mubr.bf16.mxu0 0
        %2259 = vmatmul.mubr.bf16.gmra.mxu0 %v2174
        %v2260 = vpop.f32.mrf.mxu0
        %v2261 = vadd.f32 0.0, %v2260
        %v2262 = vpop.f32.mrf.mxu0
        %v2263 = vpop.f32.mrf.mxu0
        %v2264 = vpop.f32.mrf.mxu0
        %2265 = vdwg.mxu0
        %v2266 = vadd.f32 %v2160, %v2220
        %v2267 = vadd.f32 %v2161, %v2222
        %v2268 = vadd.f32 %v2162, %v2261
        %s2269 = scalar_lea.vmem %s3, 20
        %v2270 = vld [vmem:[%s2269] sm:$0xf]
        %2271 = vrot.lane.b32.xlu0 %v1752, 108
        %v2272 = vpop.permute.xlu0 %2271
        %2273 = vrot.lane.b32.xlu0 %v1753, 108
        %v2274 = vpop.permute.xlu0 %2273
        %2275 = vrot.lane.b32.xlu0 %v1754, 108
        %v2276 = vpop.permute.xlu0 %2275
        %v2277 = vsel %vm1168, %v2272, %v2274
        %v2278 = vsel %vm1168, %v2274, %v2276
        %v2280 = vsel %vm1763, %v2270, 0
        %v2283 = vsel %vm1767, %v2277, 0
        %v2286 = vsel %vm1767, %v2278, 0
        %v2289 = vsel %vm1767, %v2276, 0
        %2291 = vmatprep.subr.bf16.mxu0 0
        %2292 = vmatpush1.bf16.msra.mxu0 0
        %2293 = vmatprep.subr.bf16.mxu0 0
        %2294 = vmatpush1.bf16.msra.mxu0 0
        %2295 = vmatprep.subr.bf16.mxu0 0
        %2296 = vmatpush1.bf16.msra.mxu0 0
        %2297 = vmatprep.subr.bf16.mxu0 0
        %2298 = vmatpush1.bf16.msra.mxu0 0
        %2299 = vmatprep.subr.bf16.mxu0 0
        %2300 = vmatpush1.bf16.msra.mxu0 0
        %2301 = vmatprep.subr.bf16.mxu0 0
        %2302 = vmatpush1.bf16.msra.mxu0 0
        %2303 = vmatprep.subr.bf16.mxu0 0
        %2304 = vmatpush1.bf16.msra.mxu0 0
        %2305 = vmatprep.subr.bf16.mxu0 %v2286
        %2306 = vmatpush1.bf16.msra.mxu0 %v2283
        %2307 = vmatprep.subr.bf16.mxu0 0
        %2308 = vmatpush2.bf16.msra.mxu0 0
        %2309 = vmatprep.subr.bf16.mxu0 0
        %2310 = vmatpush2.bf16.msra.mxu0 0
        %2311 = vmatprep.subr.bf16.mxu0 0
        %2312 = vmatpush2.bf16.msra.mxu0 0
        %2313 = vmatprep.subr.bf16.mxu0 0
        %2314 = vmatpush2.bf16.msra.mxu0 0
        %2315 = vmatprep.subr.bf16.mxu0 0
        %2316 = vmatpush2.bf16.msra.mxu0 0
        %2317 = vmatprep.subr.bf16.mxu0 0
        %2318 = vmatpush2.bf16.msra.mxu0 0
        %2319 = vmatprep.subr.bf16.mxu0 0
        %2320 = vmatpush2.bf16.msra.mxu0 0
        %2321 = vmatprep.subr.bf16.mxu0 0
        %2322 = vmatpush2.bf16.msra.mxu0 0
        %2323 = vmatprep.mubr.bf16.mxu0 0
        %2324 = vmatmul.mubr.bf16.gmra.mxu0 %v2280
        %v2325 = vpop.f32.mrf.mxu0
        %v2326 = vadd.f32 0.0, %v2325
        %v2327 = vpop.f32.mrf.mxu0
        %v2328 = vadd.f32 0.0, %v2327
        %v2329 = vpop.f32.mrf.mxu0
        %v2330 = vpop.f32.mrf.mxu0
        %2331 = vdwg.mxu0
        %2332 = vmatprep.subr.bf16.mxu0 0
        %2333 = vmatpush1.bf16.msra.mxu0 0
        %2334 = vmatprep.subr.bf16.mxu0 0
        %2335 = vmatpush1.bf16.msra.mxu0 0
        %2336 = vmatprep.subr.bf16.mxu0 0
        %2337 = vmatpush1.bf16.msra.mxu0 0
        %2338 = vmatprep.subr.bf16.mxu0 0
        %2339 = vmatpush1.bf16.msra.mxu0 0
        %2340 = vmatprep.subr.bf16.mxu0 0
        %2341 = vmatpush1.bf16.msra.mxu0 0
        %2342 = vmatprep.subr.bf16.mxu0 0
        %2343 = vmatpush1.bf16.msra.mxu0 0
        %2344 = vmatprep.subr.bf16.mxu0 0
        %2345 = vmatpush1.bf16.msra.mxu0 0
        %2346 = vmatprep.subr.bf16.mxu0 0
        %2347 = vmatpush1.bf16.msra.mxu0 %v2289
        %2348 = vmatprep.subr.bf16.mxu0 0
        %2349 = vmatpush2.bf16.msra.mxu0 0
        %2350 = vmatprep.subr.bf16.mxu0 0
        %2351 = vmatpush2.bf16.msra.mxu0 0
        %2352 = vmatprep.subr.bf16.mxu0 0
        %2353 = vmatpush2.bf16.msra.mxu0 0
        %2354 = vmatprep.subr.bf16.mxu0 0
        %2355 = vmatpush2.bf16.msra.mxu0 0
        %2356 = vmatprep.subr.bf16.mxu0 0
        %2357 = vmatpush2.bf16.msra.mxu0 0
        %2358 = vmatprep.subr.bf16.mxu0 0
        %2359 = vmatpush2.bf16.msra.mxu0 0
        %2360 = vmatprep.subr.bf16.mxu0 0
        %2361 = vmatpush2.bf16.msra.mxu0 0
        %2362 = vmatprep.subr.bf16.mxu0 0
        %2363 = vmatpush2.bf16.msra.mxu0 0
        %2364 = vmatprep.mubr.bf16.mxu0 0
        %2365 = vmatmul.mubr.bf16.gmra.mxu0 %v2280
        %v2366 = vpop.f32.mrf.mxu0
        %v2367 = vadd.f32 0.0, %v2366
        %v2368 = vpop.f32.mrf.mxu0
        %v2369 = vpop.f32.mrf.mxu0
        %v2370 = vpop.f32.mrf.mxu0
        %2371 = vdwg.mxu0
        %v2372 = vadd.f32 %v2266, %v2326
        %v2373 = vadd.f32 %v2267, %v2328
        %v2374 = vadd.f32 %v2268, %v2367
        %s2375 = scalar_lea.vmem %s3, 24
        %v2376 = vld [vmem:[%s2375] sm:$0xf]
        %2377 = vrot.lane.b32.xlu0 %v1752, 92
        %v2378 = vpop.permute.xlu0 %2377
        %2379 = vrot.lane.b32.xlu0 %v1753, 92
        %v2380 = vpop.permute.xlu0 %2379
        %2381 = vrot.lane.b32.xlu0 %v1754, 92
        %v2382 = vpop.permute.xlu0 %2381
        %v2383 = vsel %vm1293, %v2378, %v2380
        %v2384 = vsel %vm1293, %v2380, %v2382
        %v2386 = vsel %vm1763, %v2376, 0
        %v2389 = vsel %vm1767, %v2383, 0
        %v2392 = vsel %vm1767, %v2384, 0
        %v2395 = vsel %vm1767, %v2382, 0
        %2397 = vmatprep.subr.bf16.mxu0 0
        %2398 = vmatpush1.bf16.msra.mxu0 0
        %2399 = vmatprep.subr.bf16.mxu0 0
        %2400 = vmatpush1.bf16.msra.mxu0 0
        %2401 = vmatprep.subr.bf16.mxu0 0
        %2402 = vmatpush1.bf16.msra.mxu0 0
        %2403 = vmatprep.subr.bf16.mxu0 0
        %2404 = vmatpush1.bf16.msra.mxu0 0
        %2405 = vmatprep.subr.bf16.mxu0 0
        %2406 = vmatpush1.bf16.msra.mxu0 0
        %2407 = vmatprep.subr.bf16.mxu0 0
        %2408 = vmatpush1.bf16.msra.mxu0 0
        %2409 = vmatprep.subr.bf16.mxu0 0
        %2410 = vmatpush1.bf16.msra.mxu0 0
        %2411 = vmatprep.subr.bf16.mxu0 %v2392
        %2412 = vmatpush1.bf16.msra.mxu0 %v2389
        %2413 = vmatprep.subr.bf16.mxu0 0
        %2414 = vmatpush2.bf16.msra.mxu0 0
        %2415 = vmatprep.subr.bf16.mxu0 0
        %2416 = vmatpush2.bf16.msra.mxu0 0
        %2417 = vmatprep.subr.bf16.mxu0 0
        %2418 = vmatpush2.bf16.msra.mxu0 0
        %2419 = vmatprep.subr.bf16.mxu0 0
        %2420 = vmatpush2.bf16.msra.mxu0 0
        %2421 = vmatprep.subr.bf16.mxu0 0
        %2422 = vmatpush2.bf16.msra.mxu0 0
        %2423 = vmatprep.subr.bf16.mxu0 0
        %2424 = vmatpush2.bf16.msra.mxu0 0
        %2425 = vmatprep.subr.bf16.mxu0 0
        %2426 = vmatpush2.bf16.msra.mxu0 0
        %2427 = vmatprep.subr.bf16.mxu0 0
        %2428 = vmatpush2.bf16.msra.mxu0 0
        %2429 = vmatprep.mubr.bf16.mxu0 0
        %2430 = vmatmul.mubr.bf16.gmra.mxu0 %v2386
        %v2431 = vpop.f32.mrf.mxu0
        %v2432 = vadd.f32 0.0, %v2431
        %v2433 = vpop.f32.mrf.mxu0
        %v2434 = vadd.f32 0.0, %v2433
        %v2435 = vpop.f32.mrf.mxu0
        %v2436 = vpop.f32.mrf.mxu0
        %2437 = vdwg.mxu0
        %2438 = vmatprep.subr.bf16.mxu0 0
        %2439 = vmatpush1.bf16.msra.mxu0 0
        %2440 = vmatprep.subr.bf16.mxu0 0
        %2441 = vmatpush1.bf16.msra.mxu0 0
        %2442 = vmatprep.subr.bf16.mxu0 0
        %2443 = vmatpush1.bf16.msra.mxu0 0
        %2444 = vmatprep.subr.bf16.mxu0 0
        %2445 = vmatpush1.bf16.msra.mxu0 0
        %2446 = vmatprep.subr.bf16.mxu0 0
        %2447 = vmatpush1.bf16.msra.mxu0 0
        %2448 = vmatprep.subr.bf16.mxu0 0
        %2449 = vmatpush1.bf16.msra.mxu0 0
        %2450 = vmatprep.subr.bf16.mxu0 0
        %2451 = vmatpush1.bf16.msra.mxu0 0
        %2452 = vmatprep.subr.bf16.mxu0 0
        %2453 = vmatpush1.bf16.msra.mxu0 %v2395
        %2454 = vmatprep.subr.bf16.mxu0 0
        %2455 = vmatpush2.bf16.msra.mxu0 0
        %2456 = vmatprep.subr.bf16.mxu0 0
        %2457 = vmatpush2.bf16.msra.mxu0 0
        %2458 = vmatprep.subr.bf16.mxu0 0
        %2459 = vmatpush2.bf16.msra.mxu0 0
        %2460 = vmatprep.subr.bf16.mxu0 0
        %2461 = vmatpush2.bf16.msra.mxu0 0
        %2462 = vmatprep.subr.bf16.mxu0 0
        %2463 = vmatpush2.bf16.msra.mxu0 0
        %2464 = vmatprep.subr.bf16.mxu0 0
        %2465 = vmatpush2.bf16.msra.mxu0 0
        %2466 = vmatprep.subr.bf16.mxu0 0
        %2467 = vmatpush2.bf16.msra.mxu0 0
        %2468 = vmatprep.subr.bf16.mxu0 0
        %2469 = vmatpush2.bf16.msra.mxu0 0
        %2470 = vmatprep.mubr.bf16.mxu0 0
        %2471 = vmatmul.mubr.bf16.gmra.mxu0 %v2386
        %v2472 = vpop.f32.mrf.mxu0
        %v2473 = vadd.f32 0.0, %v2472
        %v2474 = vpop.f32.mrf.mxu0
        %v2475 = vpop.f32.mrf.mxu0
        %v2476 = vpop.f32.mrf.mxu0
        %2477 = vdwg.mxu0
        %v2478 = vadd.f32 %v2372, %v2432
        %v2479 = vadd.f32 %v2373, %v2434
        %v2480 = vadd.f32 %v2374, %v2473
        %s2481 = scalar_lea.vmem %s3, 28
        %v2482 = vld [vmem:[%s2481] sm:$0xf]
        %2483 = vrot.lane.b32.xlu0 %v1752, 91
        %v2484 = vpop.permute.xlu0 %2483
        %2485 = vrot.lane.b32.xlu0 %v1753, 91
        %v2486 = vpop.permute.xlu0 %2485
        %2487 = vrot.lane.b32.xlu0 %v1754, 91
        %v2488 = vpop.permute.xlu0 %2487
        %v2489 = vsel %vm1418, %v2484, %v2486
        %v2490 = vsel %vm1418, %v2486, %v2488
        %v2492 = vsel %vm1763, %v2482, 0
        %v2495 = vsel %vm1767, %v2489, 0
        %v2498 = vsel %vm1767, %v2490, 0
        %v2501 = vsel %vm1767, %v2488, 0
        %2503 = vmatprep.subr.bf16.mxu0 0
        %2504 = vmatpush1.bf16.msra.mxu0 0
        %2505 = vmatprep.subr.bf16.mxu0 0
        %2506 = vmatpush1.bf16.msra.mxu0 0
        %2507 = vmatprep.subr.bf16.mxu0 0
        %2508 = vmatpush1.bf16.msra.mxu0 0
        %2509 = vmatprep.subr.bf16.mxu0 0
        %2510 = vmatpush1.bf16.msra.mxu0 0
        %2511 = vmatprep.subr.bf16.mxu0 0
        %2512 = vmatpush1.bf16.msra.mxu0 0
        %2513 = vmatprep.subr.bf16.mxu0 0
        %2514 = vmatpush1.bf16.msra.mxu0 0
        %2515 = vmatprep.subr.bf16.mxu0 0
        %2516 = vmatpush1.bf16.msra.mxu0 0
        %2517 = vmatprep.subr.bf16.mxu0 %v2498
        %2518 = vmatpush1.bf16.msra.mxu0 %v2495
        %2519 = vmatprep.subr.bf16.mxu0 0
        %2520 = vmatpush2.bf16.msra.mxu0 0
        %2521 = vmatprep.subr.bf16.mxu0 0
        %2522 = vmatpush2.bf16.msra.mxu0 0
        %2523 = vmatprep.subr.bf16.mxu0 0
        %2524 = vmatpush2.bf16.msra.mxu0 0
        %2525 = vmatprep.subr.bf16.mxu0 0
        %2526 = vmatpush2.bf16.msra.mxu0 0
        %2527 = vmatprep.subr.bf16.mxu0 0
        %2528 = vmatpush2.bf16.msra.mxu0 0
        %2529 = vmatprep.subr.bf16.mxu0 0
        %2530 = vmatpush2.bf16.msra.mxu0 0
        %2531 = vmatprep.subr.bf16.mxu0 0
        %2532 = vmatpush2.bf16.msra.mxu0 0
        %2533 = vmatprep.subr.bf16.mxu0 0
        %2534 = vmatpush2.bf16.msra.mxu0 0
        %2535 = vmatprep.mubr.bf16.mxu0 0
        %2536 = vmatmul.mubr.bf16.gmra.mxu0 %v2492
        %v2537 = vpop.f32.mrf.mxu0
        %v2538 = vadd.f32 0.0, %v2537
        %v2539 = vpop.f32.mrf.mxu0
        %v2540 = vadd.f32 0.0, %v2539
        %v2541 = vpop.f32.mrf.mxu0
        %v2542 = vpop.f32.mrf.mxu0
        %2543 = vdwg.mxu0
        %2544 = vmatprep.subr.bf16.mxu0 0
        %2545 = vmatpush1.bf16.msra.mxu0 0
        %2546 = vmatprep.subr.bf16.mxu0 0
        %2547 = vmatpush1.bf16.msra.mxu0 0
        %2548 = vmatprep.subr.bf16.mxu0 0
        %2549 = vmatpush1.bf16.msra.mxu0 0
        %2550 = vmatprep.subr.bf16.mxu0 0
        %2551 = vmatpush1.bf16.msra.mxu0 0
        %2552 = vmatprep.subr.bf16.mxu0 0
        %2553 = vmatpush1.bf16.msra.mxu0 0
        %2554 = vmatprep.subr.bf16.mxu0 0
        %2555 = vmatpush1.bf16.msra.mxu0 0
        %2556 = vmatprep.subr.bf16.mxu0 0
        %2557 = vmatpush1.bf16.msra.mxu0 0
        %2558 = vmatprep.subr.bf16.mxu0 0
        %2559 = vmatpush1.bf16.msra.mxu0 %v2501
        %2560 = vmatprep.subr.bf16.mxu0 0
        %2561 = vmatpush2.bf16.msra.mxu0 0
        %2562 = vmatprep.subr.bf16.mxu0 0
        %2563 = vmatpush2.bf16.msra.mxu0 0
        %2564 = vmatprep.subr.bf16.mxu0 0
        %2565 = vmatpush2.bf16.msra.mxu0 0
        %2566 = vmatprep.subr.bf16.mxu0 0
        %2567 = vmatpush2.bf16.msra.mxu0 0
        %2568 = vmatprep.subr.bf16.mxu0 0
        %2569 = vmatpush2.bf16.msra.mxu0 0
        %2570 = vmatprep.subr.bf16.mxu0 0
        %2571 = vmatpush2.bf16.msra.mxu0 0
        %2572 = vmatprep.subr.bf16.mxu0 0
        %2573 = vmatpush2.bf16.msra.mxu0 0
        %2574 = vmatprep.subr.bf16.mxu0 0
        %2575 = vmatpush2.bf16.msra.mxu0 0
        %2576 = vmatprep.mubr.bf16.mxu0 0
        %2577 = vmatmul.mubr.bf16.gmra.mxu0 %v2492
        %v2578 = vpop.f32.mrf.mxu0
        %v2579 = vadd.f32 0.0, %v2578
        %v2580 = vpop.f32.mrf.mxu0
        %v2581 = vpop.f32.mrf.mxu0
        %v2582 = vpop.f32.mrf.mxu0
        %2583 = vdwg.mxu0
        %v2584 = vadd.f32 %v2478, %v2538
        %v2585 = vadd.f32 %v2479, %v2540
        %v2586 = vadd.f32 %v2480, %v2579
        %s2587 = scalar_lea.vmem %s3, 32
        %v2588 = vld [vmem:[%s2587] sm:$0xf]
        %2589 = vrot.lane.b32.xlu0 %v1752, 90
        %v2590 = vpop.permute.xlu0 %2589
        %2591 = vrot.lane.b32.xlu0 %v1753, 90
        %v2592 = vpop.permute.xlu0 %2591
        %2593 = vrot.lane.b32.xlu0 %v1754, 90
        %v2594 = vpop.permute.xlu0 %2593
        %v2595 = vsel %vm1543, %v2590, %v2592
        %v2596 = vsel %vm1543, %v2592, %v2594
        %v2598 = vsel %vm1763, %v2588, 0
        %v2601 = vsel %vm1767, %v2595, 0
        %v2604 = vsel %vm1767, %v2596, 0
        %v2607 = vsel %vm1767, %v2594, 0
        %2609 = vmatprep.subr.bf16.mxu0 0
        %2610 = vmatpush1.bf16.msra.mxu0 0
        %2611 = vmatprep.subr.bf16.mxu0 0
        %2612 = vmatpush1.bf16.msra.mxu0 0
        %2613 = vmatprep.subr.bf16.mxu0 0
        %2614 = vmatpush1.bf16.msra.mxu0 0
        %2615 = vmatprep.subr.bf16.mxu0 0
        %2616 = vmatpush1.bf16.msra.mxu0 0
        %2617 = vmatprep.subr.bf16.mxu0 0
        %2618 = vmatpush1.bf16.msra.mxu0 0
        %2619 = vmatprep.subr.bf16.mxu0 0
        %2620 = vmatpush1.bf16.msra.mxu0 0
        %2621 = vmatprep.subr.bf16.mxu0 0
        %2622 = vmatpush1.bf16.msra.mxu0 0
        %2623 = vmatprep.subr.bf16.mxu0 %v2604
        %2624 = vmatpush1.bf16.msra.mxu0 %v2601
        %2625 = vmatprep.subr.bf16.mxu0 0
        %2626 = vmatpush2.bf16.msra.mxu0 0
        %2627 = vmatprep.subr.bf16.mxu0 0
        %2628 = vmatpush2.bf16.msra.mxu0 0
        %2629 = vmatprep.subr.bf16.mxu0 0
        %2630 = vmatpush2.bf16.msra.mxu0 0
        %2631 = vmatprep.subr.bf16.mxu0 0
        %2632 = vmatpush2.bf16.msra.mxu0 0
        %2633 = vmatprep.subr.bf16.mxu0 0
        %2634 = vmatpush2.bf16.msra.mxu0 0
        %2635 = vmatprep.subr.bf16.mxu0 0
        %2636 = vmatpush2.bf16.msra.mxu0 0
        %2637 = vmatprep.subr.bf16.mxu0 0
        %2638 = vmatpush2.bf16.msra.mxu0 0
        %2639 = vmatprep.subr.bf16.mxu0 0
        %2640 = vmatpush2.bf16.msra.mxu0 0
        %2641 = vmatprep.mubr.bf16.mxu0 0
        %2642 = vmatmul.mubr.bf16.gmra.mxu0 %v2598
        %v2643 = vpop.f32.mrf.mxu0
        %v2644 = vadd.f32 0.0, %v2643
        %v2645 = vpop.f32.mrf.mxu0
        %v2646 = vadd.f32 0.0, %v2645
        %v2647 = vpop.f32.mrf.mxu0
        %v2648 = vpop.f32.mrf.mxu0
        %2649 = vdwg.mxu0
        %2650 = vmatprep.subr.bf16.mxu0 0
        %2651 = vmatpush1.bf16.msra.mxu0 0
        %2652 = vmatprep.subr.bf16.mxu0 0
        %2653 = vmatpush1.bf16.msra.mxu0 0
        %2654 = vmatprep.subr.bf16.mxu0 0
        %2655 = vmatpush1.bf16.msra.mxu0 0
        %2656 = vmatprep.subr.bf16.mxu0 0
        %2657 = vmatpush1.bf16.msra.mxu0 0
        %2658 = vmatprep.subr.bf16.mxu0 0
        %2659 = vmatpush1.bf16.msra.mxu0 0
        %2660 = vmatprep.subr.bf16.mxu0 0
        %2661 = vmatpush1.bf16.msra.mxu0 0
        %2662 = vmatprep.subr.bf16.mxu0 0
        %2663 = vmatpush1.bf16.msra.mxu0 0
        %2664 = vmatprep.subr.bf16.mxu0 0
        %2665 = vmatpush1.bf16.msra.mxu0 %v2607
        %2666 = vmatprep.subr.bf16.mxu0 0
        %2667 = vmatpush2.bf16.msra.mxu0 0
        %2668 = vmatprep.subr.bf16.mxu0 0
        %2669 = vmatpush2.bf16.msra.mxu0 0
        %2670 = vmatprep.subr.bf16.mxu0 0
        %2671 = vmatpush2.bf16.msra.mxu0 0
        %2672 = vmatprep.subr.bf16.mxu0 0
        %2673 = vmatpush2.bf16.msra.mxu0 0
        %2674 = vmatprep.subr.bf16.mxu0 0
        %2675 = vmatpush2.bf16.msra.mxu0 0
        %2676 = vmatprep.subr.bf16.mxu0 0
        %2677 = vmatpush2.bf16.msra.mxu0 0
        %2678 = vmatprep.subr.bf16.mxu0 0
        %2679 = vmatpush2.bf16.msra.mxu0 0
        %2680 = vmatprep.subr.bf16.mxu0 0
        %2681 = vmatpush2.bf16.msra.mxu0 0
        %2682 = vmatprep.mubr.bf16.mxu0 0
        %2683 = vmatmul.mubr.bf16.gmra.mxu0 %v2598
        %v2684 = vpop.f32.mrf.mxu0
        %v2685 = vadd.f32 0.0, %v2684
        %v2686 = vpop.f32.mrf.mxu0
        %v2687 = vpop.f32.mrf.mxu0
        %v2688 = vpop.f32.mrf.mxu0
        %2689 = vdwg.mxu0
        %v2690 = vadd.f32 %v2584, %v2644
        %v2691 = vadd.f32 %v2585, %v2646
        %v2692 = vadd.f32 %v2586, %v2685
        %v2693 = vld [vmem:[%s4] sm:$0xff]
        %2695 = vset.pattern.permute.xlu0 0
        %2696 = vperm.xlu0 %2695, %v2693
        %v2697 = vpop.permute.xlu0 %2696
        %v2699 = vadd.f32 %v2690, %v2697
        %v2700 = vadd.f32 %v2691, %v2697
        %v2701 = vadd.f32 %v2692, %v2697
        %v2702 = vmul.f32 %v2699, %v1655
        %v2703 = vmul.f32 %v2700, %v1659
        %v2704 = vmul.f32 %v2701, %v1663
        %v2705 = vadd.f32 %v2702, %v2703
        %v2706 = vsel %vm1671, %v2704, 0.0
        %v2707 = vadd.f32 %v2705, %v2706
        %2708 = vadd.xlane.f32.xlu0 %v2707
        %v2709 = vpop.xlane.xlu0 %2708
        %v2710 = vmul.f32 %v2709, 0.00390625
        %v2711 = vsub.f32 %v2699, %v2710
        %v2712 = vsub.f32 %v2700, %v2710
        %v2713 = vsub.f32 %v2701, %v2710
        %v2714 = vmul.f32 %v2711, %v2711
        %v2715 = vmul.f32 %v2712, %v2712
        %v2716 = vmul.f32 %v2713, %v2713
        %v2717 = vmul.f32 %v2714, %v1655
        %v2718 = vmul.f32 %v2715, %v1659
        %v2719 = vmul.f32 %v2716, %v1663
        %v2720 = vadd.f32 %v2717, %v2718
        %v2721 = vsel %vm1671, %v2719, 0.0
        %v2722 = vadd.f32 %v2720, %v2721
        %2723 = vadd.xlane.f32.xlu0 %v2722
        %v2724 = vpop.xlane.xlu0 %2723
        %v2725 = vmul.f32 %v2724, 0.00390625
        %v2726 = vadd.f32 %v2725, 1e-05
        %v2727 = vrsqrt.pop %v2726
        %v2728 = vmul.f32 %v2711, %v2727
        %v2729 = vmul.f32 %v2712, %v2727
        %v2730 = vmul.f32 %v2713, %v2727
        %s2731 = sld [smem:[#allocation5 + $0x1]]
        %vm2732 = vcmp.gt.f32.partialorder %v2728, 0.0
        %vm2733 = vcmp.gt.f32.partialorder %v2729, 0.0
        %vm2734 = vcmp.gt.f32.partialorder %v2730, 0.0
        %v2735 = vstv %s2731
        %v2736 = vmul.f32 %v2735, %v2728
        %v2737 = vmul.f32 %v2735, %v2729
        %v2738 = vmul.f32 %v2735, %v2730
        %v2739 = vsel %vm2732, %v2728, %v2736
        %v2740 = vsel %vm2733, %v2729, %v2737
        %v2741 = vsel %vm2734, %v2730, %v2738
        %v2742 = vmul.f32 %v2739, %v1655
        %v2743 = vmul.f32 %v2740, %v1659
        %v2744 = vmul.f32 %v2741, %v1663
        %v2745 = vpack.c.bf16 %v2742, %v2742
        %v2746 = vpack.c.bf16 %v2743, %v2743
        %v2747 = vpack.c.bf16 %v2744, %v2744
        %2748 = vst.msk [vmem:[#allocation3] sm:$0xf] %vm1714, 0
        %2749 = vst.msk [vmem:[#allocation3 + $0x8] sm:$0xf] %vm1716, 0
        %v2753 = vunpack.c.l.b16 %v2745
        %v2754 = vunpack.c.l.b16 %v2746
        %v2755 = vunpack.c.l.b16 %v2747
        %v2756 = vpack.c.b16 %v2754, %v2753
        %v2757 = vpack.c.b16 %v2755, %v2755
        %2758 = vrot.lane.b32.xlu0 %v2756, 19
        %v2759 = vpop.permute.xlu0 %2758
        %2760 = vrot.lane.b32.xlu0 %v2757, 19
        %v2761 = vpop.permute.xlu0 %2760
        %v2762 = vrot.slane %v2759, 4
        %v2763 = vsel %vm1731, %v2762, %v2759
        %v2764 = vsel %vm1731, %v2762, %v2761
        %2767 = vst.msk [vmem:[#allocation3] sm:$0xff] %vm1738, %v2763
        %2768 = vst.msk [vmem:[#allocation3 + $0x8] sm:$0xf] %vm1740, %v2764
        %v2769 = vld [vmem:[%s5] sm:$0xf]
        %v2770 = vld [vmem:[#allocation3] sm:$0xff]
        %v2771 = vld [vmem:[#allocation3 + $0x8] sm:$0xf]
        %s2772 = scalar_lea.vmem %s5, 4
        %v2773 = vld [vmem:[%s2772] sm:$0xf]
        %v2776 = vunpack.c.l.b16 %v2770
        %v2777 = vunpack.c.h.b16 %v2770
        %v2778 = vunpack.c.l.b16 %v2771
        %v2779 = vpack.c.b16 %v2776, %v2776
        %v2780 = vpack.c.b16 %v2777, %v2777
        %v2781 = vpack.c.b16 %v2778, %v2778
        %2782 = vrot.lane.b32.xlu0 %v2779, 127
        %v2783 = vpop.permute.xlu0 %2782
        %2784 = vrot.lane.b32.xlu0 %v2780, 127
        %v2785 = vpop.permute.xlu0 %2784
        %2786 = vrot.lane.b32.xlu0 %v2781, 127
        %v2787 = vpop.permute.xlu0 %2786
        %v2788 = vsel %vm576, %v2783, %v2785
        %v2789 = vsel %vm576, %v2785, %v2787
        %v2791 = vsel %vm1763, %v2773, 0
        %v2794 = vsel %vm1767, %v2788, 0
        %v2797 = vsel %vm1767, %v2789, 0
        %v2800 = vsel %vm1767, %v2787, 0
        %2802 = vmatprep.subr.bf16.mxu0 0
        %2803 = vmatpush1.bf16.msra.mxu0 0
        %2804 = vmatprep.subr.bf16.mxu0 0
        %2805 = vmatpush1.bf16.msra.mxu0 0
        %2806 = vmatprep.subr.bf16.mxu0 0
        %2807 = vmatpush1.bf16.msra.mxu0 0
        %2808 = vmatprep.subr.bf16.mxu0 0
        %2809 = vmatpush1.bf16.msra.mxu0 0
        %2810 = vmatprep.subr.bf16.mxu0 0
        %2811 = vmatpush1.bf16.msra.mxu0 0
        %2812 = vmatprep.subr.bf16.mxu0 0
        %2813 = vmatpush1.bf16.msra.mxu0 0
        %2814 = vmatprep.subr.bf16.mxu0 0
        %2815 = vmatpush1.bf16.msra.mxu0 0
        %2816 = vmatprep.subr.bf16.mxu0 %v2797
        %2817 = vmatpush1.bf16.msra.mxu0 %v2794
        %2818 = vmatprep.subr.bf16.mxu0 0
        %2819 = vmatpush2.bf16.msra.mxu0 0
        %2820 = vmatprep.subr.bf16.mxu0 0
        %2821 = vmatpush2.bf16.msra.mxu0 0
        %2822 = vmatprep.subr.bf16.mxu0 0
        %2823 = vmatpush2.bf16.msra.mxu0 0
        %2824 = vmatprep.subr.bf16.mxu0 0
        %2825 = vmatpush2.bf16.msra.mxu0 0
        %2826 = vmatprep.subr.bf16.mxu0 0
        %2827 = vmatpush2.bf16.msra.mxu0 0
        %2828 = vmatprep.subr.bf16.mxu0 0
        %2829 = vmatpush2.bf16.msra.mxu0 0
        %2830 = vmatprep.subr.bf16.mxu0 0
        %2831 = vmatpush2.bf16.msra.mxu0 0
        %2832 = vmatprep.subr.bf16.mxu0 0
        %2833 = vmatpush2.bf16.msra.mxu0 0
        %2834 = vmatprep.mubr.bf16.mxu0 0
        %2835 = vmatmul.mubr.bf16.gmra.mxu0 %v2791
        %v2836 = vpop.f32.mrf.mxu0
        %v2837 = vadd.f32 0.0, %v2836
        %v2838 = vpop.f32.mrf.mxu0
        %v2839 = vadd.f32 0.0, %v2838
        %v2840 = vpop.f32.mrf.mxu0
        %v2841 = vpop.f32.mrf.mxu0
        %2842 = vdwg.mxu0
        %2843 = vmatprep.subr.bf16.mxu0 0
        %2844 = vmatpush1.bf16.msra.mxu0 0
        %2845 = vmatprep.subr.bf16.mxu0 0
        %2846 = vmatpush1.bf16.msra.mxu0 0
        %2847 = vmatprep.subr.bf16.mxu0 0
        %2848 = vmatpush1.bf16.msra.mxu0 0
        %2849 = vmatprep.subr.bf16.mxu0 0
        %2850 = vmatpush1.bf16.msra.mxu0 0
        %2851 = vmatprep.subr.bf16.mxu0 0
        %2852 = vmatpush1.bf16.msra.mxu0 0
        %2853 = vmatprep.subr.bf16.mxu0 0
        %2854 = vmatpush1.bf16.msra.mxu0 0
        %2855 = vmatprep.subr.bf16.mxu0 0
        %2856 = vmatpush1.bf16.msra.mxu0 0
        %2857 = vmatprep.subr.bf16.mxu0 0
        %2858 = vmatpush1.bf16.msra.mxu0 %v2800
        %2859 = vmatprep.subr.bf16.mxu0 0
        %2860 = vmatpush2.bf16.msra.mxu0 0
        %2861 = vmatprep.subr.bf16.mxu0 0
        %2862 = vmatpush2.bf16.msra.mxu0 0
        %2863 = vmatprep.subr.bf16.mxu0 0
        %2864 = vmatpush2.bf16.msra.mxu0 0
        %2865 = vmatprep.subr.bf16.mxu0 0
        %2866 = vmatpush2.bf16.msra.mxu0 0
        %2867 = vmatprep.subr.bf16.mxu0 0
        %2868 = vmatpush2.bf16.msra.mxu0 0
        %2869 = vmatprep.subr.bf16.mxu0 0
        %2870 = vmatpush2.bf16.msra.mxu0 0
        %2871 = vmatprep.subr.bf16.mxu0 0
        %2872 = vmatpush2.bf16.msra.mxu0 0
        %2873 = vmatprep.subr.bf16.mxu0 0
        %2874 = vmatpush2.bf16.msra.mxu0 0
        %2875 = vmatprep.mubr.bf16.mxu0 0
        %2876 = vmatmul.mubr.bf16.gmra.mxu0 %v2791
        %v2877 = vpop.f32.mrf.mxu0
        %v2878 = vadd.f32 0.0, %v2877
        %v2879 = vpop.f32.mrf.mxu0
        %v2880 = vpop.f32.mrf.mxu0
        %v2881 = vpop.f32.mrf.mxu0
        %2882 = vdwg.mxu0
        %v2884 = vsel %vm1763, %v2769, 0
        %v2887 = vsel %vm1767, %v2779, 0
        %v2890 = vsel %vm1767, %v2780, 0
        %v2893 = vsel %vm1767, %v2781, 0
        %2895 = vmatprep.subr.bf16.mxu0 0
        %2896 = vmatpush1.bf16.msra.mxu0 0
        %2897 = vmatprep.subr.bf16.mxu0 0
        %2898 = vmatpush1.bf16.msra.mxu0 0
        %2899 = vmatprep.subr.bf16.mxu0 0
        %2900 = vmatpush1.bf16.msra.mxu0 0
        %2901 = vmatprep.subr.bf16.mxu0 0
        %2902 = vmatpush1.bf16.msra.mxu0 0
        %2903 = vmatprep.subr.bf16.mxu0 0
        %2904 = vmatpush1.bf16.msra.mxu0 0
        %2905 = vmatprep.subr.bf16.mxu0 0
        %2906 = vmatpush1.bf16.msra.mxu0 0
        %2907 = vmatprep.subr.bf16.mxu0 0
        %2908 = vmatpush1.bf16.msra.mxu0 0
        %2909 = vmatprep.subr.bf16.mxu0 %v2890
        %2910 = vmatpush1.bf16.msra.mxu0 %v2887
        %2911 = vmatprep.subr.bf16.mxu0 0
        %2912 = vmatpush2.bf16.msra.mxu0 0
        %2913 = vmatprep.subr.bf16.mxu0 0
        %2914 = vmatpush2.bf16.msra.mxu0 0
        %2915 = vmatprep.subr.bf16.mxu0 0
        %2916 = vmatpush2.bf16.msra.mxu0 0
        %2917 = vmatprep.subr.bf16.mxu0 0
        %2918 = vmatpush2.bf16.msra.mxu0 0
        %2919 = vmatprep.subr.bf16.mxu0 0
        %2920 = vmatpush2.bf16.msra.mxu0 0
        %2921 = vmatprep.subr.bf16.mxu0 0
        %2922 = vmatpush2.bf16.msra.mxu0 0
        %2923 = vmatprep.subr.bf16.mxu0 0
        %2924 = vmatpush2.bf16.msra.mxu0 0
        %2925 = vmatprep.subr.bf16.mxu0 0
        %2926 = vmatpush2.bf16.msra.mxu0 0
        %2927 = vmatprep.mubr.bf16.mxu0 0
        %2928 = vmatmul.mubr.bf16.gmra.mxu0 %v2884
        %v2929 = vpop.f32.mrf.mxu0
        %v2930 = vadd.f32 %v2837, %v2929
        %v2931 = vpop.f32.mrf.mxu0
        %v2932 = vadd.f32 %v2839, %v2931
        %v2933 = vpop.f32.mrf.mxu0
        %v2934 = vpop.f32.mrf.mxu0
        %2935 = vdwg.mxu0
        %2936 = vmatprep.subr.bf16.mxu0 0
        %2937 = vmatpush1.bf16.msra.mxu0 0
        %2938 = vmatprep.subr.bf16.mxu0 0
        %2939 = vmatpush1.bf16.msra.mxu0 0
        %2940 = vmatprep.subr.bf16.mxu0 0
        %2941 = vmatpush1.bf16.msra.mxu0 0
        %2942 = vmatprep.subr.bf16.mxu0 0
        %2943 = vmatpush1.bf16.msra.mxu0 0
        %2944 = vmatprep.subr.bf16.mxu0 0
        %2945 = vmatpush1.bf16.msra.mxu0 0
        %2946 = vmatprep.subr.bf16.mxu0 0
        %2947 = vmatpush1.bf16.msra.mxu0 0
        %2948 = vmatprep.subr.bf16.mxu0 0
        %2949 = vmatpush1.bf16.msra.mxu0 0
        %2950 = vmatprep.subr.bf16.mxu0 0
        %2951 = vmatpush1.bf16.msra.mxu0 %v2893
        %2952 = vmatprep.subr.bf16.mxu0 0
        %2953 = vmatpush2.bf16.msra.mxu0 0
        %2954 = vmatprep.subr.bf16.mxu0 0
        %2955 = vmatpush2.bf16.msra.mxu0 0
        %2956 = vmatprep.subr.bf16.mxu0 0
        %2957 = vmatpush2.bf16.msra.mxu0 0
        %2958 = vmatprep.subr.bf16.mxu0 0
        %2959 = vmatpush2.bf16.msra.mxu0 0
        %2960 = vmatprep.subr.bf16.mxu0 0
        %2961 = vmatpush2.bf16.msra.mxu0 0
        %2962 = vmatprep.subr.bf16.mxu0 0
        %2963 = vmatpush2.bf16.msra.mxu0 0
        %2964 = vmatprep.subr.bf16.mxu0 0
        %2965 = vmatpush2.bf16.msra.mxu0 0
        %2966 = vmatprep.subr.bf16.mxu0 0
        %2967 = vmatpush2.bf16.msra.mxu0 0
        %2968 = vmatprep.mubr.bf16.mxu0 0
        %2969 = vmatmul.mubr.bf16.gmra.mxu0 %v2884
        %v2970 = vpop.f32.mrf.mxu0
        %v2971 = vadd.f32 %v2878, %v2970
        %v2972 = vpop.f32.mrf.mxu0
        %v2973 = vpop.f32.mrf.mxu0
        %v2974 = vpop.f32.mrf.mxu0
        %2975 = vdwg.mxu0
        %s2976 = scalar_lea.vmem %s5, 8
        %v2977 = vld [vmem:[%s2976] sm:$0xf]
        %2978 = vrot.lane.b32.xlu0 %v2779, 126
        %v2979 = vpop.permute.xlu0 %2978
        %2980 = vrot.lane.b32.xlu0 %v2780, 126
        %v2981 = vpop.permute.xlu0 %2980
        %2982 = vrot.lane.b32.xlu0 %v2781, 126
        %v2983 = vpop.permute.xlu0 %2982
        %v2984 = vsel %vm793, %v2979, %v2981
        %v2985 = vsel %vm793, %v2981, %v2983
        %v2987 = vsel %vm1763, %v2977, 0
        %v2990 = vsel %vm1767, %v2984, 0
        %v2993 = vsel %vm1767, %v2985, 0
        %v2996 = vsel %vm1767, %v2983, 0
        %2998 = vmatprep.subr.bf16.mxu0 0
        %2999 = vmatpush1.bf16.msra.mxu0 0
        %3000 = vmatprep.subr.bf16.mxu0 0
        %3001 = vmatpush1.bf16.msra.mxu0 0
        %3002 = vmatprep.subr.bf16.mxu0 0
        %3003 = vmatpush1.bf16.msra.mxu0 0
        %3004 = vmatprep.subr.bf16.mxu0 0
        %3005 = vmatpush1.bf16.msra.mxu0 0
        %3006 = vmatprep.subr.bf16.mxu0 0
        %3007 = vmatpush1.bf16.msra.mxu0 0
        %3008 = vmatprep.subr.bf16.mxu0 0
        %3009 = vmatpush1.bf16.msra.mxu0 0
        %3010 = vmatprep.subr.bf16.mxu0 0
        %3011 = vmatpush1.bf16.msra.mxu0 0
        %3012 = vmatprep.subr.bf16.mxu0 %v2993
        %3013 = vmatpush1.bf16.msra.mxu0 %v2990
        %3014 = vmatprep.subr.bf16.mxu0 0
        %3015 = vmatpush2.bf16.msra.mxu0 0
        %3016 = vmatprep.subr.bf16.mxu0 0
        %3017 = vmatpush2.bf16.msra.mxu0 0
        %3018 = vmatprep.subr.bf16.mxu0 0
        %3019 = vmatpush2.bf16.msra.mxu0 0
        %3020 = vmatprep.subr.bf16.mxu0 0
        %3021 = vmatpush2.bf16.msra.mxu0 0
        %3022 = vmatprep.subr.bf16.mxu0 0
        %3023 = vmatpush2.bf16.msra.mxu0 0
        %3024 = vmatprep.subr.bf16.mxu0 0
        %3025 = vmatpush2.bf16.msra.mxu0 0
        %3026 = vmatprep.subr.bf16.mxu0 0
        %3027 = vmatpush2.bf16.msra.mxu0 0
        %3028 = vmatprep.subr.bf16.mxu0 0
        %3029 = vmatpush2.bf16.msra.mxu0 0
        %3030 = vmatprep.mubr.bf16.mxu0 0
        %3031 = vmatmul.mubr.bf16.gmra.mxu0 %v2987
        %v3032 = vpop.f32.mrf.mxu0
        %v3033 = vadd.f32 0.0, %v3032
        %v3034 = vpop.f32.mrf.mxu0
        %v3035 = vadd.f32 0.0, %v3034
        %v3036 = vpop.f32.mrf.mxu0
        %v3037 = vpop.f32.mrf.mxu0
        %3038 = vdwg.mxu0
        %3039 = vmatprep.subr.bf16.mxu0 0
        %3040 = vmatpush1.bf16.msra.mxu0 0
        %3041 = vmatprep.subr.bf16.mxu0 0
        %3042 = vmatpush1.bf16.msra.mxu0 0
        %3043 = vmatprep.subr.bf16.mxu0 0
        %3044 = vmatpush1.bf16.msra.mxu0 0
        %3045 = vmatprep.subr.bf16.mxu0 0
        %3046 = vmatpush1.bf16.msra.mxu0 0
        %3047 = vmatprep.subr.bf16.mxu0 0
        %3048 = vmatpush1.bf16.msra.mxu0 0
        %3049 = vmatprep.subr.bf16.mxu0 0
        %3050 = vmatpush1.bf16.msra.mxu0 0
        %3051 = vmatprep.subr.bf16.mxu0 0
        %3052 = vmatpush1.bf16.msra.mxu0 0
        %3053 = vmatprep.subr.bf16.mxu0 0
        %3054 = vmatpush1.bf16.msra.mxu0 %v2996
        %3055 = vmatprep.subr.bf16.mxu0 0
        %3056 = vmatpush2.bf16.msra.mxu0 0
        %3057 = vmatprep.subr.bf16.mxu0 0
        %3058 = vmatpush2.bf16.msra.mxu0 0
        %3059 = vmatprep.subr.bf16.mxu0 0
        %3060 = vmatpush2.bf16.msra.mxu0 0
        %3061 = vmatprep.subr.bf16.mxu0 0
        %3062 = vmatpush2.bf16.msra.mxu0 0
        %3063 = vmatprep.subr.bf16.mxu0 0
        %3064 = vmatpush2.bf16.msra.mxu0 0
        %3065 = vmatprep.subr.bf16.mxu0 0
        %3066 = vmatpush2.bf16.msra.mxu0 0
        %3067 = vmatprep.subr.bf16.mxu0 0
        %3068 = vmatpush2.bf16.msra.mxu0 0
        %3069 = vmatprep.subr.bf16.mxu0 0
        %3070 = vmatpush2.bf16.msra.mxu0 0
        %3071 = vmatprep.mubr.bf16.mxu0 0
        %3072 = vmatmul.mubr.bf16.gmra.mxu0 %v2987
        %v3073 = vpop.f32.mrf.mxu0
        %v3074 = vadd.f32 0.0, %v3073
        %v3075 = vpop.f32.mrf.mxu0
        %v3076 = vpop.f32.mrf.mxu0
        %v3077 = vpop.f32.mrf.mxu0
        %3078 = vdwg.mxu0
        %v3079 = vadd.f32 %v2930, %v3033
        %v3080 = vadd.f32 %v2932, %v3035
        %v3081 = vadd.f32 %v2971, %v3074
        %s3082 = scalar_lea.vmem %s5, 12
        %v3083 = vld [vmem:[%s3082] sm:$0xf]
        %3084 = vrot.lane.b32.xlu0 %v2779, 110
        %v3085 = vpop.permute.xlu0 %3084
        %3086 = vrot.lane.b32.xlu0 %v2780, 110
        %v3087 = vpop.permute.xlu0 %3086
        %3088 = vrot.lane.b32.xlu0 %v2781, 110
        %v3089 = vpop.permute.xlu0 %3088
        %v3090 = vsel %vm918, %v3085, %v3087
        %v3091 = vsel %vm918, %v3087, %v3089
        %v3093 = vsel %vm1763, %v3083, 0
        %v3096 = vsel %vm1767, %v3090, 0
        %v3099 = vsel %vm1767, %v3091, 0
        %v3102 = vsel %vm1767, %v3089, 0
        %3104 = vmatprep.subr.bf16.mxu0 0
        %3105 = vmatpush1.bf16.msra.mxu0 0
        %3106 = vmatprep.subr.bf16.mxu0 0
        %3107 = vmatpush1.bf16.msra.mxu0 0
        %3108 = vmatprep.subr.bf16.mxu0 0
        %3109 = vmatpush1.bf16.msra.mxu0 0
        %3110 = vmatprep.subr.bf16.mxu0 0
        %3111 = vmatpush1.bf16.msra.mxu0 0
        %3112 = vmatprep.subr.bf16.mxu0 0
        %3113 = vmatpush1.bf16.msra.mxu0 0
        %3114 = vmatprep.subr.bf16.mxu0 0
        %3115 = vmatpush1.bf16.msra.mxu0 0
        %3116 = vmatprep.subr.bf16.mxu0 0
        %3117 = vmatpush1.bf16.msra.mxu0 0
        %3118 = vmatprep.subr.bf16.mxu0 %v3099
        %3119 = vmatpush1.bf16.msra.mxu0 %v3096
        %3120 = vmatprep.subr.bf16.mxu0 0
        %3121 = vmatpush2.bf16.msra.mxu0 0
        %3122 = vmatprep.subr.bf16.mxu0 0
        %3123 = vmatpush2.bf16.msra.mxu0 0
        %3124 = vmatprep.subr.bf16.mxu0 0
        %3125 = vmatpush2.bf16.msra.mxu0 0
        %3126 = vmatprep.subr.bf16.mxu0 0
        %3127 = vmatpush2.bf16.msra.mxu0 0
        %3128 = vmatprep.subr.bf16.mxu0 0
        %3129 = vmatpush2.bf16.msra.mxu0 0
        %3130 = vmatprep.subr.bf16.mxu0 0
        %3131 = vmatpush2.bf16.msra.mxu0 0
        %3132 = vmatprep.subr.bf16.mxu0 0
        %3133 = vmatpush2.bf16.msra.mxu0 0
        %3134 = vmatprep.subr.bf16.mxu0 0
        %3135 = vmatpush2.bf16.msra.mxu0 0
        %3136 = vmatprep.mubr.bf16.mxu0 0
        %3137 = vmatmul.mubr.bf16.gmra.mxu0 %v3093
        %v3138 = vpop.f32.mrf.mxu0
        %v3139 = vadd.f32 0.0, %v3138
        %v3140 = vpop.f32.mrf.mxu0
        %v3141 = vadd.f32 0.0, %v3140
        %v3142 = vpop.f32.mrf.mxu0
        %v3143 = vpop.f32.mrf.mxu0
        %3144 = vdwg.mxu0
        %3145 = vmatprep.subr.bf16.mxu0 0
        %3146 = vmatpush1.bf16.msra.mxu0 0
        %3147 = vmatprep.subr.bf16.mxu0 0
        %3148 = vmatpush1.bf16.msra.mxu0 0
        %3149 = vmatprep.subr.bf16.mxu0 0
        %3150 = vmatpush1.bf16.msra.mxu0 0
        %3151 = vmatprep.subr.bf16.mxu0 0
        %3152 = vmatpush1.bf16.msra.mxu0 0
        %3153 = vmatprep.subr.bf16.mxu0 0
        %3154 = vmatpush1.bf16.msra.mxu0 0
        %3155 = vmatprep.subr.bf16.mxu0 0
        %3156 = vmatpush1.bf16.msra.mxu0 0
        %3157 = vmatprep.subr.bf16.mxu0 0
        %3158 = vmatpush1.bf16.msra.mxu0 0
        %3159 = vmatprep.subr.bf16.mxu0 0
        %3160 = vmatpush1.bf16.msra.mxu0 %v3102
        %3161 = vmatprep.subr.bf16.mxu0 0
        %3162 = vmatpush2.bf16.msra.mxu0 0
        %3163 = vmatprep.subr.bf16.mxu0 0
        %3164 = vmatpush2.bf16.msra.mxu0 0
        %3165 = vmatprep.subr.bf16.mxu0 0
        %3166 = vmatpush2.bf16.msra.mxu0 0
        %3167 = vmatprep.subr.bf16.mxu0 0
        %3168 = vmatpush2.bf16.msra.mxu0 0
        %3169 = vmatprep.subr.bf16.mxu0 0
        %3170 = vmatpush2.bf16.msra.mxu0 0
        %3171 = vmatprep.subr.bf16.mxu0 0
        %3172 = vmatpush2.bf16.msra.mxu0 0
        %3173 = vmatprep.subr.bf16.mxu0 0
        %3174 = vmatpush2.bf16.msra.mxu0 0
        %3175 = vmatprep.subr.bf16.mxu0 0
        %3176 = vmatpush2.bf16.msra.mxu0 0
        %3177 = vmatprep.mubr.bf16.mxu0 0
        %3178 = vmatmul.mubr.bf16.gmra.mxu0 %v3093
        %v3179 = vpop.f32.mrf.mxu0
        %v3180 = vadd.f32 0.0, %v3179
        %v3181 = vpop.f32.mrf.mxu0
        %v3182 = vpop.f32.mrf.mxu0
        %v3183 = vpop.f32.mrf.mxu0
        %3184 = vdwg.mxu0
        %v3185 = vadd.f32 %v3079, %v3139
        %v3186 = vadd.f32 %v3080, %v3141
        %v3187 = vadd.f32 %v3081, %v3180
        %s3188 = scalar_lea.vmem %s5, 16
        %v3189 = vld [vmem:[%s3188] sm:$0xf]
        %3190 = vrot.lane.b32.xlu0 %v2779, 109
        %v3191 = vpop.permute.xlu0 %3190
        %3192 = vrot.lane.b32.xlu0 %v2780, 109
        %v3193 = vpop.permute.xlu0 %3192
        %3194 = vrot.lane.b32.xlu0 %v2781, 109
        %v3195 = vpop.permute.xlu0 %3194
        %v3196 = vsel %vm1043, %v3191, %v3193
        %v3197 = vsel %vm1043, %v3193, %v3195
        %v3199 = vsel %vm1763, %v3189, 0
        %v3202 = vsel %vm1767, %v3196, 0
        %v3205 = vsel %vm1767, %v3197, 0
        %v3208 = vsel %vm1767, %v3195, 0
        %3210 = vmatprep.subr.bf16.mxu0 0
        %3211 = vmatpush1.bf16.msra.mxu0 0
        %3212 = vmatprep.subr.bf16.mxu0 0
        %3213 = vmatpush1.bf16.msra.mxu0 0
        %3214 = vmatprep.subr.bf16.mxu0 0
        %3215 = vmatpush1.bf16.msra.mxu0 0
        %3216 = vmatprep.subr.bf16.mxu0 0
        %3217 = vmatpush1.bf16.msra.mxu0 0
        %3218 = vmatprep.subr.bf16.mxu0 0
        %3219 = vmatpush1.bf16.msra.mxu0 0
        %3220 = vmatprep.subr.bf16.mxu0 0
        %3221 = vmatpush1.bf16.msra.mxu0 0
        %3222 = vmatprep.subr.bf16.mxu0 0
        %3223 = vmatpush1.bf16.msra.mxu0 0
        %3224 = vmatprep.subr.bf16.mxu0 %v3205
        %3225 = vmatpush1.bf16.msra.mxu0 %v3202
        %3226 = vmatprep.subr.bf16.mxu0 0
        %3227 = vmatpush2.bf16.msra.mxu0 0
        %3228 = vmatprep.subr.bf16.mxu0 0
        %3229 = vmatpush2.bf16.msra.mxu0 0
        %3230 = vmatprep.subr.bf16.mxu0 0
        %3231 = vmatpush2.bf16.msra.mxu0 0
        %3232 = vmatprep.subr.bf16.mxu0 0
        %3233 = vmatpush2.bf16.msra.mxu0 0
        %3234 = vmatprep.subr.bf16.mxu0 0
        %3235 = vmatpush2.bf16.msra.mxu0 0
        %3236 = vmatprep.subr.bf16.mxu0 0
        %3237 = vmatpush2.bf16.msra.mxu0 0
        %3238 = vmatprep.subr.bf16.mxu0 0
        %3239 = vmatpush2.bf16.msra.mxu0 0
        %3240 = vmatprep.subr.bf16.mxu0 0
        %3241 = vmatpush2.bf16.msra.mxu0 0
        %3242 = vmatprep.mubr.bf16.mxu0 0
        %3243 = vmatmul.mubr.bf16.gmra.mxu0 %v3199
        %v3244 = vpop.f32.mrf.mxu0
        %v3245 = vadd.f32 0.0, %v3244
        %v3246 = vpop.f32.mrf.mxu0
        %v3247 = vadd.f32 0.0, %v3246
        %v3248 = vpop.f32.mrf.mxu0
        %v3249 = vpop.f32.mrf.mxu0
        %3250 = vdwg.mxu0
        %3251 = vmatprep.subr.bf16.mxu0 0
        %3252 = vmatpush1.bf16.msra.mxu0 0
        %3253 = vmatprep.subr.bf16.mxu0 0
        %3254 = vmatpush1.bf16.msra.mxu0 0
        %3255 = vmatprep.subr.bf16.mxu0 0
        %3256 = vmatpush1.bf16.msra.mxu0 0
        %3257 = vmatprep.subr.bf16.mxu0 0
        %3258 = vmatpush1.bf16.msra.mxu0 0
        %3259 = vmatprep.subr.bf16.mxu0 0
        %3260 = vmatpush1.bf16.msra.mxu0 0
        %3261 = vmatprep.subr.bf16.mxu0 0
        %3262 = vmatpush1.bf16.msra.mxu0 0
        %3263 = vmatprep.subr.bf16.mxu0 0
        %3264 = vmatpush1.bf16.msra.mxu0 0
        %3265 = vmatprep.subr.bf16.mxu0 0
        %3266 = vmatpush1.bf16.msra.mxu0 %v3208
        %3267 = vmatprep.subr.bf16.mxu0 0
        %3268 = vmatpush2.bf16.msra.mxu0 0
        %3269 = vmatprep.subr.bf16.mxu0 0
        %3270 = vmatpush2.bf16.msra.mxu0 0
        %3271 = vmatprep.subr.bf16.mxu0 0
        %3272 = vmatpush2.bf16.msra.mxu0 0
        %3273 = vmatprep.subr.bf16.mxu0 0
        %3274 = vmatpush2.bf16.msra.mxu0 0
        %3275 = vmatprep.subr.bf16.mxu0 0
        %3276 = vmatpush2.bf16.msra.mxu0 0
        %3277 = vmatprep.subr.bf16.mxu0 0
        %3278 = vmatpush2.bf16.msra.mxu0 0
        %3279 = vmatprep.subr.bf16.mxu0 0
        %3280 = vmatpush2.bf16.msra.mxu0 0
        %3281 = vmatprep.subr.bf16.mxu0 0
        %3282 = vmatpush2.bf16.msra.mxu0 0
        %3283 = vmatprep.mubr.bf16.mxu0 0
        %3284 = vmatmul.mubr.bf16.gmra.mxu0 %v3199
        %v3285 = vpop.f32.mrf.mxu0
        %v3286 = vadd.f32 0.0, %v3285
        %v3287 = vpop.f32.mrf.mxu0
        %v3288 = vpop.f32.mrf.mxu0
        %v3289 = vpop.f32.mrf.mxu0
        %3290 = vdwg.mxu0
        %v3291 = vadd.f32 %v3185, %v3245
        %v3292 = vadd.f32 %v3186, %v3247
        %v3293 = vadd.f32 %v3187, %v3286
        %s3294 = scalar_lea.vmem %s5, 20
        %v3295 = vld [vmem:[%s3294] sm:$0xf]
        %3296 = vrot.lane.b32.xlu0 %v2779, 108
        %v3297 = vpop.permute.xlu0 %3296
        %3298 = vrot.lane.b32.xlu0 %v2780, 108
        %v3299 = vpop.permute.xlu0 %3298
        %3300 = vrot.lane.b32.xlu0 %v2781, 108
        %v3301 = vpop.permute.xlu0 %3300
        %v3302 = vsel %vm1168, %v3297, %v3299
        %v3303 = vsel %vm1168, %v3299, %v3301
        %v3305 = vsel %vm1763, %v3295, 0
        %v3308 = vsel %vm1767, %v3302, 0
        %v3311 = vsel %vm1767, %v3303, 0
        %v3314 = vsel %vm1767, %v3301, 0
        %3316 = vmatprep.subr.bf16.mxu0 0
        %3317 = vmatpush1.bf16.msra.mxu0 0
        %3318 = vmatprep.subr.bf16.mxu0 0
        %3319 = vmatpush1.bf16.msra.mxu0 0
        %3320 = vmatprep.subr.bf16.mxu0 0
        %3321 = vmatpush1.bf16.msra.mxu0 0
        %3322 = vmatprep.subr.bf16.mxu0 0
        %3323 = vmatpush1.bf16.msra.mxu0 0
        %3324 = vmatprep.subr.bf16.mxu0 0
        %3325 = vmatpush1.bf16.msra.mxu0 0
        %3326 = vmatprep.subr.bf16.mxu0 0
        %3327 = vmatpush1.bf16.msra.mxu0 0
        %3328 = vmatprep.subr.bf16.mxu0 0
        %3329 = vmatpush1.bf16.msra.mxu0 0
        %3330 = vmatprep.subr.bf16.mxu0 %v3311
        %3331 = vmatpush1.bf16.msra.mxu0 %v3308
        %3332 = vmatprep.subr.bf16.mxu0 0
        %3333 = vmatpush2.bf16.msra.mxu0 0
        %3334 = vmatprep.subr.bf16.mxu0 0
        %3335 = vmatpush2.bf16.msra.mxu0 0
        %3336 = vmatprep.subr.bf16.mxu0 0
        %3337 = vmatpush2.bf16.msra.mxu0 0
        %3338 = vmatprep.subr.bf16.mxu0 0
        %3339 = vmatpush2.bf16.msra.mxu0 0
        %3340 = vmatprep.subr.bf16.mxu0 0
        %3341 = vmatpush2.bf16.msra.mxu0 0
        %3342 = vmatprep.subr.bf16.mxu0 0
        %3343 = vmatpush2.bf16.msra.mxu0 0
        %3344 = vmatprep.subr.bf16.mxu0 0
        %3345 = vmatpush2.bf16.msra.mxu0 0
        %3346 = vmatprep.subr.bf16.mxu0 0
        %3347 = vmatpush2.bf16.msra.mxu0 0
        %3348 = vmatprep.mubr.bf16.mxu0 0
        %3349 = vmatmul.mubr.bf16.gmra.mxu0 %v3305
        %v3350 = vpop.f32.mrf.mxu0
        %v3351 = vadd.f32 0.0, %v3350
        %v3352 = vpop.f32.mrf.mxu0
        %v3353 = vadd.f32 0.0, %v3352
        %v3354 = vpop.f32.mrf.mxu0
        %v3355 = vpop.f32.mrf.mxu0
        %3356 = vdwg.mxu0
        %3357 = vmatprep.subr.bf16.mxu0 0
        %3358 = vmatpush1.bf16.msra.mxu0 0
        %3359 = vmatprep.subr.bf16.mxu0 0
        %3360 = vmatpush1.bf16.msra.mxu0 0
        %3361 = vmatprep.subr.bf16.mxu0 0
        %3362 = vmatpush1.bf16.msra.mxu0 0
        %3363 = vmatprep.subr.bf16.mxu0 0
        %3364 = vmatpush1.bf16.msra.mxu0 0
        %3365 = vmatprep.subr.bf16.mxu0 0
        %3366 = vmatpush1.bf16.msra.mxu0 0
        %3367 = vmatprep.subr.bf16.mxu0 0
        %3368 = vmatpush1.bf16.msra.mxu0 0
        %3369 = vmatprep.subr.bf16.mxu0 0
        %3370 = vmatpush1.bf16.msra.mxu0 0
        %3371 = vmatprep.subr.bf16.mxu0 0
        %3372 = vmatpush1.bf16.msra.mxu0 %v3314
        %3373 = vmatprep.subr.bf16.mxu0 0
        %3374 = vmatpush2.bf16.msra.mxu0 0
        %3375 = vmatprep.subr.bf16.mxu0 0
        %3376 = vmatpush2.bf16.msra.mxu0 0
        %3377 = vmatprep.subr.bf16.mxu0 0
        %3378 = vmatpush2.bf16.msra.mxu0 0
        %3379 = vmatprep.subr.bf16.mxu0 0
        %3380 = vmatpush2.bf16.msra.mxu0 0
        %3381 = vmatprep.subr.bf16.mxu0 0
        %3382 = vmatpush2.bf16.msra.mxu0 0
        %3383 = vmatprep.subr.bf16.mxu0 0
        %3384 = vmatpush2.bf16.msra.mxu0 0
        %3385 = vmatprep.subr.bf16.mxu0 0
        %3386 = vmatpush2.bf16.msra.mxu0 0
        %3387 = vmatprep.subr.bf16.mxu0 0
        %3388 = vmatpush2.bf16.msra.mxu0 0
        %3389 = vmatprep.mubr.bf16.mxu0 0
        %3390 = vmatmul.mubr.bf16.gmra.mxu0 %v3305
        %v3391 = vpop.f32.mrf.mxu0
        %v3392 = vadd.f32 0.0, %v3391
        %v3393 = vpop.f32.mrf.mxu0
        %v3394 = vpop.f32.mrf.mxu0
        %v3395 = vpop.f32.mrf.mxu0
        %3396 = vdwg.mxu0
        %v3397 = vadd.f32 %v3291, %v3351
        %v3398 = vadd.f32 %v3292, %v3353
        %v3399 = vadd.f32 %v3293, %v3392
        %s3400 = scalar_lea.vmem %s5, 24
        %v3401 = vld [vmem:[%s3400] sm:$0xf]
        %3402 = vrot.lane.b32.xlu0 %v2779, 92
        %v3403 = vpop.permute.xlu0 %3402
        %3404 = vrot.lane.b32.xlu0 %v2780, 92
        %v3405 = vpop.permute.xlu0 %3404
        %3406 = vrot.lane.b32.xlu0 %v2781, 92
        %v3407 = vpop.permute.xlu0 %3406
        %v3408 = vsel %vm1293, %v3403, %v3405
        %v3409 = vsel %vm1293, %v3405, %v3407
        %v3411 = vsel %vm1763, %v3401, 0
        %v3414 = vsel %vm1767, %v3408, 0
        %v3417 = vsel %vm1767, %v3409, 0
        %v3420 = vsel %vm1767, %v3407, 0
        %3422 = vmatprep.subr.bf16.mxu0 0
        %3423 = vmatpush1.bf16.msra.mxu0 0
        %3424 = vmatprep.subr.bf16.mxu0 0
        %3425 = vmatpush1.bf16.msra.mxu0 0
        %3426 = vmatprep.subr.bf16.mxu0 0
        %3427 = vmatpush1.bf16.msra.mxu0 0
        %3428 = vmatprep.subr.bf16.mxu0 0
        %3429 = vmatpush1.bf16.msra.mxu0 0
        %3430 = vmatprep.subr.bf16.mxu0 0
        %3431 = vmatpush1.bf16.msra.mxu0 0
        %3432 = vmatprep.subr.bf16.mxu0 0
        %3433 = vmatpush1.bf16.msra.mxu0 0
        %3434 = vmatprep.subr.bf16.mxu0 0
        %3435 = vmatpush1.bf16.msra.mxu0 0
        %3436 = vmatprep.subr.bf16.mxu0 %v3417
        %3437 = vmatpush1.bf16.msra.mxu0 %v3414
        %3438 = vmatprep.subr.bf16.mxu0 0
        %3439 = vmatpush2.bf16.msra.mxu0 0
        %3440 = vmatprep.subr.bf16.mxu0 0
        %3441 = vmatpush2.bf16.msra.mxu0 0
        %3442 = vmatprep.subr.bf16.mxu0 0
        %3443 = vmatpush2.bf16.msra.mxu0 0
        %3444 = vmatprep.subr.bf16.mxu0 0
        %3445 = vmatpush2.bf16.msra.mxu0 0
        %3446 = vmatprep.subr.bf16.mxu0 0
        %3447 = vmatpush2.bf16.msra.mxu0 0
        %3448 = vmatprep.subr.bf16.mxu0 0
        %3449 = vmatpush2.bf16.msra.mxu0 0
        %3450 = vmatprep.subr.bf16.mxu0 0
        %3451 = vmatpush2.bf16.msra.mxu0 0
        %3452 = vmatprep.subr.bf16.mxu0 0
        %3453 = vmatpush2.bf16.msra.mxu0 0
        %3454 = vmatprep.mubr.bf16.mxu0 0
        %3455 = vmatmul.mubr.bf16.gmra.mxu0 %v3411
        %v3456 = vpop.f32.mrf.mxu0
        %v3457 = vadd.f32 0.0, %v3456
        %v3458 = vpop.f32.mrf.mxu0
        %v3459 = vadd.f32 0.0, %v3458
        %v3460 = vpop.f32.mrf.mxu0
        %v3461 = vpop.f32.mrf.mxu0
        %3462 = vdwg.mxu0
        %3463 = vmatprep.subr.bf16.mxu0 0
        %3464 = vmatpush1.bf16.msra.mxu0 0
        %3465 = vmatprep.subr.bf16.mxu0 0
        %3466 = vmatpush1.bf16.msra.mxu0 0
        %3467 = vmatprep.subr.bf16.mxu0 0
        %3468 = vmatpush1.bf16.msra.mxu0 0
        %3469 = vmatprep.subr.bf16.mxu0 0
        %3470 = vmatpush1.bf16.msra.mxu0 0
        %3471 = vmatprep.subr.bf16.mxu0 0
        %3472 = vmatpush1.bf16.msra.mxu0 0
        %3473 = vmatprep.subr.bf16.mxu0 0
        %3474 = vmatpush1.bf16.msra.mxu0 0
        %3475 = vmatprep.subr.bf16.mxu0 0
        %3476 = vmatpush1.bf16.msra.mxu0 0
        %3477 = vmatprep.subr.bf16.mxu0 0
        %3478 = vmatpush1.bf16.msra.mxu0 %v3420
        %3479 = vmatprep.subr.bf16.mxu0 0
        %3480 = vmatpush2.bf16.msra.mxu0 0
        %3481 = vmatprep.subr.bf16.mxu0 0
        %3482 = vmatpush2.bf16.msra.mxu0 0
        %3483 = vmatprep.subr.bf16.mxu0 0
        %3484 = vmatpush2.bf16.msra.mxu0 0
        %3485 = vmatprep.subr.bf16.mxu0 0
        %3486 = vmatpush2.bf16.msra.mxu0 0
        %3487 = vmatprep.subr.bf16.mxu0 0
        %3488 = vmatpush2.bf16.msra.mxu0 0
        %3489 = vmatprep.subr.bf16.mxu0 0
        %3490 = vmatpush2.bf16.msra.mxu0 0
        %3491 = vmatprep.subr.bf16.mxu0 0
        %3492 = vmatpush2.bf16.msra.mxu0 0
        %3493 = vmatprep.subr.bf16.mxu0 0
        %3494 = vmatpush2.bf16.msra.mxu0 0
        %3495 = vmatprep.mubr.bf16.mxu0 0
        %3496 = vmatmul.mubr.bf16.gmra.mxu0 %v3411
        %v3497 = vpop.f32.mrf.mxu0
        %v3498 = vadd.f32 0.0, %v3497
        %v3499 = vpop.f32.mrf.mxu0
        %v3500 = vpop.f32.mrf.mxu0
        %v3501 = vpop.f32.mrf.mxu0
        %3502 = vdwg.mxu0
        %v3503 = vadd.f32 %v3397, %v3457
        %v3504 = vadd.f32 %v3398, %v3459
        %v3505 = vadd.f32 %v3399, %v3498
        %s3506 = scalar_lea.vmem %s5, 28
        %v3507 = vld [vmem:[%s3506] sm:$0xf]
        %3508 = vrot.lane.b32.xlu0 %v2779, 91
        %v3509 = vpop.permute.xlu0 %3508
        %3510 = vrot.lane.b32.xlu0 %v2780, 91
        %v3511 = vpop.permute.xlu0 %3510
        %3512 = vrot.lane.b32.xlu0 %v2781, 91
        %v3513 = vpop.permute.xlu0 %3512
        %v3514 = vsel %vm1418, %v3509, %v3511
        %v3515 = vsel %vm1418, %v3511, %v3513
        %v3517 = vsel %vm1763, %v3507, 0
        %v3520 = vsel %vm1767, %v3514, 0
        %v3523 = vsel %vm1767, %v3515, 0
        %v3526 = vsel %vm1767, %v3513, 0
        %3528 = vmatprep.subr.bf16.mxu0 0
        %3529 = vmatpush1.bf16.msra.mxu0 0
        %3530 = vmatprep.subr.bf16.mxu0 0
        %3531 = vmatpush1.bf16.msra.mxu0 0
        %3532 = vmatprep.subr.bf16.mxu0 0
        %3533 = vmatpush1.bf16.msra.mxu0 0
        %3534 = vmatprep.subr.bf16.mxu0 0
        %3535 = vmatpush1.bf16.msra.mxu0 0
        %3536 = vmatprep.subr.bf16.mxu0 0
        %3537 = vmatpush1.bf16.msra.mxu0 0
        %3538 = vmatprep.subr.bf16.mxu0 0
        %3539 = vmatpush1.bf16.msra.mxu0 0
        %3540 = vmatprep.subr.bf16.mxu0 0
        %3541 = vmatpush1.bf16.msra.mxu0 0
        %3542 = vmatprep.subr.bf16.mxu0 %v3523
        %3543 = vmatpush1.bf16.msra.mxu0 %v3520
        %3544 = vmatprep.subr.bf16.mxu0 0
        %3545 = vmatpush2.bf16.msra.mxu0 0
        %3546 = vmatprep.subr.bf16.mxu0 0
        %3547 = vmatpush2.bf16.msra.mxu0 0
        %3548 = vmatprep.subr.bf16.mxu0 0
        %3549 = vmatpush2.bf16.msra.mxu0 0
        %3550 = vmatprep.subr.bf16.mxu0 0
        %3551 = vmatpush2.bf16.msra.mxu0 0
        %3552 = vmatprep.subr.bf16.mxu0 0
        %3553 = vmatpush2.bf16.msra.mxu0 0
        %3554 = vmatprep.subr.bf16.mxu0 0
        %3555 = vmatpush2.bf16.msra.mxu0 0
        %3556 = vmatprep.subr.bf16.mxu0 0
        %3557 = vmatpush2.bf16.msra.mxu0 0
        %3558 = vmatprep.subr.bf16.mxu0 0
        %3559 = vmatpush2.bf16.msra.mxu0 0
        %3560 = vmatprep.mubr.bf16.mxu0 0
        %3561 = vmatmul.mubr.bf16.gmra.mxu0 %v3517
        %v3562 = vpop.f32.mrf.mxu0
        %v3563 = vadd.f32 0.0, %v3562
        %v3564 = vpop.f32.mrf.mxu0
        %v3565 = vadd.f32 0.0, %v3564
        %v3566 = vpop.f32.mrf.mxu0
        %v3567 = vpop.f32.mrf.mxu0
        %3568 = vdwg.mxu0
        %3569 = vmatprep.subr.bf16.mxu0 0
        %3570 = vmatpush1.bf16.msra.mxu0 0
        %3571 = vmatprep.subr.bf16.mxu0 0
        %3572 = vmatpush1.bf16.msra.mxu0 0
        %3573 = vmatprep.subr.bf16.mxu0 0
        %3574 = vmatpush1.bf16.msra.mxu0 0
        %3575 = vmatprep.subr.bf16.mxu0 0
        %3576 = vmatpush1.bf16.msra.mxu0 0
        %3577 = vmatprep.subr.bf16.mxu0 0
        %3578 = vmatpush1.bf16.msra.mxu0 0
        %3579 = vmatprep.subr.bf16.mxu0 0
        %3580 = vmatpush1.bf16.msra.mxu0 0
        %3581 = vmatprep.subr.bf16.mxu0 0
        %3582 = vmatpush1.bf16.msra.mxu0 0
        %3583 = vmatprep.subr.bf16.mxu0 0
        %3584 = vmatpush1.bf16.msra.mxu0 %v3526
        %3585 = vmatprep.subr.bf16.mxu0 0
        %3586 = vmatpush2.bf16.msra.mxu0 0
        %3587 = vmatprep.subr.bf16.mxu0 0
        %3588 = vmatpush2.bf16.msra.mxu0 0
        %3589 = vmatprep.subr.bf16.mxu0 0
        %3590 = vmatpush2.bf16.msra.mxu0 0
        %3591 = vmatprep.subr.bf16.mxu0 0
        %3592 = vmatpush2.bf16.msra.mxu0 0
        %3593 = vmatprep.subr.bf16.mxu0 0
        %3594 = vmatpush2.bf16.msra.mxu0 0
        %3595 = vmatprep.subr.bf16.mxu0 0
        %3596 = vmatpush2.bf16.msra.mxu0 0
        %3597 = vmatprep.subr.bf16.mxu0 0
        %3598 = vmatpush2.bf16.msra.mxu0 0
        %3599 = vmatprep.subr.bf16.mxu0 0
        %3600 = vmatpush2.bf16.msra.mxu0 0
        %3601 = vmatprep.mubr.bf16.mxu0 0
        %3602 = vmatmul.mubr.bf16.gmra.mxu0 %v3517
        %v3603 = vpop.f32.mrf.mxu0
        %v3604 = vadd.f32 0.0, %v3603
        %v3605 = vpop.f32.mrf.mxu0
        %v3606 = vpop.f32.mrf.mxu0
        %v3607 = vpop.f32.mrf.mxu0
        %3608 = vdwg.mxu0
        %v3609 = vadd.f32 %v3503, %v3563
        %v3610 = vadd.f32 %v3504, %v3565
        %v3611 = vadd.f32 %v3505, %v3604
        %s3612 = scalar_lea.vmem %s5, 32
        %v3613 = vld [vmem:[%s3612] sm:$0xf]
        %3614 = vrot.lane.b32.xlu0 %v2779, 90
        %v3615 = vpop.permute.xlu0 %3614
        %3616 = vrot.lane.b32.xlu0 %v2780, 90
        %v3617 = vpop.permute.xlu0 %3616
        %3618 = vrot.lane.b32.xlu0 %v2781, 90
        %v3619 = vpop.permute.xlu0 %3618
        %v3620 = vsel %vm1543, %v3615, %v3617
        %v3621 = vsel %vm1543, %v3617, %v3619
        %v3623 = vsel %vm1763, %v3613, 0
        %v3626 = vsel %vm1767, %v3620, 0
        %v3629 = vsel %vm1767, %v3621, 0
        %v3632 = vsel %vm1767, %v3619, 0
        %3634 = vmatprep.subr.bf16.mxu0 0
        %3635 = vmatpush1.bf16.msra.mxu0 0
        %3636 = vmatprep.subr.bf16.mxu0 0
        %3637 = vmatpush1.bf16.msra.mxu0 0
        %3638 = vmatprep.subr.bf16.mxu0 0
        %3639 = vmatpush1.bf16.msra.mxu0 0
        %3640 = vmatprep.subr.bf16.mxu0 0
        %3641 = vmatpush1.bf16.msra.mxu0 0
        %3642 = vmatprep.subr.bf16.mxu0 0
        %3643 = vmatpush1.bf16.msra.mxu0 0
        %3644 = vmatprep.subr.bf16.mxu0 0
        %3645 = vmatpush1.bf16.msra.mxu0 0
        %3646 = vmatprep.subr.bf16.mxu0 0
        %3647 = vmatpush1.bf16.msra.mxu0 0
        %3648 = vmatprep.subr.bf16.mxu0 %v3629
        %3649 = vmatpush1.bf16.msra.mxu0 %v3626
        %3650 = vmatprep.subr.bf16.mxu0 0
        %3651 = vmatpush2.bf16.msra.mxu0 0
        %3652 = vmatprep.subr.bf16.mxu0 0
        %3653 = vmatpush2.bf16.msra.mxu0 0
        %3654 = vmatprep.subr.bf16.mxu0 0
        %3655 = vmatpush2.bf16.msra.mxu0 0
        %3656 = vmatprep.subr.bf16.mxu0 0
        %3657 = vmatpush2.bf16.msra.mxu0 0
        %3658 = vmatprep.subr.bf16.mxu0 0
        %3659 = vmatpush2.bf16.msra.mxu0 0
        %3660 = vmatprep.subr.bf16.mxu0 0
        %3661 = vmatpush2.bf16.msra.mxu0 0
        %3662 = vmatprep.subr.bf16.mxu0 0
        %3663 = vmatpush2.bf16.msra.mxu0 0
        %3664 = vmatprep.subr.bf16.mxu0 0
        %3665 = vmatpush2.bf16.msra.mxu0 0
        %3666 = vmatprep.mubr.bf16.mxu0 0
        %3667 = vmatmul.mubr.bf16.gmra.mxu0 %v3623
        %v3668 = vpop.f32.mrf.mxu0
        %v3669 = vadd.f32 0.0, %v3668
        %v3670 = vpop.f32.mrf.mxu0
        %v3671 = vadd.f32 0.0, %v3670
        %v3672 = vpop.f32.mrf.mxu0
        %v3673 = vpop.f32.mrf.mxu0
        %3674 = vdwg.mxu0
        %3675 = vmatprep.subr.bf16.mxu0 0
        %3676 = vmatpush1.bf16.msra.mxu0 0
        %3677 = vmatprep.subr.bf16.mxu0 0
        %3678 = vmatpush1.bf16.msra.mxu0 0
        %3679 = vmatprep.subr.bf16.mxu0 0
        %3680 = vmatpush1.bf16.msra.mxu0 0
        %3681 = vmatprep.subr.bf16.mxu0 0
        %3682 = vmatpush1.bf16.msra.mxu0 0
        %3683 = vmatprep.subr.bf16.mxu0 0
        %3684 = vmatpush1.bf16.msra.mxu0 0
        %3685 = vmatprep.subr.bf16.mxu0 0
        %3686 = vmatpush1.bf16.msra.mxu0 0
        %3687 = vmatprep.subr.bf16.mxu0 0
        %3688 = vmatpush1.bf16.msra.mxu0 0
        %3689 = vmatprep.subr.bf16.mxu0 0
        %3690 = vmatpush1.bf16.msra.mxu0 %v3632
        %3691 = vmatprep.subr.bf16.mxu0 0
        %3692 = vmatpush2.bf16.msra.mxu0 0
        %3693 = vmatprep.subr.bf16.mxu0 0
        %3694 = vmatpush2.bf16.msra.mxu0 0
        %3695 = vmatprep.subr.bf16.mxu0 0
        %3696 = vmatpush2.bf16.msra.mxu0 0
        %3697 = vmatprep.subr.bf16.mxu0 0
        %3698 = vmatpush2.bf16.msra.mxu0 0
        %3699 = vmatprep.subr.bf16.mxu0 0
        %3700 = vmatpush2.bf16.msra.mxu0 0
        %3701 = vmatprep.subr.bf16.mxu0 0
        %3702 = vmatpush2.bf16.msra.mxu0 0
        %3703 = vmatprep.subr.bf16.mxu0 0
        %3704 = vmatpush2.bf16.msra.mxu0 0
        %3705 = vmatprep.subr.bf16.mxu0 0
        %3706 = vmatpush2.bf16.msra.mxu0 0
        %3707 = vmatprep.mubr.bf16.mxu0 0
        %3708 = vmatmul.mubr.bf16.gmra.mxu0 %v3623
        %v3709 = vpop.f32.mrf.mxu0
        %v3710 = vadd.f32 0.0, %v3709
        %v3711 = vpop.f32.mrf.mxu0
        %v3712 = vpop.f32.mrf.mxu0
        %v3713 = vpop.f32.mrf.mxu0
        %3714 = vdwg.mxu0
        %v3715 = vadd.f32 %v3609, %v3669
        %v3716 = vadd.f32 %v3610, %v3671
        %v3717 = vadd.f32 %v3611, %v3710
        %v3718 = vld [vmem:[%s6] sm:$0xff]
        %3720 = vset.pattern.permute.xlu0 0
        %3721 = vperm.xlu0 %3720, %v3718
        %v3722 = vpop.permute.xlu0 %3721
        %v3724 = vadd.f32 %v3715, %v3722
        %v3725 = vadd.f32 %v3716, %v3722
        %v3726 = vadd.f32 %v3717, %v3722
        %v3727 = vmul.f32 %v3724, %v1655
        %v3728 = vmul.f32 %v3725, %v1659
        %v3729 = vmul.f32 %v3726, %v1663
        %v3730 = vadd.f32 %v3727, %v3728
        %v3731 = vsel %vm1671, %v3729, 0.0
        %v3732 = vadd.f32 %v3730, %v3731
        %3733 = vadd.xlane.f32.xlu0 %v3732
        %v3734 = vpop.xlane.xlu0 %3733
        %v3735 = vmul.f32 %v3734, 0.00390625
        %v3736 = vsub.f32 %v3724, %v3735
        %v3737 = vsub.f32 %v3725, %v3735
        %v3738 = vsub.f32 %v3726, %v3735
        %v3739 = vmul.f32 %v3736, %v3736
        %v3740 = vmul.f32 %v3737, %v3737
        %v3741 = vmul.f32 %v3738, %v3738
        %v3742 = vmul.f32 %v3739, %v1655
        %v3743 = vmul.f32 %v3740, %v1659
        %v3744 = vmul.f32 %v3741, %v1663
        %v3745 = vadd.f32 %v3742, %v3743
        %v3746 = vsel %vm1671, %v3744, 0.0
        %v3747 = vadd.f32 %v3745, %v3746
        %3748 = vadd.xlane.f32.xlu0 %v3747
        %v3749 = vpop.xlane.xlu0 %3748
        %v3750 = vmul.f32 %v3749, 0.00390625
        %v3751 = vadd.f32 %v3750, 1e-05
        %v3752 = vrsqrt.pop %v3751
        %v3753 = vmul.f32 %v3736, %v3752
        %v3754 = vmul.f32 %v3737, %v3752
        %v3755 = vmul.f32 %v3738, %v3752
        %s3756 = sld [smem:[#allocation5 + $0x2]]
        %vm3757 = vcmp.gt.f32.partialorder %v3753, 0.0
        %vm3758 = vcmp.gt.f32.partialorder %v3754, 0.0
        %vm3759 = vcmp.gt.f32.partialorder %v3755, 0.0
        %v3760 = vstv %s3756
        %v3761 = vmul.f32 %v3760, %v3753
        %v3762 = vmul.f32 %v3760, %v3754
        %v3763 = vmul.f32 %v3760, %v3755
        %v3764 = vsel %vm3757, %v3753, %v3761
        %v3765 = vsel %vm3758, %v3754, %v3762
        %v3766 = vsel %vm3759, %v3755, %v3763
        %v3767 = vld [vmem:[#allocation2] sm:$0xff]
        %v3768 = vld [vmem:[#allocation2 + $0x8] sm:$0xf]
        %v3769 = vld [vmem:[%s7] sm:$0xf]
        %v3770 = vld [vmem:[%s8] sm:$0xff]
        %3772 = vset.pattern.permute.xlu0 0
        %3773 = vperm.xlu0 %3772, %v3770
        %v3774 = vpop.permute.xlu0 %3773
        %v3778 = vunpack.c.l.b16 %v3767
        %v3779 = vunpack.c.h.b16 %v3767
        %v3780 = vunpack.c.l.b16 %v3768
        %v3781 = vpack.c.b16 %v3778, %v3778
        %v3782 = vpack.c.b16 %v3779, %v3779
        %v3783 = vpack.c.b16 %v3780, %v3780
        %3784 = vrot.lane.b32.xlu0 %v3781, 109
        %v3785 = vpop.permute.xlu0 %3784
        %3786 = vrot.lane.b32.xlu0 %v3782, 109
        %v3787 = vpop.permute.xlu0 %3786
        %3788 = vrot.lane.b32.xlu0 %v3783, 109
        %v3789 = vpop.permute.xlu0 %3788
        %v3790 = vsel %vm1043, %v3785, %v3787
        %v3791 = vsel %vm1043, %v3787, %v3789
        %v3793 = vsel %vm1763, %v3769, 0
        %v3796 = vsel %vm1767, %v3790, 0
        %v3799 = vsel %vm1767, %v3791, 0
        %v3802 = vsel %vm1767, %v3789, 0
        %3804 = vmatprep.subr.bf16.mxu0 0
        %3805 = vmatpush1.bf16.msra.mxu0 0
        %3806 = vmatprep.subr.bf16.mxu0 0
        %3807 = vmatpush1.bf16.msra.mxu0 0
        %3808 = vmatprep.subr.bf16.mxu0 0
        %3809 = vmatpush1.bf16.msra.mxu0 0
        %3810 = vmatprep.subr.bf16.mxu0 0
        %3811 = vmatpush1.bf16.msra.mxu0 0
        %3812 = vmatprep.subr.bf16.mxu0 0
        %3813 = vmatpush1.bf16.msra.mxu0 0
        %3814 = vmatprep.subr.bf16.mxu0 0
        %3815 = vmatpush1.bf16.msra.mxu0 0
        %3816 = vmatprep.subr.bf16.mxu0 0
        %3817 = vmatpush1.bf16.msra.mxu0 0
        %3818 = vmatprep.subr.bf16.mxu0 %v3799
        %3819 = vmatpush1.bf16.msra.mxu0 %v3796
        %3820 = vmatprep.subr.bf16.mxu0 0
        %3821 = vmatpush2.bf16.msra.mxu0 0
        %3822 = vmatprep.subr.bf16.mxu0 0
        %3823 = vmatpush2.bf16.msra.mxu0 0
        %3824 = vmatprep.subr.bf16.mxu0 0
        %3825 = vmatpush2.bf16.msra.mxu0 0
        %3826 = vmatprep.subr.bf16.mxu0 0
        %3827 = vmatpush2.bf16.msra.mxu0 0
        %3828 = vmatprep.subr.bf16.mxu0 0
        %3829 = vmatpush2.bf16.msra.mxu0 0
        %3830 = vmatprep.subr.bf16.mxu0 0
        %3831 = vmatpush2.bf16.msra.mxu0 0
        %3832 = vmatprep.subr.bf16.mxu0 0
        %3833 = vmatpush2.bf16.msra.mxu0 0
        %3834 = vmatprep.subr.bf16.mxu0 0
        %3835 = vmatpush2.bf16.msra.mxu0 0
        %3836 = vmatprep.mubr.bf16.mxu0 0
        %3837 = vmatmul.mubr.bf16.gmra.mxu0 %v3793
        %v3838 = vpop.f32.mrf.mxu0
        %v3839 = vadd.f32 %v3774, %v3838
        %v3840 = vpop.f32.mrf.mxu0
        %v3841 = vadd.f32 %v3774, %v3840
        %v3842 = vpop.f32.mrf.mxu0
        %v3843 = vpop.f32.mrf.mxu0
        %3844 = vdwg.mxu0
        %3845 = vmatprep.subr.bf16.mxu0 0
        %3846 = vmatpush1.bf16.msra.mxu0 0
        %3847 = vmatprep.subr.bf16.mxu0 0
        %3848 = vmatpush1.bf16.msra.mxu0 0
        %3849 = vmatprep.subr.bf16.mxu0 0
        %3850 = vmatpush1.bf16.msra.mxu0 0
        %3851 = vmatprep.subr.bf16.mxu0 0
        %3852 = vmatpush1.bf16.msra.mxu0 0
        %3853 = vmatprep.subr.bf16.mxu0 0
        %3854 = vmatpush1.bf16.msra.mxu0 0
        %3855 = vmatprep.subr.bf16.mxu0 0
        %3856 = vmatpush1.bf16.msra.mxu0 0
        %3857 = vmatprep.subr.bf16.mxu0 0
        %3858 = vmatpush1.bf16.msra.mxu0 0
        %3859 = vmatprep.subr.bf16.mxu0 0
        %3860 = vmatpush1.bf16.msra.mxu0 %v3802
        %3861 = vmatprep.subr.bf16.mxu0 0
        %3862 = vmatpush2.bf16.msra.mxu0 0
        %3863 = vmatprep.subr.bf16.mxu0 0
        %3864 = vmatpush2.bf16.msra.mxu0 0
        %3865 = vmatprep.subr.bf16.mxu0 0
        %3866 = vmatpush2.bf16.msra.mxu0 0
        %3867 = vmatprep.subr.bf16.mxu0 0
        %3868 = vmatpush2.bf16.msra.mxu0 0
        %3869 = vmatprep.subr.bf16.mxu0 0
        %3870 = vmatpush2.bf16.msra.mxu0 0
        %3871 = vmatprep.subr.bf16.mxu0 0
        %3872 = vmatpush2.bf16.msra.mxu0 0
        %3873 = vmatprep.subr.bf16.mxu0 0
        %3874 = vmatpush2.bf16.msra.mxu0 0
        %3875 = vmatprep.subr.bf16.mxu0 0
        %3876 = vmatpush2.bf16.msra.mxu0 0
        %3877 = vmatprep.mubr.bf16.mxu0 0
        %3878 = vmatmul.mubr.bf16.gmra.mxu0 %v3793
        %v3879 = vpop.f32.mrf.mxu0
        %v3880 = vadd.f32 %v3774, %v3879
        %v3881 = vpop.f32.mrf.mxu0
        %v3882 = vpop.f32.mrf.mxu0
        %v3883 = vpop.f32.mrf.mxu0
        %3884 = vdwg.mxu0
        %v3885 = vadd.f32 %v3839, %v3764
        %v3886 = vadd.f32 %v3841, %v3765
        %v3887 = vadd.f32 %v3880, %v3766
        %v3888 = vmul.f32 %v3885, %v1655
        %v3889 = vmul.f32 %v3886, %v1659
        %v3890 = vmul.f32 %v3887, %v1663
        %v3891 = vpack.c.bf16 %v3888, %v3888
        %v3892 = vpack.c.bf16 %v3889, %v3889
        %v3893 = vpack.c.bf16 %v3890, %v3890
        %3894 = vst.msk [vmem:[#allocation4] sm:$0xf] %vm1714, 0
        %3895 = vst.msk [vmem:[#allocation4 + $0x8] sm:$0xf] %vm1716, 0
        %v3899 = vunpack.c.l.b16 %v3891
        %v3900 = vunpack.c.l.b16 %v3892
        %v3901 = vunpack.c.l.b16 %v3893
        %v3902 = vpack.c.b16 %v3900, %v3899
        %v3903 = vpack.c.b16 %v3901, %v3901
        %3904 = vrot.lane.b32.xlu0 %v3902, 19
        %v3905 = vpop.permute.xlu0 %3904
        %3906 = vrot.lane.b32.xlu0 %v3903, 19
        %v3907 = vpop.permute.xlu0 %3906
        %v3908 = vrot.slane %v3905, 4
        %v3909 = vsel %vm1731, %v3908, %v3905
        %v3910 = vsel %vm1731, %v3908, %v3907
        %3913 = vst.msk [vmem:[#allocation4] sm:$0xff] %vm1738, %v3909
        %3914 = vst.msk [vmem:[#allocation4 + $0x8] sm:$0xf] %vm1740, %v3910
        %v3915 = vld [vmem:[%s13] sm:$0xff]
        %v3916 = vld [vmem:[%s13 + $0x8] sm:$0xff]
        %v3917 = vld [vmem:[%s13 + $0x10] sm:$0xff]
        %v3918 = vld [vmem:[%s13 + $0x18] sm:$0xff]
        %v3919 = vld [vmem:[%s13 + $0x20] sm:$0xff]
        %v3920 = vld [vmem:[%s13 + $0x28] sm:$0xff]
        %v3921 = vld [vmem:[%s13 + $0x30] sm:$0xff]
        %v3922 = vld [vmem:[%s13 + $0x38] sm:$0xff]
        %v3923 = vld [vmem:[%s13 + $0x40] sm:$0xff]
        %v3924 = vld [vmem:[%s13 + $0x48] sm:$0xff]
        %v3925 = vld [vmem:[%s13 + $0x50] sm:$0xff]
        %v3926 = vld [vmem:[%s13 + $0x58] sm:$0xff]
        %v3927 = vld [vmem:[%s13 + $0x60] sm:$0xff]
        %v3928 = vld [vmem:[%s13 + $0x68] sm:$0xff]
        %v3929 = vld [vmem:[%s13 + $0x70] sm:$0xff]
        %v3930 = vld [vmem:[%s13 + $0x78] sm:$0xff]
        %v3931 = vld [vmem:[%s13 + $0x80] sm:$0xff]
        %v3932 = vld [vmem:[%s13 + $0x88] sm:$0xff]
        %v3933 = vld [vmem:[%s13 + $0x90] sm:$0xff]
        %v3934 = vld [vmem:[%s13 + $0x98] sm:$0xff]
        %v3935 = vld [vmem:[%s13 + $0xa0] sm:$0xff]
        %v3936 = vld [vmem:[%s13 + $0xa8] sm:$0xff]
        %v3937 = vld [vmem:[%s13 + $0xb0] sm:$0xff]
        %v3938 = vld [vmem:[%s13 + $0xb8] sm:$0xff]
        %v3939 = vld [vmem:[%s13 + $0xc0] sm:$0xff]
        %v3940 = vld [vmem:[%s13 + $0xc8] sm:$0xff]
        %v3941 = vld [vmem:[%s13 + $0xd0] sm:$0xff]
        %v3942 = vld [vmem:[%s13 + $0xd8] sm:$0xff]
        %v3943 = vld [vmem:[%s13 + $0xe0] sm:$0xff]
        %v3944 = vld [vmem:[%s13 + $0xe8] sm:$0xff]
        %v3945 = vld [vmem:[%s13 + $0xf0] sm:$0xff]
        %v3946 = vld [vmem:[%s13 + $0xf8] sm:$0xff]
        %v3947 = vld [vmem:[%s13 + $0x100] sm:$0xff]
        %v3948 = vld [vmem:[%s13 + $0x108] sm:$0xff]
        %v3949 = vld [vmem:[%s13 + $0x110] sm:$0xff]
        %v3950 = vld [vmem:[%s13 + $0x118] sm:$0xff]
        %v3987 = vunpack.c.l.b16 %v3915
        %v3988 = vunpack.c.h.b16 %v3915
        %v3989 = vunpack.c.l.b16 %v3916
        %v3990 = vunpack.c.h.b16 %v3916
        %v3991 = vunpack.c.l.b16 %v3917
        %v3992 = vunpack.c.h.b16 %v3917
        %v3993 = vunpack.c.l.b16 %v3918
        %v3994 = vunpack.c.h.b16 %v3918
        %v3995 = vunpack.c.l.b16 %v3919
        %v3996 = vunpack.c.h.b16 %v3919
        %v3997 = vunpack.c.l.b16 %v3920
        %v3998 = vunpack.c.h.b16 %v3920
        %v3999 = vunpack.c.l.b16 %v3921
        %v4000 = vunpack.c.h.b16 %v3921
        %v4001 = vunpack.c.l.b16 %v3922
        %v4002 = vunpack.c.h.b16 %v3922
        %v4003 = vunpack.c.l.b16 %v3923
        %v4004 = vunpack.c.h.b16 %v3923
        %v4005 = vunpack.c.l.b16 %v3924
        %v4006 = vunpack.c.h.b16 %v3924
        %v4007 = vunpack.c.l.b16 %v3925
        %v4008 = vunpack.c.h.b16 %v3925
        %v4009 = vunpack.c.l.b16 %v3926
        %v4010 = vunpack.c.h.b16 %v3926
        %v4011 = vunpack.c.l.b16 %v3927
        %v4012 = vunpack.c.h.b16 %v3927
        %v4013 = vunpack.c.l.b16 %v3928
        %v4014 = vunpack.c.h.b16 %v3928
        %v4015 = vunpack.c.l.b16 %v3929
        %v4016 = vunpack.c.h.b16 %v3929
        %v4017 = vunpack.c.l.b16 %v3930
        %v4018 = vunpack.c.h.b16 %v3930
        %v4019 = vunpack.c.l.b16 %v3931
        %v4020 = vunpack.c.h.b16 %v3931
        %v4021 = vunpack.c.l.b16 %v3932
        %v4022 = vunpack.c.h.b16 %v3932
        %v4023 = vunpack.c.l.b16 %v3933
        %v4024 = vunpack.c.h.b16 %v3933
        %v4025 = vunpack.c.l.b16 %v3934
        %v4026 = vunpack.c.h.b16 %v3934
        %v4027 = vunpack.c.l.b16 %v3935
        %v4028 = vunpack.c.h.b16 %v3935
        %v4029 = vunpack.c.l.b16 %v3936
        %v4030 = vunpack.c.h.b16 %v3936
        %v4031 = vunpack.c.l.b16 %v3937
        %v4032 = vunpack.c.h.b16 %v3937
        %v4033 = vunpack.c.l.b16 %v3938
        %v4034 = vunpack.c.h.b16 %v3938
        %v4035 = vunpack.c.l.b16 %v3939
        %v4036 = vunpack.c.h.b16 %v3939
        %v4037 = vunpack.c.l.b16 %v3940
        %v4038 = vunpack.c.h.b16 %v3940
        %v4039 = vunpack.c.l.b16 %v3941
        %v4040 = vunpack.c.h.b16 %v3941
        %v4041 = vunpack.c.l.b16 %v3942
        %v4042 = vunpack.c.h.b16 %v3942
        %v4043 = vunpack.c.l.b16 %v3943
        %v4044 = vunpack.c.h.b16 %v3943
        %v4045 = vunpack.c.l.b16 %v3944
        %v4046 = vunpack.c.h.b16 %v3944
        %v4047 = vunpack.c.l.b16 %v3945
        %v4048 = vunpack.c.h.b16 %v3945
        %v4049 = vunpack.c.l.b16 %v3946
        %v4050 = vunpack.c.h.b16 %v3946
        %v4051 = vunpack.c.l.b16 %v3947
        %v4052 = vunpack.c.h.b16 %v3947
        %v4053 = vunpack.c.l.b16 %v3948
        %v4054 = vunpack.c.h.b16 %v3948
        %v4055 = vunpack.c.l.b16 %v3949
        %v4056 = vunpack.c.h.b16 %v3949
        %v4057 = vunpack.c.l.b16 %v3950
        %v4058 = vunpack.c.h.b16 %v3950
        %v4059 = vpack.c.b16 %v3989, %v3987
        %v4060 = vpack.c.b16 %v3990, %v3988
        %v4061 = vpack.c.b16 %v3993, %v3991
        %v4062 = vpack.c.b16 %v3994, %v3992
        %v4063 = vpack.c.b16 %v3997, %v3995
        %v4064 = vpack.c.b16 %v3998, %v3996
        %v4065 = vpack.c.b16 %v4001, %v3999
        %v4066 = vpack.c.b16 %v4002, %v4000
        %v4067 = vpack.c.b16 %v4005, %v4003
        %v4068 = vpack.c.b16 %v4006, %v4004
        %v4069 = vpack.c.b16 %v4009, %v4007
        %v4070 = vpack.c.b16 %v4010, %v4008
        %v4071 = vpack.c.b16 %v4013, %v4011
        %v4072 = vpack.c.b16 %v4014, %v4012
        %v4073 = vpack.c.b16 %v4017, %v4015
        %v4074 = vpack.c.b16 %v4018, %v4016
        %v4075 = vpack.c.b16 %v4021, %v4019
        %v4076 = vpack.c.b16 %v4022, %v4020
        %v4077 = vpack.c.b16 %v4025, %v4023
        %v4078 = vpack.c.b16 %v4026, %v4024
        %v4079 = vpack.c.b16 %v4029, %v4027
        %v4080 = vpack.c.b16 %v4030, %v4028
        %v4081 = vpack.c.b16 %v4033, %v4031
        %v4082 = vpack.c.b16 %v4034, %v4032
        %v4083 = vpack.c.b16 %v4037, %v4035
        %v4084 = vpack.c.b16 %v4038, %v4036
        %v4085 = vpack.c.b16 %v4041, %v4039
        %v4086 = vpack.c.b16 %v4042, %v4040
        %v4087 = vpack.c.b16 %v4045, %v4043
        %v4088 = vpack.c.b16 %v4046, %v4044
        %v4089 = vpack.c.b16 %v4049, %v4047
        %v4090 = vpack.c.b16 %v4050, %v4048
        %v4091 = vpack.c.b16 %v4053, %v4051
        %v4092 = vpack.c.b16 %v4054, %v4052
        %v4093 = vpack.c.b16 %v4057, %v4055
        %v4094 = vpack.c.b16 %v4058, %v4056
        %v4132 = vsel %vm1671, %v3893, 0
        %4134 = vmatprep.subr.bf16.mxu0 %v4074
        %4135 = vmatpush1.bf16.msra.mxu0 %v4073
        %4136 = vmatprep.subr.bf16.mxu0 %v4072
        %4137 = vmatpush1.bf16.msra.mxu0 %v4071
        %4138 = vmatprep.subr.bf16.mxu0 %v4070
        %4139 = vmatpush1.bf16.msra.mxu0 %v4069
        %4140 = vmatprep.subr.bf16.mxu0 %v4068
        %4141 = vmatpush1.bf16.msra.mxu0 %v4067
        %4142 = vmatprep.subr.bf16.mxu0 %v4066
        %4143 = vmatpush1.bf16.msra.mxu0 %v4065
        %4144 = vmatprep.subr.bf16.mxu0 %v4064
        %4145 = vmatpush1.bf16.msra.mxu0 %v4063
        %4146 = vmatprep.subr.bf16.mxu0 %v4062
        %4147 = vmatpush1.bf16.msra.mxu0 %v4061
        %4148 = vmatprep.subr.bf16.mxu0 %v4060
        %4149 = vmatpush1.bf16.msra.mxu0 %v4059
        %4150 = vmatprep.subr.bf16.mxu0 %v4090
        %4151 = vmatpush2.bf16.msra.mxu0 %v4089
        %4152 = vmatprep.subr.bf16.mxu0 %v4088
        %4153 = vmatpush2.bf16.msra.mxu0 %v4087
        %4154 = vmatprep.subr.bf16.mxu0 %v4086
        %4155 = vmatpush2.bf16.msra.mxu0 %v4085
        %4156 = vmatprep.subr.bf16.mxu0 %v4084
        %4157 = vmatpush2.bf16.msra.mxu0 %v4083
        %4158 = vmatprep.subr.bf16.mxu0 %v4082
        %4159 = vmatpush2.bf16.msra.mxu0 %v4081
        %4160 = vmatprep.subr.bf16.mxu0 %v4080
        %4161 = vmatpush2.bf16.msra.mxu0 %v4079
        %4162 = vmatprep.subr.bf16.mxu0 %v4078
        %4163 = vmatpush2.bf16.msra.mxu0 %v4077
        %4164 = vmatprep.subr.bf16.mxu0 %v4076
        %4165 = vmatpush2.bf16.msra.mxu0 %v4075
        %4166 = vmatprep.mubr.bf16.mxu0 %v3892
        %4167 = vmatmul.mubr.bf16.gmra.mxu0 %v3891
        %v4168 = vpop.f32.mrf.mxu0
        %v4169 = vadd.f32 0.0, %v4168
        %v4170 = vpop.f32.mrf.mxu0
        %v4171 = vadd.f32 0.0, %v4170
        %v4172 = vpop.f32.mrf.mxu0
        %v4173 = vpop.f32.mrf.mxu0
        %4174 = vdwg.mxu0
        %4175 = vmatprep.subr.bf16.mxu0 0
        %4176 = vmatpush1.bf16.msra.mxu0 0
        %4177 = vmatprep.subr.bf16.mxu0 0
        %4178 = vmatpush1.bf16.msra.mxu0 0
        %4179 = vmatprep.subr.bf16.mxu0 0
        %4180 = vmatpush1.bf16.msra.mxu0 0
        %4181 = vmatprep.subr.bf16.mxu0 0
        %4182 = vmatpush1.bf16.msra.mxu0 0
        %4183 = vmatprep.subr.bf16.mxu0 0
        %4184 = vmatpush1.bf16.msra.mxu0 0
        %4185 = vmatprep.subr.bf16.mxu0 0
        %4186 = vmatpush1.bf16.msra.mxu0 0
        %4187 = vmatprep.subr.bf16.mxu0 %v4094
        %4188 = vmatpush1.bf16.msra.mxu0 %v4093
        %4189 = vmatprep.subr.bf16.mxu0 %v4092
        %4190 = vmatpush1.bf16.msra.mxu0 %v4091
        %4191 = vmatprep.subr.bf16.mxu0 0
        %4192 = vmatpush2.bf16.msra.mxu0 0
        %4193 = vmatprep.subr.bf16.mxu0 0
        %4194 = vmatpush2.bf16.msra.mxu0 0
        %4195 = vmatprep.subr.bf16.mxu0 0
        %4196 = vmatpush2.bf16.msra.mxu0 0
        %4197 = vmatprep.subr.bf16.mxu0 0
        %4198 = vmatpush2.bf16.msra.mxu0 0
        %4199 = vmatprep.subr.bf16.mxu0 0
        %4200 = vmatpush2.bf16.msra.mxu0 0
        %4201 = vmatprep.subr.bf16.mxu0 0
        %4202 = vmatpush2.bf16.msra.mxu0 0
        %4203 = vmatprep.subr.bf16.mxu0 0
        %4204 = vmatpush2.bf16.msra.mxu0 0
        %4205 = vmatprep.subr.bf16.mxu0 0
        %4206 = vmatpush2.bf16.msra.mxu0 0
        %4207 = vmatprep.mubr.bf16.mxu0 0
        %4208 = vmatmul.mubr.bf16.gmra.mxu0 %v4132
        %v4209 = vpop.f32.mrf.mxu0
        %v4210 = vadd.f32 %v4169, %v4209
        %v4211 = vpop.f32.mrf.mxu0
        %v4212 = vadd.f32 %v4171, %v4211
        %v4213 = vpop.f32.mrf.mxu0
        %v4214 = vpop.f32.mrf.mxu0
        %4215 = vdwg.mxu0
        %4216 = vst [vmem:[%s546] sm:$0xff] %v4210
        %4217 = vst [vmem:[%s546 + $0x8] sm:$0xff] %v4212
        %v4218 = vld [vmem:[%s9] sm:$0xf]
        %v4219 = vld [vmem:[#allocation4] sm:$0xff]
        %v4220 = vld [vmem:[#allocation4 + $0x8] sm:$0xf]
        %s4221 = scalar_lea.vmem %s9, 4
        %v4222 = vld [vmem:[%s4221] sm:$0xf]
        %v4225 = vunpack.c.l.b16 %v4219
        %v4226 = vunpack.c.h.b16 %v4219
        %v4227 = vunpack.c.l.b16 %v4220
        %v4228 = vpack.c.b16 %v4225, %v4225
        %v4229 = vpack.c.b16 %v4226, %v4226
        %v4230 = vpack.c.b16 %v4227, %v4227
        %4231 = vrot.lane.b32.xlu0 %v4228, 127
        %v4232 = vpop.permute.xlu0 %4231
        %4233 = vrot.lane.b32.xlu0 %v4229, 127
        %v4234 = vpop.permute.xlu0 %4233
        %4235 = vrot.lane.b32.xlu0 %v4230, 127
        %v4236 = vpop.permute.xlu0 %4235
        %v4237 = vsel %vm576, %v4232, %v4234
        %v4238 = vsel %vm576, %v4234, %v4236
        %v4240 = vsel %vm1763, %v4222, 0
        %v4243 = vsel %vm1767, %v4237, 0
        %v4246 = vsel %vm1767, %v4238, 0
        %v4249 = vsel %vm1767, %v4236, 0
        %4251 = vmatprep.subr.bf16.mxu0 0
        %4252 = vmatpush1.bf16.msra.mxu0 0
        %4253 = vmatprep.subr.bf16.mxu0 0
        %4254 = vmatpush1.bf16.msra.mxu0 0
        %4255 = vmatprep.subr.bf16.mxu0 0
        %4256 = vmatpush1.bf16.msra.mxu0 0
        %4257 = vmatprep.subr.bf16.mxu0 0
        %4258 = vmatpush1.bf16.msra.mxu0 0
        %4259 = vmatprep.subr.bf16.mxu0 0
        %4260 = vmatpush1.bf16.msra.mxu0 0
        %4261 = vmatprep.subr.bf16.mxu0 0
        %4262 = vmatpush1.bf16.msra.mxu0 0
        %4263 = vmatprep.subr.bf16.mxu0 0
        %4264 = vmatpush1.bf16.msra.mxu0 0
        %4265 = vmatprep.subr.bf16.mxu0 %v4246
        %4266 = vmatpush1.bf16.msra.mxu0 %v4243
        %4267 = vmatprep.subr.bf16.mxu0 0
        %4268 = vmatpush2.bf16.msra.mxu0 0
        %4269 = vmatprep.subr.bf16.mxu0 0
        %4270 = vmatpush2.bf16.msra.mxu0 0
        %4271 = vmatprep.subr.bf16.mxu0 0
        %4272 = vmatpush2.bf16.msra.mxu0 0
        %4273 = vmatprep.subr.bf16.mxu0 0
        %4274 = vmatpush2.bf16.msra.mxu0 0
        %4275 = vmatprep.subr.bf16.mxu0 0
        %4276 = vmatpush2.bf16.msra.mxu0 0
        %4277 = vmatprep.subr.bf16.mxu0 0
        %4278 = vmatpush2.bf16.msra.mxu0 0
        %4279 = vmatprep.subr.bf16.mxu0 0
        %4280 = vmatpush2.bf16.msra.mxu0 0
        %4281 = vmatprep.subr.bf16.mxu0 0
        %4282 = vmatpush2.bf16.msra.mxu0 0
        %4283 = vmatprep.mubr.bf16.mxu0 0
        %4284 = vmatmul.mubr.bf16.gmra.mxu0 %v4240
        %v4285 = vpop.f32.mrf.mxu0
        %v4286 = vadd.f32 0.0, %v4285
        %v4287 = vpop.f32.mrf.mxu0
        %v4288 = vadd.f32 0.0, %v4287
        %v4289 = vpop.f32.mrf.mxu0
        %v4290 = vpop.f32.mrf.mxu0
        %4291 = vdwg.mxu0
        %4292 = vmatprep.subr.bf16.mxu0 0
        %4293 = vmatpush1.bf16.msra.mxu0 0
        %4294 = vmatprep.subr.bf16.mxu0 0
        %4295 = vmatpush1.bf16.msra.mxu0 0
        %4296 = vmatprep.subr.bf16.mxu0 0
        %4297 = vmatpush1.bf16.msra.mxu0 0
        %4298 = vmatprep.subr.bf16.mxu0 0
        %4299 = vmatpush1.bf16.msra.mxu0 0
        %4300 = vmatprep.subr.bf16.mxu0 0
        %4301 = vmatpush1.bf16.msra.mxu0 0
        %4302 = vmatprep.subr.bf16.mxu0 0
        %4303 = vmatpush1.bf16.msra.mxu0 0
        %4304 = vmatprep.subr.bf16.mxu0 0
        %4305 = vmatpush1.bf16.msra.mxu0 0
        %4306 = vmatprep.subr.bf16.mxu0 0
        %4307 = vmatpush1.bf16.msra.mxu0 %v4249
        %4308 = vmatprep.subr.bf16.mxu0 0
        %4309 = vmatpush2.bf16.msra.mxu0 0
        %4310 = vmatprep.subr.bf16.mxu0 0
        %4311 = vmatpush2.bf16.msra.mxu0 0
        %4312 = vmatprep.subr.bf16.mxu0 0
        %4313 = vmatpush2.bf16.msra.mxu0 0
        %4314 = vmatprep.subr.bf16.mxu0 0
        %4315 = vmatpush2.bf16.msra.mxu0 0
        %4316 = vmatprep.subr.bf16.mxu0 0
        %4317 = vmatpush2.bf16.msra.mxu0 0
        %4318 = vmatprep.subr.bf16.mxu0 0
        %4319 = vmatpush2.bf16.msra.mxu0 0
        %4320 = vmatprep.subr.bf16.mxu0 0
        %4321 = vmatpush2.bf16.msra.mxu0 0
        %4322 = vmatprep.subr.bf16.mxu0 0
        %4323 = vmatpush2.bf16.msra.mxu0 0
        %4324 = vmatprep.mubr.bf16.mxu0 0
        %4325 = vmatmul.mubr.bf16.gmra.mxu0 %v4240
        %v4326 = vpop.f32.mrf.mxu0
        %v4327 = vadd.f32 0.0, %v4326
        %v4328 = vpop.f32.mrf.mxu0
        %v4329 = vpop.f32.mrf.mxu0
        %v4330 = vpop.f32.mrf.mxu0
        %4331 = vdwg.mxu0
        %v4333 = vsel %vm1763, %v4218, 0
        %v4336 = vsel %vm1767, %v4228, 0
        %v4339 = vsel %vm1767, %v4229, 0
        %v4342 = vsel %vm1767, %v4230, 0
        %4344 = vmatprep.subr.bf16.mxu0 0
        %4345 = vmatpush1.bf16.msra.mxu0 0
        %4346 = vmatprep.subr.bf16.mxu0 0
        %4347 = vmatpush1.bf16.msra.mxu0 0
        %4348 = vmatprep.subr.bf16.mxu0 0
        %4349 = vmatpush1.bf16.msra.mxu0 0
        %4350 = vmatprep.subr.bf16.mxu0 0
        %4351 = vmatpush1.bf16.msra.mxu0 0
        %4352 = vmatprep.subr.bf16.mxu0 0
        %4353 = vmatpush1.bf16.msra.mxu0 0
        %4354 = vmatprep.subr.bf16.mxu0 0
        %4355 = vmatpush1.bf16.msra.mxu0 0
        %4356 = vmatprep.subr.bf16.mxu0 0
        %4357 = vmatpush1.bf16.msra.mxu0 0
        %4358 = vmatprep.subr.bf16.mxu0 %v4339
        %4359 = vmatpush1.bf16.msra.mxu0 %v4336
        %4360 = vmatprep.subr.bf16.mxu0 0
        %4361 = vmatpush2.bf16.msra.mxu0 0
        %4362 = vmatprep.subr.bf16.mxu0 0
        %4363 = vmatpush2.bf16.msra.mxu0 0
        %4364 = vmatprep.subr.bf16.mxu0 0
        %4365 = vmatpush2.bf16.msra.mxu0 0
        %4366 = vmatprep.subr.bf16.mxu0 0
        %4367 = vmatpush2.bf16.msra.mxu0 0
        %4368 = vmatprep.subr.bf16.mxu0 0
        %4369 = vmatpush2.bf16.msra.mxu0 0
        %4370 = vmatprep.subr.bf16.mxu0 0
        %4371 = vmatpush2.bf16.msra.mxu0 0
        %4372 = vmatprep.subr.bf16.mxu0 0
        %4373 = vmatpush2.bf16.msra.mxu0 0
        %4374 = vmatprep.subr.bf16.mxu0 0
        %4375 = vmatpush2.bf16.msra.mxu0 0
        %4376 = vmatprep.mubr.bf16.mxu0 0
        %4377 = vmatmul.mubr.bf16.gmra.mxu0 %v4333
        %v4378 = vpop.f32.mrf.mxu0
        %v4379 = vadd.f32 %v4286, %v4378
        %v4380 = vpop.f32.mrf.mxu0
        %v4381 = vadd.f32 %v4288, %v4380
        %v4382 = vpop.f32.mrf.mxu0
        %v4383 = vpop.f32.mrf.mxu0
        %4384 = vdwg.mxu0
        %4385 = vmatprep.subr.bf16.mxu0 0
        %4386 = vmatpush1.bf16.msra.mxu0 0
        %4387 = vmatprep.subr.bf16.mxu0 0
        %4388 = vmatpush1.bf16.msra.mxu0 0
        %4389 = vmatprep.subr.bf16.mxu0 0
        %4390 = vmatpush1.bf16.msra.mxu0 0
        %4391 = vmatprep.subr.bf16.mxu0 0
        %4392 = vmatpush1.bf16.msra.mxu0 0
        %4393 = vmatprep.subr.bf16.mxu0 0
        %4394 = vmatpush1.bf16.msra.mxu0 0
        %4395 = vmatprep.subr.bf16.mxu0 0
        %4396 = vmatpush1.bf16.msra.mxu0 0
        %4397 = vmatprep.subr.bf16.mxu0 0
        %4398 = vmatpush1.bf16.msra.mxu0 0
        %4399 = vmatprep.subr.bf16.mxu0 0
        %4400 = vmatpush1.bf16.msra.mxu0 %v4342
        %4401 = vmatprep.subr.bf16.mxu0 0
        %4402 = vmatpush2.bf16.msra.mxu0 0
        %4403 = vmatprep.subr.bf16.mxu0 0
        %4404 = vmatpush2.bf16.msra.mxu0 0
        %4405 = vmatprep.subr.bf16.mxu0 0
        %4406 = vmatpush2.bf16.msra.mxu0 0
        %4407 = vmatprep.subr.bf16.mxu0 0
        %4408 = vmatpush2.bf16.msra.mxu0 0
        %4409 = vmatprep.subr.bf16.mxu0 0
        %4410 = vmatpush2.bf16.msra.mxu0 0
        %4411 = vmatprep.subr.bf16.mxu0 0
        %4412 = vmatpush2.bf16.msra.mxu0 0
        %4413 = vmatprep.subr.bf16.mxu0 0
        %4414 = vmatpush2.bf16.msra.mxu0 0
        %4415 = vmatprep.subr.bf16.mxu0 0
        %4416 = vmatpush2.bf16.msra.mxu0 0
        %4417 = vmatprep.mubr.bf16.mxu0 0
        %4418 = vmatmul.mubr.bf16.gmra.mxu0 %v4333
        %v4419 = vpop.f32.mrf.mxu0
        %v4420 = vadd.f32 %v4327, %v4419
        %v4421 = vpop.f32.mrf.mxu0
        %v4422 = vpop.f32.mrf.mxu0
        %v4423 = vpop.f32.mrf.mxu0
        %4424 = vdwg.mxu0
        %s4425 = scalar_lea.vmem %s9, 8
        %v4426 = vld [vmem:[%s4425] sm:$0xf]
        %4427 = vrot.lane.b32.xlu0 %v4228, 126
        %v4428 = vpop.permute.xlu0 %4427
        %4429 = vrot.lane.b32.xlu0 %v4229, 126
        %v4430 = vpop.permute.xlu0 %4429
        %4431 = vrot.lane.b32.xlu0 %v4230, 126
        %v4432 = vpop.permute.xlu0 %4431
        %v4433 = vsel %vm793, %v4428, %v4430
        %v4434 = vsel %vm793, %v4430, %v4432
        %v4436 = vsel %vm1763, %v4426, 0
        %v4439 = vsel %vm1767, %v4433, 0
        %v4442 = vsel %vm1767, %v4434, 0
        %v4445 = vsel %vm1767, %v4432, 0
        %4447 = vmatprep.subr.bf16.mxu0 0
        %4448 = vmatpush1.bf16.msra.mxu0 0
        %4449 = vmatprep.subr.bf16.mxu0 0
        %4450 = vmatpush1.bf16.msra.mxu0 0
        %4451 = vmatprep.subr.bf16.mxu0 0
        %4452 = vmatpush1.bf16.msra.mxu0 0
        %4453 = vmatprep.subr.bf16.mxu0 0
        %4454 = vmatpush1.bf16.msra.mxu0 0
        %4455 = vmatprep.subr.bf16.mxu0 0
        %4456 = vmatpush1.bf16.msra.mxu0 0
        %4457 = vmatprep.subr.bf16.mxu0 0
        %4458 = vmatpush1.bf16.msra.mxu0 0
        %4459 = vmatprep.subr.bf16.mxu0 0
        %4460 = vmatpush1.bf16.msra.mxu0 0
        %4461 = vmatprep.subr.bf16.mxu0 %v4442
        %4462 = vmatpush1.bf16.msra.mxu0 %v4439
        %4463 = vmatprep.subr.bf16.mxu0 0
        %4464 = vmatpush2.bf16.msra.mxu0 0
        %4465 = vmatprep.subr.bf16.mxu0 0
        %4466 = vmatpush2.bf16.msra.mxu0 0
        %4467 = vmatprep.subr.bf16.mxu0 0
        %4468 = vmatpush2.bf16.msra.mxu0 0
        %4469 = vmatprep.subr.bf16.mxu0 0
        %4470 = vmatpush2.bf16.msra.mxu0 0
        %4471 = vmatprep.subr.bf16.mxu0 0
        %4472 = vmatpush2.bf16.msra.mxu0 0
        %4473 = vmatprep.subr.bf16.mxu0 0
        %4474 = vmatpush2.bf16.msra.mxu0 0
        %4475 = vmatprep.subr.bf16.mxu0 0
        %4476 = vmatpush2.bf16.msra.mxu0 0
        %4477 = vmatprep.subr.bf16.mxu0 0
        %4478 = vmatpush2.bf16.msra.mxu0 0
        %4479 = vmatprep.mubr.bf16.mxu0 0
        %4480 = vmatmul.mubr.bf16.gmra.mxu0 %v4436
        %v4481 = vpop.f32.mrf.mxu0
        %v4482 = vadd.f32 0.0, %v4481
        %v4483 = vpop.f32.mrf.mxu0
        %v4484 = vadd.f32 0.0, %v4483
        %v4485 = vpop.f32.mrf.mxu0
        %v4486 = vpop.f32.mrf.mxu0
        %4487 = vdwg.mxu0
        %4488 = vmatprep.subr.bf16.mxu0 0
        %4489 = vmatpush1.bf16.msra.mxu0 0
        %4490 = vmatprep.subr.bf16.mxu0 0
        %4491 = vmatpush1.bf16.msra.mxu0 0
        %4492 = vmatprep.subr.bf16.mxu0 0
        %4493 = vmatpush1.bf16.msra.mxu0 0
        %4494 = vmatprep.subr.bf16.mxu0 0
        %4495 = vmatpush1.bf16.msra.mxu0 0
        %4496 = vmatprep.subr.bf16.mxu0 0
        %4497 = vmatpush1.bf16.msra.mxu0 0
        %4498 = vmatprep.subr.bf16.mxu0 0
        %4499 = vmatpush1.bf16.msra.mxu0 0
        %4500 = vmatprep.subr.bf16.mxu0 0
        %4501 = vmatpush1.bf16.msra.mxu0 0
        %4502 = vmatprep.subr.bf16.mxu0 0
        %4503 = vmatpush1.bf16.msra.mxu0 %v4445
        %4504 = vmatprep.subr.bf16.mxu0 0
        %4505 = vmatpush2.bf16.msra.mxu0 0
        %4506 = vmatprep.subr.bf16.mxu0 0
        %4507 = vmatpush2.bf16.msra.mxu0 0
        %4508 = vmatprep.subr.bf16.mxu0 0
        %4509 = vmatpush2.bf16.msra.mxu0 0
        %4510 = vmatprep.subr.bf16.mxu0 0
        %4511 = vmatpush2.bf16.msra.mxu0 0
        %4512 = vmatprep.subr.bf16.mxu0 0
        %4513 = vmatpush2.bf16.msra.mxu0 0
        %4514 = vmatprep.subr.bf16.mxu0 0
        %4515 = vmatpush2.bf16.msra.mxu0 0
        %4516 = vmatprep.subr.bf16.mxu0 0
        %4517 = vmatpush2.bf16.msra.mxu0 0
        %4518 = vmatprep.subr.bf16.mxu0 0
        %4519 = vmatpush2.bf16.msra.mxu0 0
        %4520 = vmatprep.mubr.bf16.mxu0 0
        %4521 = vmatmul.mubr.bf16.gmra.mxu0 %v4436
        %v4522 = vpop.f32.mrf.mxu0
        %v4523 = vadd.f32 0.0, %v4522
        %v4524 = vpop.f32.mrf.mxu0
        %v4525 = vpop.f32.mrf.mxu0
        %v4526 = vpop.f32.mrf.mxu0
        %4527 = vdwg.mxu0
        %v4528 = vadd.f32 %v4379, %v4482
        %v4529 = vadd.f32 %v4381, %v4484
        %v4530 = vadd.f32 %v4420, %v4523
        %s4531 = scalar_lea.vmem %s9, 12
        %v4532 = vld [vmem:[%s4531] sm:$0xf]
        %4533 = vrot.lane.b32.xlu0 %v4228, 110
        %v4534 = vpop.permute.xlu0 %4533
        %4535 = vrot.lane.b32.xlu0 %v4229, 110
        %v4536 = vpop.permute.xlu0 %4535
        %4537 = vrot.lane.b32.xlu0 %v4230, 110
        %v4538 = vpop.permute.xlu0 %4537
        %v4539 = vsel %vm918, %v4534, %v4536
        %v4540 = vsel %vm918, %v4536, %v4538
        %v4542 = vsel %vm1763, %v4532, 0
        %v4545 = vsel %vm1767, %v4539, 0
        %v4548 = vsel %vm1767, %v4540, 0
        %v4551 = vsel %vm1767, %v4538, 0
        %4553 = vmatprep.subr.bf16.mxu0 0
        %4554 = vmatpush1.bf16.msra.mxu0 0
        %4555 = vmatprep.subr.bf16.mxu0 0
        %4556 = vmatpush1.bf16.msra.mxu0 0
        %4557 = vmatprep.subr.bf16.mxu0 0
        %4558 = vmatpush1.bf16.msra.mxu0 0
        %4559 = vmatprep.subr.bf16.mxu0 0
        %4560 = vmatpush1.bf16.msra.mxu0 0
        %4561 = vmatprep.subr.bf16.mxu0 0
        %4562 = vmatpush1.bf16.msra.mxu0 0
        %4563 = vmatprep.subr.bf16.mxu0 0
        %4564 = vmatpush1.bf16.msra.mxu0 0
        %4565 = vmatprep.subr.bf16.mxu0 0
        %4566 = vmatpush1.bf16.msra.mxu0 0
        %4567 = vmatprep.subr.bf16.mxu0 %v4548
        %4568 = vmatpush1.bf16.msra.mxu0 %v4545
        %4569 = vmatprep.subr.bf16.mxu0 0
        %4570 = vmatpush2.bf16.msra.mxu0 0
        %4571 = vmatprep.subr.bf16.mxu0 0
        %4572 = vmatpush2.bf16.msra.mxu0 0
        %4573 = vmatprep.subr.bf16.mxu0 0
        %4574 = vmatpush2.bf16.msra.mxu0 0
        %4575 = vmatprep.subr.bf16.mxu0 0
        %4576 = vmatpush2.bf16.msra.mxu0 0
        %4577 = vmatprep.subr.bf16.mxu0 0
        %4578 = vmatpush2.bf16.msra.mxu0 0
        %4579 = vmatprep.subr.bf16.mxu0 0
        %4580 = vmatpush2.bf16.msra.mxu0 0
        %4581 = vmatprep.subr.bf16.mxu0 0
        %4582 = vmatpush2.bf16.msra.mxu0 0
        %4583 = vmatprep.subr.bf16.mxu0 0
        %4584 = vmatpush2.bf16.msra.mxu0 0
        %4585 = vmatprep.mubr.bf16.mxu0 0
        %4586 = vmatmul.mubr.bf16.gmra.mxu0 %v4542
        %v4587 = vpop.f32.mrf.mxu0
        %v4588 = vadd.f32 0.0, %v4587
        %v4589 = vpop.f32.mrf.mxu0
        %v4590 = vadd.f32 0.0, %v4589
        %v4591 = vpop.f32.mrf.mxu0
        %v4592 = vpop.f32.mrf.mxu0
        %4593 = vdwg.mxu0
        %4594 = vmatprep.subr.bf16.mxu0 0
        %4595 = vmatpush1.bf16.msra.mxu0 0
        %4596 = vmatprep.subr.bf16.mxu0 0
        %4597 = vmatpush1.bf16.msra.mxu0 0
        %4598 = vmatprep.subr.bf16.mxu0 0
        %4599 = vmatpush1.bf16.msra.mxu0 0
        %4600 = vmatprep.subr.bf16.mxu0 0
        %4601 = vmatpush1.bf16.msra.mxu0 0
        %4602 = vmatprep.subr.bf16.mxu0 0
        %4603 = vmatpush1.bf16.msra.mxu0 0
        %4604 = vmatprep.subr.bf16.mxu0 0
        %4605 = vmatpush1.bf16.msra.mxu0 0
        %4606 = vmatprep.subr.bf16.mxu0 0
        %4607 = vmatpush1.bf16.msra.mxu0 0
        %4608 = vmatprep.subr.bf16.mxu0 0
        %4609 = vmatpush1.bf16.msra.mxu0 %v4551
        %4610 = vmatprep.subr.bf16.mxu0 0
        %4611 = vmatpush2.bf16.msra.mxu0 0
        %4612 = vmatprep.subr.bf16.mxu0 0
        %4613 = vmatpush2.bf16.msra.mxu0 0
        %4614 = vmatprep.subr.bf16.mxu0 0
        %4615 = vmatpush2.bf16.msra.mxu0 0
        %4616 = vmatprep.subr.bf16.mxu0 0
        %4617 = vmatpush2.bf16.msra.mxu0 0
        %4618 = vmatprep.subr.bf16.mxu0 0
        %4619 = vmatpush2.bf16.msra.mxu0 0
        %4620 = vmatprep.subr.bf16.mxu0 0
        %4621 = vmatpush2.bf16.msra.mxu0 0
        %4622 = vmatprep.subr.bf16.mxu0 0
        %4623 = vmatpush2.bf16.msra.mxu0 0
        %4624 = vmatprep.subr.bf16.mxu0 0
        %4625 = vmatpush2.bf16.msra.mxu0 0
        %4626 = vmatprep.mubr.bf16.mxu0 0
        %4627 = vmatmul.mubr.bf16.gmra.mxu0 %v4542
        %v4628 = vpop.f32.mrf.mxu0
        %v4629 = vadd.f32 0.0, %v4628
        %v4630 = vpop.f32.mrf.mxu0
        %v4631 = vpop.f32.mrf.mxu0
        %v4632 = vpop.f32.mrf.mxu0
        %4633 = vdwg.mxu0
        %v4634 = vadd.f32 %v4528, %v4588
        %v4635 = vadd.f32 %v4529, %v4590
        %v4636 = vadd.f32 %v4530, %v4629
        %s4637 = scalar_lea.vmem %s9, 16
        %v4638 = vld [vmem:[%s4637] sm:$0xf]
        %4639 = vrot.lane.b32.xlu0 %v4228, 109
        %v4640 = vpop.permute.xlu0 %4639
        %4641 = vrot.lane.b32.xlu0 %v4229, 109
        %v4642 = vpop.permute.xlu0 %4641
        %4643 = vrot.lane.b32.xlu0 %v4230, 109
        %v4644 = vpop.permute.xlu0 %4643
        %v4645 = vsel %vm1043, %v4640, %v4642
        %v4646 = vsel %vm1043, %v4642, %v4644
        %v4648 = vsel %vm1763, %v4638, 0
        %v4651 = vsel %vm1767, %v4645, 0
        %v4654 = vsel %vm1767, %v4646, 0
        %v4657 = vsel %vm1767, %v4644, 0
        %4659 = vmatprep.subr.bf16.mxu0 0
        %4660 = vmatpush1.bf16.msra.mxu0 0
        %4661 = vmatprep.subr.bf16.mxu0 0
        %4662 = vmatpush1.bf16.msra.mxu0 0
        %4663 = vmatprep.subr.bf16.mxu0 0
        %4664 = vmatpush1.bf16.msra.mxu0 0
        %4665 = vmatprep.subr.bf16.mxu0 0
        %4666 = vmatpush1.bf16.msra.mxu0 0
        %4667 = vmatprep.subr.bf16.mxu0 0
        %4668 = vmatpush1.bf16.msra.mxu0 0
        %4669 = vmatprep.subr.bf16.mxu0 0
        %4670 = vmatpush1.bf16.msra.mxu0 0
        %4671 = vmatprep.subr.bf16.mxu0 0
        %4672 = vmatpush1.bf16.msra.mxu0 0
        %4673 = vmatprep.subr.bf16.mxu0 %v4654
        %4674 = vmatpush1.bf16.msra.mxu0 %v4651
        %4675 = vmatprep.subr.bf16.mxu0 0
        %4676 = vmatpush2.bf16.msra.mxu0 0
        %4677 = vmatprep.subr.bf16.mxu0 0
        %4678 = vmatpush2.bf16.msra.mxu0 0
        %4679 = vmatprep.subr.bf16.mxu0 0
        %4680 = vmatpush2.bf16.msra.mxu0 0
        %4681 = vmatprep.subr.bf16.mxu0 0
        %4682 = vmatpush2.bf16.msra.mxu0 0
        %4683 = vmatprep.subr.bf16.mxu0 0
        %4684 = vmatpush2.bf16.msra.mxu0 0
        %4685 = vmatprep.subr.bf16.mxu0 0
        %4686 = vmatpush2.bf16.msra.mxu0 0
        %4687 = vmatprep.subr.bf16.mxu0 0
        %4688 = vmatpush2.bf16.msra.mxu0 0
        %4689 = vmatprep.subr.bf16.mxu0 0
        %4690 = vmatpush2.bf16.msra.mxu0 0
        %4691 = vmatprep.mubr.bf16.mxu0 0
        %4692 = vmatmul.mubr.bf16.gmra.mxu0 %v4648
        %v4693 = vpop.f32.mrf.mxu0
        %v4694 = vadd.f32 0.0, %v4693
        %v4695 = vpop.f32.mrf.mxu0
        %v4696 = vadd.f32 0.0, %v4695
        %v4697 = vpop.f32.mrf.mxu0
        %v4698 = vpop.f32.mrf.mxu0
        %4699 = vdwg.mxu0
        %4700 = vmatprep.subr.bf16.mxu0 0
        %4701 = vmatpush1.bf16.msra.mxu0 0
        %4702 = vmatprep.subr.bf16.mxu0 0
        %4703 = vmatpush1.bf16.msra.mxu0 0
        %4704 = vmatprep.subr.bf16.mxu0 0
        %4705 = vmatpush1.bf16.msra.mxu0 0
        %4706 = vmatprep.subr.bf16.mxu0 0
        %4707 = vmatpush1.bf16.msra.mxu0 0
        %4708 = vmatprep.subr.bf16.mxu0 0
        %4709 = vmatpush1.bf16.msra.mxu0 0
        %4710 = vmatprep.subr.bf16.mxu0 0
        %4711 = vmatpush1.bf16.msra.mxu0 0
        %4712 = vmatprep.subr.bf16.mxu0 0
        %4713 = vmatpush1.bf16.msra.mxu0 0
        %4714 = vmatprep.subr.bf16.mxu0 0
        %4715 = vmatpush1.bf16.msra.mxu0 %v4657
        %4716 = vmatprep.subr.bf16.mxu0 0
        %4717 = vmatpush2.bf16.msra.mxu0 0
        %4718 = vmatprep.subr.bf16.mxu0 0
        %4719 = vmatpush2.bf16.msra.mxu0 0
        %4720 = vmatprep.subr.bf16.mxu0 0
        %4721 = vmatpush2.bf16.msra.mxu0 0
        %4722 = vmatprep.subr.bf16.mxu0 0
        %4723 = vmatpush2.bf16.msra.mxu0 0
        %4724 = vmatprep.subr.bf16.mxu0 0
        %4725 = vmatpush2.bf16.msra.mxu0 0
        %4726 = vmatprep.subr.bf16.mxu0 0
        %4727 = vmatpush2.bf16.msra.mxu0 0
        %4728 = vmatprep.subr.bf16.mxu0 0
        %4729 = vmatpush2.bf16.msra.mxu0 0
        %4730 = vmatprep.subr.bf16.mxu0 0
        %4731 = vmatpush2.bf16.msra.mxu0 0
        %4732 = vmatprep.mubr.bf16.mxu0 0
        %4733 = vmatmul.mubr.bf16.gmra.mxu0 %v4648
        %v4734 = vpop.f32.mrf.mxu0
        %v4735 = vadd.f32 0.0, %v4734
        %v4736 = vpop.f32.mrf.mxu0
        %v4737 = vpop.f32.mrf.mxu0
        %v4738 = vpop.f32.mrf.mxu0
        %4739 = vdwg.mxu0
        %v4740 = vadd.f32 %v4634, %v4694
        %v4741 = vadd.f32 %v4635, %v4696
        %v4742 = vadd.f32 %v4636, %v4735
        %s4743 = scalar_lea.vmem %s9, 20
        %v4744 = vld [vmem:[%s4743] sm:$0xf]
        %4745 = vrot.lane.b32.xlu0 %v4228, 108
        %v4746 = vpop.permute.xlu0 %4745
        %4747 = vrot.lane.b32.xlu0 %v4229, 108
        %v4748 = vpop.permute.xlu0 %4747
        %4749 = vrot.lane.b32.xlu0 %v4230, 108
        %v4750 = vpop.permute.xlu0 %4749
        %v4751 = vsel %vm1168, %v4746, %v4748
        %v4752 = vsel %vm1168, %v4748, %v4750
        %v4754 = vsel %vm1763, %v4744, 0
        %v4757 = vsel %vm1767, %v4751, 0
        %v4760 = vsel %vm1767, %v4752, 0
        %v4763 = vsel %vm1767, %v4750, 0
        %4765 = vmatprep.subr.bf16.mxu0 0
        %4766 = vmatpush1.bf16.msra.mxu0 0
        %4767 = vmatprep.subr.bf16.mxu0 0
        %4768 = vmatpush1.bf16.msra.mxu0 0
        %4769 = vmatprep.subr.bf16.mxu0 0
        %4770 = vmatpush1.bf16.msra.mxu0 0
        %4771 = vmatprep.subr.bf16.mxu0 0
        %4772 = vmatpush1.bf16.msra.mxu0 0
        %4773 = vmatprep.subr.bf16.mxu0 0
        %4774 = vmatpush1.bf16.msra.mxu0 0
        %4775 = vmatprep.subr.bf16.mxu0 0
        %4776 = vmatpush1.bf16.msra.mxu0 0
        %4777 = vmatprep.subr.bf16.mxu0 0
        %4778 = vmatpush1.bf16.msra.mxu0 0
        %4779 = vmatprep.subr.bf16.mxu0 %v4760
        %4780 = vmatpush1.bf16.msra.mxu0 %v4757
        %4781 = vmatprep.subr.bf16.mxu0 0
        %4782 = vmatpush2.bf16.msra.mxu0 0
        %4783 = vmatprep.subr.bf16.mxu0 0
        %4784 = vmatpush2.bf16.msra.mxu0 0
        %4785 = vmatprep.subr.bf16.mxu0 0
        %4786 = vmatpush2.bf16.msra.mxu0 0
        %4787 = vmatprep.subr.bf16.mxu0 0
        %4788 = vmatpush2.bf16.msra.mxu0 0
        %4789 = vmatprep.subr.bf16.mxu0 0
        %4790 = vmatpush2.bf16.msra.mxu0 0
        %4791 = vmatprep.subr.bf16.mxu0 0
        %4792 = vmatpush2.bf16.msra.mxu0 0
        %4793 = vmatprep.subr.bf16.mxu0 0
        %4794 = vmatpush2.bf16.msra.mxu0 0
        %4795 = vmatprep.subr.bf16.mxu0 0
        %4796 = vmatpush2.bf16.msra.mxu0 0
        %4797 = vmatprep.mubr.bf16.mxu0 0
        %4798 = vmatmul.mubr.bf16.gmra.mxu0 %v4754
        %v4799 = vpop.f32.mrf.mxu0
        %v4800 = vadd.f32 0.0, %v4799
        %v4801 = vpop.f32.mrf.mxu0
        %v4802 = vadd.f32 0.0, %v4801
        %v4803 = vpop.f32.mrf.mxu0
        %v4804 = vpop.f32.mrf.mxu0
        %4805 = vdwg.mxu0
        %4806 = vmatprep.subr.bf16.mxu0 0
        %4807 = vmatpush1.bf16.msra.mxu0 0
        %4808 = vmatprep.subr.bf16.mxu0 0
        %4809 = vmatpush1.bf16.msra.mxu0 0
        %4810 = vmatprep.subr.bf16.mxu0 0
        %4811 = vmatpush1.bf16.msra.mxu0 0
        %4812 = vmatprep.subr.bf16.mxu0 0
        %4813 = vmatpush1.bf16.msra.mxu0 0
        %4814 = vmatprep.subr.bf16.mxu0 0
        %4815 = vmatpush1.bf16.msra.mxu0 0
        %4816 = vmatprep.subr.bf16.mxu0 0
        %4817 = vmatpush1.bf16.msra.mxu0 0
        %4818 = vmatprep.subr.bf16.mxu0 0
        %4819 = vmatpush1.bf16.msra.mxu0 0
        %4820 = vmatprep.subr.bf16.mxu0 0
        %4821 = vmatpush1.bf16.msra.mxu0 %v4763
        %4822 = vmatprep.subr.bf16.mxu0 0
        %4823 = vmatpush2.bf16.msra.mxu0 0
        %4824 = vmatprep.subr.bf16.mxu0 0
        %4825 = vmatpush2.bf16.msra.mxu0 0
        %4826 = vmatprep.subr.bf16.mxu0 0
        %4827 = vmatpush2.bf16.msra.mxu0 0
        %4828 = vmatprep.subr.bf16.mxu0 0
        %4829 = vmatpush2.bf16.msra.mxu0 0
        %4830 = vmatprep.subr.bf16.mxu0 0
        %4831 = vmatpush2.bf16.msra.mxu0 0
        %4832 = vmatprep.subr.bf16.mxu0 0
        %4833 = vmatpush2.bf16.msra.mxu0 0
        %4834 = vmatprep.subr.bf16.mxu0 0
        %4835 = vmatpush2.bf16.msra.mxu0 0
        %4836 = vmatprep.subr.bf16.mxu0 0
        %4837 = vmatpush2.bf16.msra.mxu0 0
        %4838 = vmatprep.mubr.bf16.mxu0 0
        %4839 = vmatmul.mubr.bf16.gmra.mxu0 %v4754
        %v4840 = vpop.f32.mrf.mxu0
        %v4841 = vadd.f32 0.0, %v4840
        %v4842 = vpop.f32.mrf.mxu0
        %v4843 = vpop.f32.mrf.mxu0
        %v4844 = vpop.f32.mrf.mxu0
        %4845 = vdwg.mxu0
        %v4846 = vadd.f32 %v4740, %v4800
        %v4847 = vadd.f32 %v4741, %v4802
        %v4848 = vadd.f32 %v4742, %v4841
        %s4849 = scalar_lea.vmem %s9, 24
        %v4850 = vld [vmem:[%s4849] sm:$0xf]
        %4851 = vrot.lane.b32.xlu0 %v4228, 92
        %v4852 = vpop.permute.xlu0 %4851
        %4853 = vrot.lane.b32.xlu0 %v4229, 92
        %v4854 = vpop.permute.xlu0 %4853
        %4855 = vrot.lane.b32.xlu0 %v4230, 92
        %v4856 = vpop.permute.xlu0 %4855
        %v4857 = vsel %vm1293, %v4852, %v4854
        %v4858 = vsel %vm1293, %v4854, %v4856
        %v4860 = vsel %vm1763, %v4850, 0
        %v4863 = vsel %vm1767, %v4857, 0
        %v4866 = vsel %vm1767, %v4858, 0
        %v4869 = vsel %vm1767, %v4856, 0
        %4871 = vmatprep.subr.bf16.mxu0 0
        %4872 = vmatpush1.bf16.msra.mxu0 0
        %4873 = vmatprep.subr.bf16.mxu0 0
        %4874 = vmatpush1.bf16.msra.mxu0 0
        %4875 = vmatprep.subr.bf16.mxu0 0
        %4876 = vmatpush1.bf16.msra.mxu0 0
        %4877 = vmatprep.subr.bf16.mxu0 0
        %4878 = vmatpush1.bf16.msra.mxu0 0
        %4879 = vmatprep.subr.bf16.mxu0 0
        %4880 = vmatpush1.bf16.msra.mxu0 0
        %4881 = vmatprep.subr.bf16.mxu0 0
        %4882 = vmatpush1.bf16.msra.mxu0 0
        %4883 = vmatprep.subr.bf16.mxu0 0
        %4884 = vmatpush1.bf16.msra.mxu0 0
        %4885 = vmatprep.subr.bf16.mxu0 %v4866
        %4886 = vmatpush1.bf16.msra.mxu0 %v4863
        %4887 = vmatprep.subr.bf16.mxu0 0
        %4888 = vmatpush2.bf16.msra.mxu0 0
        %4889 = vmatprep.subr.bf16.mxu0 0
        %4890 = vmatpush2.bf16.msra.mxu0 0
        %4891 = vmatprep.subr.bf16.mxu0 0
        %4892 = vmatpush2.bf16.msra.mxu0 0
        %4893 = vmatprep.subr.bf16.mxu0 0
        %4894 = vmatpush2.bf16.msra.mxu0 0
        %4895 = vmatprep.subr.bf16.mxu0 0
        %4896 = vmatpush2.bf16.msra.mxu0 0
        %4897 = vmatprep.subr.bf16.mxu0 0
        %4898 = vmatpush2.bf16.msra.mxu0 0
        %4899 = vmatprep.subr.bf16.mxu0 0
        %4900 = vmatpush2.bf16.msra.mxu0 0
        %4901 = vmatprep.subr.bf16.mxu0 0
        %4902 = vmatpush2.bf16.msra.mxu0 0
        %4903 = vmatprep.mubr.bf16.mxu0 0
        %4904 = vmatmul.mubr.bf16.gmra.mxu0 %v4860
        %v4905 = vpop.f32.mrf.mxu0
        %v4906 = vadd.f32 0.0, %v4905
        %v4907 = vpop.f32.mrf.mxu0
        %v4908 = vadd.f32 0.0, %v4907
        %v4909 = vpop.f32.mrf.mxu0
        %v4910 = vpop.f32.mrf.mxu0
        %4911 = vdwg.mxu0
        %4912 = vmatprep.subr.bf16.mxu0 0
        %4913 = vmatpush1.bf16.msra.mxu0 0
        %4914 = vmatprep.subr.bf16.mxu0 0
        %4915 = vmatpush1.bf16.msra.mxu0 0
        %4916 = vmatprep.subr.bf16.mxu0 0
        %4917 = vmatpush1.bf16.msra.mxu0 0
        %4918 = vmatprep.subr.bf16.mxu0 0
        %4919 = vmatpush1.bf16.msra.mxu0 0
        %4920 = vmatprep.subr.bf16.mxu0 0
        %4921 = vmatpush1.bf16.msra.mxu0 0
        %4922 = vmatprep.subr.bf16.mxu0 0
        %4923 = vmatpush1.bf16.msra.mxu0 0
        %4924 = vmatprep.subr.bf16.mxu0 0
        %4925 = vmatpush1.bf16.msra.mxu0 0
        %4926 = vmatprep.subr.bf16.mxu0 0
        %4927 = vmatpush1.bf16.msra.mxu0 %v4869
        %4928 = vmatprep.subr.bf16.mxu0 0
        %4929 = vmatpush2.bf16.msra.mxu0 0
        %4930 = vmatprep.subr.bf16.mxu0 0
        %4931 = vmatpush2.bf16.msra.mxu0 0
        %4932 = vmatprep.subr.bf16.mxu0 0
        %4933 = vmatpush2.bf16.msra.mxu0 0
        %4934 = vmatprep.subr.bf16.mxu0 0
        %4935 = vmatpush2.bf16.msra.mxu0 0
        %4936 = vmatprep.subr.bf16.mxu0 0
        %4937 = vmatpush2.bf16.msra.mxu0 0
        %4938 = vmatprep.subr.bf16.mxu0 0
        %4939 = vmatpush2.bf16.msra.mxu0 0
        %4940 = vmatprep.subr.bf16.mxu0 0
        %4941 = vmatpush2.bf16.msra.mxu0 0
        %4942 = vmatprep.subr.bf16.mxu0 0
        %4943 = vmatpush2.bf16.msra.mxu0 0
        %4944 = vmatprep.mubr.bf16.mxu0 0
        %4945 = vmatmul.mubr.bf16.gmra.mxu0 %v4860
        %v4946 = vpop.f32.mrf.mxu0
        %v4947 = vadd.f32 0.0, %v4946
        %v4948 = vpop.f32.mrf.mxu0
        %v4949 = vpop.f32.mrf.mxu0
        %v4950 = vpop.f32.mrf.mxu0
        %4951 = vdwg.mxu0
        %v4952 = vadd.f32 %v4846, %v4906
        %v4953 = vadd.f32 %v4847, %v4908
        %v4954 = vadd.f32 %v4848, %v4947
        %s4955 = scalar_lea.vmem %s9, 28
        %v4956 = vld [vmem:[%s4955] sm:$0xf]
        %4957 = vrot.lane.b32.xlu0 %v4228, 91
        %v4958 = vpop.permute.xlu0 %4957
        %4959 = vrot.lane.b32.xlu0 %v4229, 91
        %v4960 = vpop.permute.xlu0 %4959
        %4961 = vrot.lane.b32.xlu0 %v4230, 91
        %v4962 = vpop.permute.xlu0 %4961
        %v4963 = vsel %vm1418, %v4958, %v4960
        %v4964 = vsel %vm1418, %v4960, %v4962
        %v4966 = vsel %vm1763, %v4956, 0
        %v4969 = vsel %vm1767, %v4963, 0
        %v4972 = vsel %vm1767, %v4964, 0
        %v4975 = vsel %vm1767, %v4962, 0
        %4977 = vmatprep.subr.bf16.mxu0 0
        %4978 = vmatpush1.bf16.msra.mxu0 0
        %4979 = vmatprep.subr.bf16.mxu0 0
        %4980 = vmatpush1.bf16.msra.mxu0 0
        %4981 = vmatprep.subr.bf16.mxu0 0
        %4982 = vmatpush1.bf16.msra.mxu0 0
        %4983 = vmatprep.subr.bf16.mxu0 0
        %4984 = vmatpush1.bf16.msra.mxu0 0
        %4985 = vmatprep.subr.bf16.mxu0 0
        %4986 = vmatpush1.bf16.msra.mxu0 0
        %4987 = vmatprep.subr.bf16.mxu0 0
        %4988 = vmatpush1.bf16.msra.mxu0 0
        %4989 = vmatprep.subr.bf16.mxu0 0
        %4990 = vmatpush1.bf16.msra.mxu0 0
        %4991 = vmatprep.subr.bf16.mxu0 %v4972
        %4992 = vmatpush1.bf16.msra.mxu0 %v4969
        %4993 = vmatprep.subr.bf16.mxu0 0
        %4994 = vmatpush2.bf16.msra.mxu0 0
        %4995 = vmatprep.subr.bf16.mxu0 0
        %4996 = vmatpush2.bf16.msra.mxu0 0
        %4997 = vmatprep.subr.bf16.mxu0 0
        %4998 = vmatpush2.bf16.msra.mxu0 0
        %4999 = vmatprep.subr.bf16.mxu0 0
        %5000 = vmatpush2.bf16.msra.mxu0 0
        %5001 = vmatprep.subr.bf16.mxu0 0
        %5002 = vmatpush2.bf16.msra.mxu0 0
        %5003 = vmatprep.subr.bf16.mxu0 0
        %5004 = vmatpush2.bf16.msra.mxu0 0
        %5005 = vmatprep.subr.bf16.mxu0 0
        %5006 = vmatpush2.bf16.msra.mxu0 0
        %5007 = vmatprep.subr.bf16.mxu0 0
        %5008 = vmatpush2.bf16.msra.mxu0 0
        %5009 = vmatprep.mubr.bf16.mxu0 0
        %5010 = vmatmul.mubr.bf16.gmra.mxu0 %v4966
        %v5011 = vpop.f32.mrf.mxu0
        %v5012 = vadd.f32 0.0, %v5011
        %v5013 = vpop.f32.mrf.mxu0
        %v5014 = vadd.f32 0.0, %v5013
        %v5015 = vpop.f32.mrf.mxu0
        %v5016 = vpop.f32.mrf.mxu0
        %5017 = vdwg.mxu0
        %5018 = vmatprep.subr.bf16.mxu0 0
        %5019 = vmatpush1.bf16.msra.mxu0 0
        %5020 = vmatprep.subr.bf16.mxu0 0
        %5021 = vmatpush1.bf16.msra.mxu0 0
        %5022 = vmatprep.subr.bf16.mxu0 0
        %5023 = vmatpush1.bf16.msra.mxu0 0
        %5024 = vmatprep.subr.bf16.mxu0 0
        %5025 = vmatpush1.bf16.msra.mxu0 0
        %5026 = vmatprep.subr.bf16.mxu0 0
        %5027 = vmatpush1.bf16.msra.mxu0 0
        %5028 = vmatprep.subr.bf16.mxu0 0
        %5029 = vmatpush1.bf16.msra.mxu0 0
        %5030 = vmatprep.subr.bf16.mxu0 0
        %5031 = vmatpush1.bf16.msra.mxu0 0
        %5032 = vmatprep.subr.bf16.mxu0 0
        %5033 = vmatpush1.bf16.msra.mxu0 %v4975
        %5034 = vmatprep.subr.bf16.mxu0 0
        %5035 = vmatpush2.bf16.msra.mxu0 0
        %5036 = vmatprep.subr.bf16.mxu0 0
        %5037 = vmatpush2.bf16.msra.mxu0 0
        %5038 = vmatprep.subr.bf16.mxu0 0
        %5039 = vmatpush2.bf16.msra.mxu0 0
        %5040 = vmatprep.subr.bf16.mxu0 0
        %5041 = vmatpush2.bf16.msra.mxu0 0
        %5042 = vmatprep.subr.bf16.mxu0 0
        %5043 = vmatpush2.bf16.msra.mxu0 0
        %5044 = vmatprep.subr.bf16.mxu0 0
        %5045 = vmatpush2.bf16.msra.mxu0 0
        %5046 = vmatprep.subr.bf16.mxu0 0
        %5047 = vmatpush2.bf16.msra.mxu0 0
        %5048 = vmatprep.subr.bf16.mxu0 0
        %5049 = vmatpush2.bf16.msra.mxu0 0
        %5050 = vmatprep.mubr.bf16.mxu0 0
        %5051 = vmatmul.mubr.bf16.gmra.mxu0 %v4966
        %v5052 = vpop.f32.mrf.mxu0
        %v5053 = vadd.f32 0.0, %v5052
        %v5054 = vpop.f32.mrf.mxu0
        %v5055 = vpop.f32.mrf.mxu0
        %v5056 = vpop.f32.mrf.mxu0
        %5057 = vdwg.mxu0
        %v5058 = vadd.f32 %v4952, %v5012
        %v5059 = vadd.f32 %v4953, %v5014
        %v5060 = vadd.f32 %v4954, %v5053
        %s5061 = scalar_lea.vmem %s9, 32
        %v5062 = vld [vmem:[%s5061] sm:$0xf]
        %5063 = vrot.lane.b32.xlu0 %v4228, 90
        %v5064 = vpop.permute.xlu0 %5063
        %5065 = vrot.lane.b32.xlu0 %v4229, 90
        %v5066 = vpop.permute.xlu0 %5065
        %5067 = vrot.lane.b32.xlu0 %v4230, 90
        %v5068 = vpop.permute.xlu0 %5067
        %v5069 = vsel %vm1543, %v5064, %v5066
        %v5070 = vsel %vm1543, %v5066, %v5068
        %v5072 = vsel %vm1763, %v5062, 0
        %v5075 = vsel %vm1767, %v5069, 0
        %v5078 = vsel %vm1767, %v5070, 0
        %v5081 = vsel %vm1767, %v5068, 0
        %5083 = vmatprep.subr.bf16.mxu0 0
        %5084 = vmatpush1.bf16.msra.mxu0 0
        %5085 = vmatprep.subr.bf16.mxu0 0
        %5086 = vmatpush1.bf16.msra.mxu0 0
        %5087 = vmatprep.subr.bf16.mxu0 0
        %5088 = vmatpush1.bf16.msra.mxu0 0
        %5089 = vmatprep.subr.bf16.mxu0 0
        %5090 = vmatpush1.bf16.msra.mxu0 0
        %5091 = vmatprep.subr.bf16.mxu0 0
        %5092 = vmatpush1.bf16.msra.mxu0 0
        %5093 = vmatprep.subr.bf16.mxu0 0
        %5094 = vmatpush1.bf16.msra.mxu0 0
        %5095 = vmatprep.subr.bf16.mxu0 0
        %5096 = vmatpush1.bf16.msra.mxu0 0
        %5097 = vmatprep.subr.bf16.mxu0 %v5078
        %5098 = vmatpush1.bf16.msra.mxu0 %v5075
        %5099 = vmatprep.subr.bf16.mxu0 0
        %5100 = vmatpush2.bf16.msra.mxu0 0
        %5101 = vmatprep.subr.bf16.mxu0 0
        %5102 = vmatpush2.bf16.msra.mxu0 0
        %5103 = vmatprep.subr.bf16.mxu0 0
        %5104 = vmatpush2.bf16.msra.mxu0 0
        %5105 = vmatprep.subr.bf16.mxu0 0
        %5106 = vmatpush2.bf16.msra.mxu0 0
        %5107 = vmatprep.subr.bf16.mxu0 0
        %5108 = vmatpush2.bf16.msra.mxu0 0
        %5109 = vmatprep.subr.bf16.mxu0 0
        %5110 = vmatpush2.bf16.msra.mxu0 0
        %5111 = vmatprep.subr.bf16.mxu0 0
        %5112 = vmatpush2.bf16.msra.mxu0 0
        %5113 = vmatprep.subr.bf16.mxu0 0
        %5114 = vmatpush2.bf16.msra.mxu0 0
        %5115 = vmatprep.mubr.bf16.mxu0 0
        %5116 = vmatmul.mubr.bf16.gmra.mxu0 %v5072
        %v5117 = vpop.f32.mrf.mxu0
        %v5118 = vadd.f32 0.0, %v5117
        %v5119 = vpop.f32.mrf.mxu0
        %v5120 = vadd.f32 0.0, %v5119
        %v5121 = vpop.f32.mrf.mxu0
        %v5122 = vpop.f32.mrf.mxu0
        %5123 = vdwg.mxu0
        %5124 = vmatprep.subr.bf16.mxu0 0
        %5125 = vmatpush1.bf16.msra.mxu0 0
        %5126 = vmatprep.subr.bf16.mxu0 0
        %5127 = vmatpush1.bf16.msra.mxu0 0
        %5128 = vmatprep.subr.bf16.mxu0 0
        %5129 = vmatpush1.bf16.msra.mxu0 0
        %5130 = vmatprep.subr.bf16.mxu0 0
        %5131 = vmatpush1.bf16.msra.mxu0 0
        %5132 = vmatprep.subr.bf16.mxu0 0
        %5133 = vmatpush1.bf16.msra.mxu0 0
        %5134 = vmatprep.subr.bf16.mxu0 0
        %5135 = vmatpush1.bf16.msra.mxu0 0
        %5136 = vmatprep.subr.bf16.mxu0 0
        %5137 = vmatpush1.bf16.msra.mxu0 0
        %5138 = vmatprep.subr.bf16.mxu0 0
        %5139 = vmatpush1.bf16.msra.mxu0 %v5081
        %5140 = vmatprep.subr.bf16.mxu0 0
        %5141 = vmatpush2.bf16.msra.mxu0 0
        %5142 = vmatprep.subr.bf16.mxu0 0
        %5143 = vmatpush2.bf16.msra.mxu0 0
        %5144 = vmatprep.subr.bf16.mxu0 0
        %5145 = vmatpush2.bf16.msra.mxu0 0
        %5146 = vmatprep.subr.bf16.mxu0 0
        %5147 = vmatpush2.bf16.msra.mxu0 0
        %5148 = vmatprep.subr.bf16.mxu0 0
        %5149 = vmatpush2.bf16.msra.mxu0 0
        %5150 = vmatprep.subr.bf16.mxu0 0
        %5151 = vmatpush2.bf16.msra.mxu0 0
        %5152 = vmatprep.subr.bf16.mxu0 0
        %5153 = vmatpush2.bf16.msra.mxu0 0
        %5154 = vmatprep.subr.bf16.mxu0 0
        %5155 = vmatpush2.bf16.msra.mxu0 0
        %5156 = vmatprep.mubr.bf16.mxu0 0
        %5157 = vmatmul.mubr.bf16.gmra.mxu0 %v5072
        %v5158 = vpop.f32.mrf.mxu0
        %v5159 = vadd.f32 0.0, %v5158
        %v5160 = vpop.f32.mrf.mxu0
        %v5161 = vpop.f32.mrf.mxu0
        %v5162 = vpop.f32.mrf.mxu0
        %5163 = vdwg.mxu0
        %v5164 = vadd.f32 %v5058, %v5118
        %v5165 = vadd.f32 %v5059, %v5120
        %v5166 = vadd.f32 %v5060, %v5159
        %v5167 = vld [vmem:[%s10] sm:$0xff]
        %5169 = vset.pattern.permute.xlu0 0
        %5170 = vperm.xlu0 %5169, %v5167
        %v5171 = vpop.permute.xlu0 %5170
        %v5173 = vadd.f32 %v5164, %v5171
        %v5174 = vadd.f32 %v5165, %v5171
        %v5175 = vadd.f32 %v5166, %v5171
        %v5176 = vld [vmem:[%s14] sm:$0xff]
        %v5177 = vld [vmem:[%s14 + $0x8] sm:$0xff]
        %v5178 = vld [vmem:[%s14 + $0x10] sm:$0xff]
        %v5179 = vld [vmem:[%s14 + $0x18] sm:$0xff]
        %v5180 = vld [vmem:[%s14 + $0x20] sm:$0xff]
        %v5181 = vld [vmem:[%s14 + $0x28] sm:$0xff]
        %v5182 = vld [vmem:[%s14 + $0x30] sm:$0xff]
        %v5183 = vld [vmem:[%s14 + $0x38] sm:$0xff]
        %v5184 = vld [vmem:[%s14 + $0x40] sm:$0xff]
        %v5185 = vld [vmem:[%s14 + $0x48] sm:$0xff]
        %v5186 = vld [vmem:[%s14 + $0x50] sm:$0xff]
        %v5187 = vld [vmem:[%s14 + $0x58] sm:$0xff]
        %v5188 = vld [vmem:[%s14 + $0x60] sm:$0xff]
        %v5189 = vld [vmem:[%s14 + $0x68] sm:$0xff]
        %v5190 = vld [vmem:[%s14 + $0x70] sm:$0xff]
        %v5191 = vld [vmem:[%s14 + $0x78] sm:$0xff]
        %v5192 = vld [vmem:[%s14 + $0x80] sm:$0xff]
        %v5193 = vld [vmem:[%s14 + $0x88] sm:$0xff]
        %v5194 = vld [vmem:[%s14 + $0x90] sm:$0xff]
        %v5195 = vld [vmem:[%s14 + $0x98] sm:$0xff]
        %v5196 = vld [vmem:[%s14 + $0xa0] sm:$0xff]
        %v5197 = vld [vmem:[%s14 + $0xa8] sm:$0xff]
        %v5198 = vld [vmem:[%s14 + $0xb0] sm:$0xff]
        %v5199 = vld [vmem:[%s14 + $0xb8] sm:$0xff]
        %v5200 = vld [vmem:[%s14 + $0xc0] sm:$0xff]
        %v5201 = vld [vmem:[%s14 + $0xc8] sm:$0xff]
        %v5202 = vld [vmem:[%s14 + $0xd0] sm:$0xff]
        %v5203 = vld [vmem:[%s14 + $0xd8] sm:$0xff]
        %v5204 = vld [vmem:[%s14 + $0xe0] sm:$0xff]
        %v5205 = vld [vmem:[%s14 + $0xe8] sm:$0xff]
        %v5206 = vld [vmem:[%s14 + $0xf0] sm:$0xff]
        %v5207 = vld [vmem:[%s14 + $0xf8] sm:$0xff]
        %v5208 = vld [vmem:[%s14 + $0x100] sm:$0xff]
        %v5209 = vld [vmem:[%s14 + $0x108] sm:$0xff]
        %v5210 = vld [vmem:[%s14 + $0x110] sm:$0xff]
        %v5211 = vld [vmem:[%s14 + $0x118] sm:$0xff]
        %v5213 = vsel %vm1671, %v5175, 0
        %5215 = vmatprep.subr.mxu0 0.0
        %5216 = vmatpush1.msra.mxu0 %v5191
        %5217 = vmatprep.subr.mxu0 0.0
        %5218 = vmatpush1.msra.mxu0 %v5190
        %5219 = vmatprep.subr.mxu0 0.0
        %5220 = vmatpush1.msra.mxu0 %v5189
        %5221 = vmatprep.subr.mxu0 0.0
        %5222 = vmatpush1.msra.mxu0 %v5188
        %5223 = vmatprep.subr.mxu0 0.0
        %5224 = vmatpush1.msra.mxu0 %v5187
        %5225 = vmatprep.subr.mxu0 0.0
        %5226 = vmatpush1.msra.mxu0 %v5186
        %5227 = vmatprep.subr.mxu0 0.0
        %5228 = vmatpush1.msra.mxu0 %v5185
        %5229 = vmatprep.subr.mxu0 0.0
        %5230 = vmatpush1.msra.mxu0 %v5184
        %5231 = vmatprep.subr.mxu0 0.0
        %5232 = vmatpush1.msra.mxu0 %v5183
        %5233 = vmatprep.subr.mxu0 0.0
        %5234 = vmatpush1.msra.mxu0 %v5182
        %5235 = vmatprep.subr.mxu0 0.0
        %5236 = vmatpush1.msra.mxu0 %v5181
        %5237 = vmatprep.subr.mxu0 0.0
        %5238 = vmatpush1.msra.mxu0 %v5180
        %5239 = vmatprep.subr.mxu0 0.0
        %5240 = vmatpush1.msra.mxu0 %v5179
        %5241 = vmatprep.subr.mxu0 0.0
        %5242 = vmatpush1.msra.mxu0 %v5178
        %5243 = vmatprep.subr.mxu0 0.0
        %5244 = vmatpush1.msra.mxu0 %v5177
        %5245 = vmatprep.subr.mxu0 0.0
        %5246 = vmatpush1.msra.mxu0 %v5176
        %5247 = vmatprep.subr.mxu0 0.0
        %5248 = vmatpush2.msra.mxu0 %v5207
        %5249 = vmatprep.subr.mxu0 0.0
        %5250 = vmatpush2.msra.mxu0 %v5206
        %5251 = vmatprep.subr.mxu0 0.0
        %5252 = vmatpush2.msra.mxu0 %v5205
        %5253 = vmatprep.subr.mxu0 0.0
        %5254 = vmatpush2.msra.mxu0 %v5204
        %5255 = vmatprep.subr.mxu0 0.0
        %5256 = vmatpush2.msra.mxu0 %v5203
        %5257 = vmatprep.subr.mxu0 0.0
        %5258 = vmatpush2.msra.mxu0 %v5202
        %5259 = vmatprep.subr.mxu0 0.0
        %5260 = vmatpush2.msra.mxu0 %v5201
        %5261 = vmatprep.subr.mxu0 0.0
        %5262 = vmatpush2.msra.mxu0 %v5200
        %5263 = vmatprep.subr.mxu0 0.0
        %5264 = vmatpush2.msra.mxu0 %v5199
        %5265 = vmatprep.subr.mxu0 0.0
        %5266 = vmatpush2.msra.mxu0 %v5198
        %5267 = vmatprep.subr.mxu0 0.0
        %5268 = vmatpush2.msra.mxu0 %v5197
        %5269 = vmatprep.subr.mxu0 0.0
        %5270 = vmatpush2.msra.mxu0 %v5196
        %5271 = vmatprep.subr.mxu0 0.0
        %5272 = vmatpush2.msra.mxu0 %v5195
        %5273 = vmatprep.subr.mxu0 0.0
        %5274 = vmatpush2.msra.mxu0 %v5194
        %5275 = vmatprep.subr.mxu0 0.0
        %5276 = vmatpush2.msra.mxu0 %v5193
        %5277 = vmatprep.subr.mxu0 0.0
        %5278 = vmatpush2.msra.mxu0 %v5192
        %5279 = vmatprep.mubr.f32.mxu0 %v5174
        %5280 = vmatmul.mubr.f32.gmra.mxu0 %v5173
        %v5281 = vpop.f32.mrf.mxu0
        %v5282 = vadd.f32 0.0, %v5281
        %v5283 = vpop.f32.mrf.mxu0
        %5284 = vdwg.mxu0
        %5285 = vmatprep.subr.mxu0 0.0
        %5286 = vmatpush1.msra.mxu0 0.0
        %5287 = vmatprep.subr.mxu0 0.0
        %5288 = vmatpush1.msra.mxu0 0.0
        %5289 = vmatprep.subr.mxu0 0.0
        %5290 = vmatpush1.msra.mxu0 0.0
        %5291 = vmatprep.subr.mxu0 0.0
        %5292 = vmatpush1.msra.mxu0 0.0
        %5293 = vmatprep.subr.mxu0 0.0
        %5294 = vmatpush1.msra.mxu0 0.0
        %5295 = vmatprep.subr.mxu0 0.0
        %5296 = vmatpush1.msra.mxu0 0.0
        %5297 = vmatprep.subr.mxu0 0.0
        %5298 = vmatpush1.msra.mxu0 0.0
        %5299 = vmatprep.subr.mxu0 0.0
        %5300 = vmatpush1.msra.mxu0 0.0
        %5301 = vmatprep.subr.mxu0 0.0
        %5302 = vmatpush1.msra.mxu0 0.0
        %5303 = vmatprep.subr.mxu0 0.0
        %5304 = vmatpush1.msra.mxu0 0.0
        %5305 = vmatprep.subr.mxu0 0.0
        %5306 = vmatpush1.msra.mxu0 0.0
        %5307 = vmatprep.subr.mxu0 0.0
        %5308 = vmatpush1.msra.mxu0 0.0
        %5309 = vmatprep.subr.mxu0 0.0
        %5310 = vmatpush1.msra.mxu0 %v5211
        %5311 = vmatprep.subr.mxu0 0.0
        %5312 = vmatpush1.msra.mxu0 %v5210
        %5313 = vmatprep.subr.mxu0 0.0
        %5314 = vmatpush1.msra.mxu0 %v5209
        %5315 = vmatprep.subr.mxu0 0.0
        %5316 = vmatpush1.msra.mxu0 %v5208
        %5317 = vmatprep.subr.mxu0 0.0
        %5318 = vmatpush2.msra.mxu0 0.0
        %5319 = vmatprep.subr.mxu0 0.0
        %5320 = vmatpush2.msra.mxu0 0.0
        %5321 = vmatprep.subr.mxu0 0.0
        %5322 = vmatpush2.msra.mxu0 0.0
        %5323 = vmatprep.subr.mxu0 0.0
        %5324 = vmatpush2.msra.mxu0 0.0
        %5325 = vmatprep.subr.mxu0 0.0
        %5326 = vmatpush2.msra.mxu0 0.0
        %5327 = vmatprep.subr.mxu0 0.0
        %5328 = vmatpush2.msra.mxu0 0.0
        %5329 = vmatprep.subr.mxu0 0.0
        %5330 = vmatpush2.msra.mxu0 0.0
        %5331 = vmatprep.subr.mxu0 0.0
        %5332 = vmatpush2.msra.mxu0 0.0
        %5333 = vmatprep.subr.mxu0 0.0
        %5334 = vmatpush2.msra.mxu0 0.0
        %5335 = vmatprep.subr.mxu0 0.0
        %5336 = vmatpush2.msra.mxu0 0.0
        %5337 = vmatprep.subr.mxu0 0.0
        %5338 = vmatpush2.msra.mxu0 0.0
        %5339 = vmatprep.subr.mxu0 0.0
        %5340 = vmatpush2.msra.mxu0 0.0
        %5341 = vmatprep.subr.mxu0 0.0
        %5342 = vmatpush2.msra.mxu0 0.0
        %5343 = vmatprep.subr.mxu0 0.0
        %5344 = vmatpush2.msra.mxu0 0.0
        %5345 = vmatprep.subr.mxu0 0.0
        %5346 = vmatpush2.msra.mxu0 0.0
        %5347 = vmatprep.subr.mxu0 0.0
        %5348 = vmatpush2.msra.mxu0 0.0
        %5349 = vmatprep.mubr.f32.mxu0 0.0
        %5350 = vmatmul.mubr.f32.gmra.mxu0 %v5213
        %v5351 = vpop.f32.mrf.mxu0
        %v5352 = vadd.f32 %v5282, %v5351
        %v5353 = vpop.f32.mrf.mxu0
        %5354 = vdwg.mxu0
        %vm5355 = vcmask 523264
        %5356 = vst.msk [vmem:[%s541] sm:$0xff] %vm5355, %v5352
        %p5357 = scmp.lt.s32.totalorder %s29, 1
        %s5358 = scalar_select %p5357, %s29, 1
        %s5359 = smul.addr %s5358, 8
        %s5360 = scalar_lea.vmem %s15, %s5359
        %p5361 = scmp.lt.s32.totalorder %s29, 1
        %s5362 = scalar_select %p5361, %s29, 1
        %s5363 = smul.addr %s5362, 2
        %s5364 = smul.addr %s5363, 8
        %s5365 = scalar_lea.vmem %s16, %s5364
        // Predicated region
        $region85: #{_lambda_.1} parent=79 // pred_check
          %p5366 = pneg %p367
        $region86: #{_lambda_.1} parent=79 // pred_check_branch
          %5368 = sbr.rel (%p5366) target = $region88
        $region87: #{_lambda_.1} parent=79 // pred_region
          _
        $region88: #{_lambda_.1} parent=79 // pred_fallthru
          _
        // Predicated region
        $region89: #{_lambda_.1} parent=79 // pred_check
          %p5369 = pneg %p393
        $region90: #{_lambda_.1} parent=79 // pred_check_branch
          %5371 = sbr.rel (%p5369) target = $region92
        $region91: #{_lambda_.1} parent=79 // pred_region
          _
        $region92: #{_lambda_.1} parent=79 // pred_fallthru
          _
      $region80: #{_lambda_.1} parent=5 // pred_fallthru
        _
      %p5372 = scmp.le.s32.totalorder 2, %s24
      // Predicated region
      $region93: #{_lambda_.1} parent=5 // pred_check
        %p5373 = pneg %p5372
      $region94: #{_lambda_.1} parent=5 // pred_check_branch
        %5375 = sbr.rel (%p5373) target = $region96
      $region95: #{_lambda_.1} parent=5 // pred_region
        %s5376 = ssub.s32 %s24, 2
        // Predicated region
        $region97: #{_lambda_.1} parent=95 // pred_check
          %p5377 = pneg %p373
        $region98: #{_lambda_.1} parent=95 // pred_check_branch
          %5379 = sbr.rel (%p5377) target = $region100
        $region99: #{_lambda_.1} parent=95 // pred_region
          %p5380 = scmp.lt.s32.totalorder %s30, 1
          %s5381 = scalar_select %p5380, %s30, 1
          %s5382 = smul.addr %s5381, 8
          %s5383 = scalar_lea.vmem %s15, %s5382
        $region100: #{_lambda_.1} parent=95 // pred_fallthru
          _
        // Predicated region
        $region101: #{_lambda_.1} parent=95 // pred_check
          %p5384 = pneg %p399
        $region102: #{_lambda_.1} parent=95 // pred_check_branch
          %5386 = sbr.rel (%p5384) target = $region104
        $region103: #{_lambda_.1} parent=95 // pred_region
          %p5387 = scmp.lt.s32.totalorder %s30, 1
          %s5388 = scalar_select %p5387, %s30, 1
          %s5389 = smul.addr %s5388, 2
          %s5390 = smul.addr %s5389, 8
          %s5391 = scalar_lea.vmem %s16, %s5390
        $region104: #{_lambda_.1} parent=95 // pred_fallthru
          _
      $region96: #{_lambda_.1} parent=5 // pred_fallthru
        _
    $region6: #{_lambda_.1} parent=1 // loop_footer
      %s28 = sadd.s32 1, %s24
    $region7: #{_lambda_.1} parent=1 // loop_footer_branch
      %23 = sbr.rel target = $region3
    $region8: #{_lambda_.1} parent=1 // loop_exit
      _
    %5392 = vsyncpa [#allocation6], 1
    %s5393 = scalar_lea.sflag [#allocation6], 1
    %5394 = vsyncpa %s5393, 1

</llo_original>
